<compile_context>
chip_gen: v6e
topology: v6e:2x2x1
jax: 0.10.0
libtpu: 0.0.40
codegen_flags: <defaults>
</compile_context>

<pallas_src>
import functools

import jax
import jax.numpy as jnp
from jax.experimental import pallas as pl
from jax.experimental.pallas import tpu as pltpu

LN_EPS = 1e-5  # PyTorch nn.LayerNorm default eps

_ENC_WEIGHT_NAMES = ('wq', 'bq', 'wk', 'bk', 'wv', 'bv', 'wo', 'bo',
                     'g1', 'be1', 'w1', 'bf1', 'w2', 'bf2', 'g2', 'be2')


def _vmem_limit_bytes(frac=0.75, fallback=64 * 1024 * 1024):
    """Generation-dependent VMEM budget (~48 MiB v7x, ~96 MiB v5e/v6e)."""
    try:
        cap = pltpu.get_tpu_info().vmem_capacity_bytes
        return int(cap * frac)
    except Exception:  # pragma: no cover - conservative fallback
        return fallback


def _pick_batch_tile(B, S, max_rows=256, max_bt=8):
    """Largest divisor of B s.t. Bt*S <= max_rows (MXU M target) and Bt<=8."""
    best = 1
    for cand in range(1, min(B, max_bt) + 1):
        if B % cand == 0 and cand * S <= max_rows:
            best = cand
    return best


def _layernorm(z, gamma, beta):
    # f32 statistics (v5e VPU has no bf16 elementwise)
    mu = jnp.mean(z, axis=-1, keepdims=True)
    var = jnp.mean((z - mu) ** 2, axis=-1, keepdims=True)
    zn = (z - mu) * jax.lax.rsqrt(var + LN_EPS)
    return zn * gamma + beta


def _mm(x_f32, w_bf16, b_f32):
    """bf16 MXU matmul with f32 accumulate + f32 bias."""
    y = jnp.dot(x_f32.astype(jnp.bfloat16), w_bf16,
                preferred_element_type=jnp.float32)
    return y + b_f32


# ----------------------------------------------------------------------------
# Fused encoder stack kernel: grid = (batch_blocks, num_layers).
#   Per layer: MultiHeadAttention -> AddNorm -> PositionWiseFFN -> AddNorm,
#   dropout treated as identity.
# ----------------------------------------------------------------------------
def encoder_stack_kernel(num_heads, vl_ref, x_ref,
                         wq_ref, bq_ref, wk_ref, bk_ref, wv_ref, bv_ref,
                         wo_ref, bo_ref, g1_ref, be1_ref,
                         w1_ref, bf1_ref, w2_ref, bf2_ref, g2_ref, be2_ref,
                         out_ref, x_sc):
    bb = pl.program_id(0)
    l = pl.program_id(1)
    Bt, S, H = x_ref.shape
    hd = H // num_heads
    scale = 1.0 / float(hd) ** 0.5

    @pl.when(l == 0)
    def _():
        # load this block of sequences once; carry f32 residual across layers
        x_sc[...] = x_ref[...].reshape(Bt * S, H).astype(jnp.float32)

    x2 = x_sc[...]                                        # (Bt*S, H) f32

    # additive key-validity bias from scalar-prefetched valid_lens (SMEM):
    # d2l masked_softmax fills invalid key positions with -1e6.
    key_pos = jax.lax.broadcasted_iota(jnp.int32, (1, 1, S), 2)
    attn_bias = jnp.concatenate(
        [jnp.where(key_pos < vl_ref[bb * Bt + i],
                   jnp.float32(0.0), jnp.float32(-1e6))
         for i in range(Bt)], axis=0)                     # (Bt, 1, S)

    xb = x2.astype(jnp.bfloat16)
    # full-width projections with M = Bt*S rows; 1/sqrt(hd) folded into Q once
    q2 = (jnp.dot(xb, wq_ref[0], preferred_element_type=jnp.float32)
          + bq_ref[0]) * scale
    k2 = jnp.dot(xb, wk_ref[0], preferred_element_type=jnp.float32) + bk_ref[0]
    v2 = jnp.dot(xb, wv_ref[0], preferred_element_type=jnp.float32) + bv_ref[0]

    q3 = q2.reshape(Bt, S, H)
    k3 = k2.reshape(Bt, S, H)
    v3 = v2.reshape(Bt, S, H)

    # per-head attention: K = hd contraction, batched over the Bt sequences
    ctx_heads = []
    for h in range(num_heads):                            # small static unroll
        sl = slice(h * hd, (h + 1) * hd)
        qh = q3[:, :, sl].astype(jnp.bfloat16)
        kh = k3[:, :, sl].astype(jnp.bfloat16)
        vh = v3[:, :, sl].astype(jnp.bfloat16)
        s = jnp.einsum('bqd,bkd->bqk', qh, kh,
                       preferred_element_type=jnp.float32) + attn_bias
        s = s - jnp.max(s, axis=-1, keepdims=True)
        p = jnp.exp(s)
        p = p * pl.reciprocal(jnp.sum(p, axis=-1, keepdims=True), approx=True)
        ctx_heads.append(jnp.einsum('bqk,bkd->bqd', p.astype(jnp.bfloat16), vh,
                                    preferred_element_type=jnp.float32))
    ctx = jnp.concatenate(ctx_heads, axis=-1).reshape(Bt * S, H)

    attn = jnp.dot(ctx.astype(jnp.bfloat16), wo_ref[0],
                   preferred_element_type=jnp.float32) + bo_ref[0]

    y = _layernorm(x2 + attn, g1_ref[0], be1_ref[0])          # AddNorm 1
    h1 = jnp.maximum(_mm(y, w1_ref[0], bf1_ref[0]), 0.0)      # FFN
    ffn = _mm(h1, w2_ref[0], bf2_ref[0])
    new_x = _layernorm(y + ffn, g2_ref[0], be2_ref[0])        # AddNorm 2

    x_sc[...] = new_x

    @pl.when(l == pl.num_programs(1) - 1)
    def _():
        out_ref[...] = new_x.reshape(Bt, S, H).astype(out_ref.dtype)


def bert_encoder_stack(X, valid_lens, enc, num_heads):
    B, S, H = X.shape
    L = enc['wq'].shape[0]
    Bt = _pick_batch_tile(B, S)                 # sequences per grid step
    weights = [enc[name] for name in _ENC_WEIGHT_NAMES]

    in_specs = [pl.BlockSpec((Bt, S, H), lambda bb, l, vl: (bb, 0, 0))]
    # layer-stacked weights streamed per layer (DMA of layer l+1 pipelined
    # behind layer l compute by the BlockSpec machinery)
    in_specs += [pl.BlockSpec((1,) + w.shape[1:], lambda bb, l, vl: (l, 0, 0))
                 for w in weights]

    # TODO(synk): at BERT-base (H=768, F=3072) on v7x, tile w1/w2 along F
    # (extra grid axis) so double-buffered per-layer weights fit 64 MiB VMEM.
    # TODO(synk): on v7x use pltpu.CORE_PARALLEL on the batch axis once there
    # are >=2 batch blocks (plain "parallel" has near-zero codegen effect).
    grid_spec = pltpu.PrefetchScalarGridSpec(
        num_scalar_prefetch=1,
        grid=(B // Bt, L),
        in_specs=in_specs,
        out_specs=pl.BlockSpec((Bt, S, H), lambda bb, l, vl: (bb, 0, 0)),
        scratch_shapes=[pltpu.VMEM((Bt * S, H), jnp.float32)],
    )
    return pl.pallas_call(
        functools.partial(encoder_stack_kernel, num_heads),
        out_shape=jax.ShapeDtypeStruct((B, S, H), jnp.bfloat16),
        grid_spec=grid_spec,
        compiler_params=pltpu.CompilerParams(
            dimension_semantics=("parallel", "arbitrary"),
            vmem_limit_bytes=_vmem_limit_bytes()),
    )(valid_lens, X.astype(jnp.bfloat16), *weights)


# ----------------------------------------------------------------------------
# MaskLM vocab projection kernel: flat (Mpad, H) @ (H, Vt) tiles, lane-dense
# (multiple-of-256) output stores, parallel vocab axis.
# ----------------------------------------------------------------------------
def mlm_vocab_kernel(h_ref, w2_ref, b2_ref, out_ref):
    out_ref[...] = (jnp.dot(h_ref[...], w2_ref[...],
                            preferred_element_type=jnp.float32)
                    + b2_ref[...])


def mlm_head(masked_X, params):
    B, P, H = masked_X.shape
    V = params['mlm_w2'].shape[-1]

    # hidden MLP (Linear -> ReLU -> LayerNorm) hoisted to plain JAX: it is a
    # tiny (B*P, H) computation, and hoisting lets the vocab grid axis run
    # parallel without a gated-scratch hazard.
    xf = masked_X.reshape(B * P, H)
    hpre = jnp.dot(xf.astype(jnp.bfloat16), params['mlm_w1'],
                   preferred_element_type=jnp.float32) + params['mlm_b1']
    h = _layernorm(jnp.maximum(hpre, 0.0), params['mlm_g'], params['mlm_be'])

    # pad rows to a sublane multiple and vocab to a lane-dense multiple of 256
    M = B * P
    Mp = max(8, ((M + 7) // 8) * 8)
    Vt = 256
    Vp = ((V + Vt - 1) // Vt) * Vt
    h_pad = jnp.zeros((Mp, H), jnp.bfloat16).at[:M].set(h.astype(jnp.bfloat16))
    w2, b2 = params['mlm_w2'], params['mlm_b2']
    if Vp != V:
        w2 = jnp.pad(w2, ((0, 0), (0, Vp - V)))
        b2 = jnp.pad(b2, ((0, 0), (0, Vp - V)))

    logits = pl.pallas_call(
        mlm_vocab_kernel,
        out_shape=jax.ShapeDtypeStruct((Mp, Vp), jnp.float32),
        grid=(Vp // Vt,),
        in_specs=[
            pl.BlockSpec((Mp, H), lambda j: (0, 0)),
            pl.BlockSpec((H, Vt), lambda j: (0, j)),
            pl.BlockSpec((1, Vt), lambda j: (0, j)),
        ],
        out_specs=pl.BlockSpec((Mp, Vt), lambda j: (0, j)),
        compiler_params=pltpu.CompilerParams(
            dimension_semantics=("parallel",),
            vmem_limit_bytes=_vmem_limit_bytes()),
    )(h_pad, w2, b2)
    return logits[:M, :V].reshape(B, P, V)


# ----------------------------------------------------------------------------
# Parameters (deterministic synthetic init) and full forward pass
# ----------------------------------------------------------------------------
def init_bert_params(key, vocab_size, num_hiddens, ffn_num_hiddens,
                     num_layers, max_len):
    H, F, L = num_hiddens, ffn_num_hiddens, num_layers
    keys = jax.random.split(key, 13)

    def w(k, shape, std=0.02, dtype=jnp.bfloat16):
        return (std * jax.random.normal(k, shape, jnp.float32)).astype(dtype)

    zeros = lambda *s: jnp.zeros(s, jnp.float32)
    ones = lambda *s: jnp.ones(s, jnp.float32)

    params = {
        # embeddings stay f32 (gathers + sum feed the kernel, cast to bf16)
        'tok_emb': w(keys[0], (vocab_size, H), dtype=jnp.float32),
        'seg_emb': w(keys[1], (2, H), dtype=jnp.float32),
        'pos_emb': w(keys[2], (1, max_len, H), std=1.0, dtype=jnp.float32),
        # encoder stack: layer-stacked (L, ...) weights; matmul weights bf16
        'enc': {
            'wq': w(keys[3], (L, H, H)), 'bq': zeros(L, 1, H),
            'wk': w(keys[4], (L, H, H)), 'bk': zeros(L, 1, H),
            'wv': w(keys[5], (L, H, H)), 'bv': zeros(L, 1, H),
            'wo': w(keys[6], (L, H, H)), 'bo': zeros(L, 1, H),
            'g1': ones(L, 1, H), 'be1': zeros(L, 1, H),
            'w1': w(keys[7], (L, H, F)), 'bf1': zeros(L, 1, F),
            'w2': w(keys[8], (L, F, H)), 'bf2': zeros(L, 1, H),
            'g2': ones(L, 1, H), 'be2': zeros(L, 1, H),
        },
        # BERTModel.hidden: Linear(H,H) + Tanh (plain JAX)
        'wh': w(keys[9], (H, H)), 'bh': zeros(1, H),
        # MaskLM mlp
        'mlm_w1': w(keys[10], (H, H)), 'mlm_b1': zeros(1, H),
        'mlm_g': ones(1, H), 'mlm_be': zeros(1, H),
        'mlm_w2': w(keys[11], (H, vocab_size)), 'mlm_b2': zeros(1, vocab_size),
        # NextSentencePred (plain JAX: output width 2)
        'nsp_w': w(keys[12], (H, 2)), 'nsp_b': zeros(1, 2),
    }
    return params


def bert_forward(params, tokens, segments, valid_lens=None,
                 pred_positions=None, num_heads=4):
    B, S = tokens.shape
    H = params['tok_emb'].shape[-1]

    # --- BERTEncoder embeddings (plain-JAX gathers) ---
    X = params['tok_emb'][tokens] + params['seg_emb'][segments]
    X = (X + params['pos_emb'][:, :S, :]).astype(jnp.float32)

    if valid_lens is None:
        valid_lens = jnp.full((B,), S, jnp.int32)
    else:
        valid_lens = valid_lens.astype(jnp.int32)

    encoded_X = bert_encoder_stack(X, valid_lens, params['enc'], num_heads)

    # --- MaskLM ---
    if pred_positions is not None:
        P = pred_positions.shape[1]
        batch_idx = jnp.repeat(jnp.arange(B), P)
        masked_X = encoded_X[batch_idx, pred_positions.reshape(-1)]
        masked_X = masked_X.reshape(B, P, H)
        mlm_Y_hat = mlm_head(masked_X, params)
    else:
        mlm_Y_hat = None

    # --- hidden(Tanh) + NextSentencePred, plain JAX (output width = 2) ---
    cls = encoded_X[:, 0, :]
    hidden = jnp.tanh(jnp.dot(cls.astype(jnp.bfloat16), params['wh'],
                              preferred_element_type=jnp.float32)
                      + params['bh'])
    nsp_Y_hat = jnp.dot(hidden.astype(jnp.bfloat16), params['nsp_w'],
                        preferred_element_type=jnp.float32) + params['nsp_b']
    return encoded_X, mlm_Y_hat, nsp_Y_hat


if __name__ == "__main__":
    # small, TPU-friendly shapes consistent with the module's forward
    vocab_size = 128
    num_hiddens = 128
    ffn_num_hiddens = 256
    num_heads = 4
    num_layers = 2
    max_len = 64
    B, S = 2, 8

    key = jax.random.PRNGKey(0)
    pkey, tkey = jax.random.split(key)
    params = init_bert_params(pkey, vocab_size, num_hiddens,
                              ffn_num_hiddens, num_layers, max_len)

    tokens = jax.random.randint(tkey, (B, S), 0, vocab_size, dtype=jnp.int32)
    segments = jnp.array([[0, 0, 0, 0, 1, 1, 1, 1],
                          [0, 0, 0, 1, 1, 1, 1, 1]], dtype=jnp.int32)
    valid_lens = jnp.array([8, 6], dtype=jnp.int32)
    pred_positions = jnp.array([[1, 5, 2], [6, 1, 5]], dtype=jnp.int32)

    encoded_X, mlm_Y_hat, nsp_Y_hat = bert_forward(
        params, tokens, segments, valid_lens, pred_positions,
        num_heads=num_heads)
    jax.block_until_ready((encoded_X, mlm_Y_hat, nsp_Y_hat))

    assert encoded_X.shape == (B, S, num_hiddens)
    assert mlm_Y_hat.shape == (B, 3, vocab_size)
    assert nsp_Y_hat.shape == (B, 2)
    # TODO(synk): dropout layers are treated as identity (inference / rate=0).
    print("KERNEL_OK")
</pallas_src>

<mosaic_0001>
module attributes {stable_mosaic.version = 11 : i64} {
  func.func @encoder_stack_kernel(%arg0: i32, %arg1: i32, %arg2: memref<2xi32, #tpu.memory_space<smem>>, %arg3: memref<2x8x128xbf16, #tpu.memory_space<vmem>>, %arg4: memref<1x128x128xbf16, #tpu.memory_space<vmem>>, %arg5: memref<1x1x128xf32, #tpu.memory_space<vmem>>, %arg6: memref<1x128x128xbf16, #tpu.memory_space<vmem>>, %arg7: memref<1x1x128xf32, #tpu.memory_space<vmem>>, %arg8: memref<1x128x128xbf16, #tpu.memory_space<vmem>>, %arg9: memref<1x1x128xf32, #tpu.memory_space<vmem>>, %arg10: memref<1x128x128xbf16, #tpu.memory_space<vmem>>, %arg11: memref<1x1x128xf32, #tpu.memory_space<vmem>>, %arg12: memref<1x1x128xf32, #tpu.memory_space<vmem>>, %arg13: memref<1x1x128xf32, #tpu.memory_space<vmem>>, %arg14: memref<1x128x256xbf16, #tpu.memory_space<vmem>>, %arg15: memref<1x1x256xf32, #tpu.memory_space<vmem>>, %arg16: memref<1x256x128xbf16, #tpu.memory_space<vmem>>, %arg17: memref<1x1x128xf32, #tpu.memory_space<vmem>>, %arg18: memref<1x1x128xf32, #tpu.memory_space<vmem>>, %arg19: memref<1x1x128xf32, #tpu.memory_space<vmem>>, %arg20: memref<2x8x128xbf16, #tpu.memory_space<vmem>>, %arg21: memref<16x128xf32, #tpu.memory_space<vmem>>) attributes {dimension_semantics = [#tpu.dimension_semantics<parallel>, #tpu.dimension_semantics<arbitrary>], iteration_bounds = array<i64: 1, 2>, scalar_prefetch = 1 : i64, scratch_operands = 1 : i64, tpu.core_type = #tpu.core_type<tc>, window_params = [{transform_indices = @transform_0, window_bounds = array<i64: 2, 8, 128>}, {transform_indices = @transform_1, window_bounds = array<i64: 1, 128, 128>}, {transform_indices = @transform_2, window_bounds = array<i64: 1, 1, 128>}, {transform_indices = @transform_3, window_bounds = array<i64: 1, 128, 128>}, {transform_indices = @transform_4, window_bounds = array<i64: 1, 1, 128>}, {transform_indices = @transform_5, window_bounds = array<i64: 1, 128, 128>}, {transform_indices = @transform_6, window_bounds = array<i64: 1, 1, 128>}, {transform_indices = @transform_7, window_bounds = array<i64: 1, 128, 128>}, {transform_indices = @transform_8, window_bounds = array<i64: 1, 1, 128>}, {transform_indices = @transform_9, window_bounds = array<i64: 1, 1, 128>}, {transform_indices = @transform_10, window_bounds = array<i64: 1, 1, 128>}, {transform_indices = @transform_11, window_bounds = array<i64: 1, 128, 256>}, {transform_indices = @transform_12, window_bounds = array<i64: 1, 1, 256>}, {transform_indices = @transform_13, window_bounds = array<i64: 1, 256, 128>}, {transform_indices = @transform_14, window_bounds = array<i64: 1, 1, 128>}, {transform_indices = @transform_15, window_bounds = array<i64: 1, 1, 128>}, {transform_indices = @transform_16, window_bounds = array<i64: 1, 1, 128>}, {transform_indices = @transform_17, window_bounds = array<i64: 2, 8, 128>}]} {
    %c0_i32 = arith.constant 0 : i32
    %0 = arith.cmpi eq, %arg1, %c0_i32 : i32
    %1 = arith.extui %0 : i1 to i32
    %c0_i32_0 = arith.constant 0 : i32
    %2 = arith.cmpi ne, %1, %c0_i32_0 : i32
    scf.if %2 {
      %c0_93 = arith.constant 0 : index
      %c0_94 = arith.constant 0 : index
      %c0_95 = arith.constant 0 : index
      %221 = vector.load %arg3[%c0_93, %c0_94, %c0_95] : memref<2x8x128xbf16, #tpu.memory_space<vmem>>, vector<2x8x128xbf16>
      %222 = vector.shape_cast %221 : vector<2x8x128xbf16> to vector<16x128xbf16>
      %223 = arith.extf %222 : vector<16x128xbf16> to vector<16x128xf32>
      %c0_96 = arith.constant 0 : index
      %c0_97 = arith.constant 0 : index
      %224 = vector.load %arg21[%c0_96, %c0_97] : memref<16x128xf32, #tpu.memory_space<vmem>>, vector<16x128xf32>
      tpu.vector_store %arg21[%c0_96, %c0_97], %223 {strides = array<i32>} : memref<16x128xf32, #tpu.memory_space<vmem>>, vector<16x128xf32>,
    } else {
    }
    %c0 = arith.constant 0 : index
    %c0_1 = arith.constant 0 : index
    %3 = vector.load %arg21[%c0, %c0_1] : memref<16x128xf32, #tpu.memory_space<vmem>>, vector<16x128xf32>
    %4 = tpu.iota {dimensions = array<i32: 2>} : vector<1x1x8xi32>
    %c2_i32 = arith.constant 2 : i32
    %5 = arith.muli %arg0, %c2_i32 : i32
    %c0_i32_2 = arith.constant 0 : i32
    %6 = arith.addi %5, %c0_i32_2 : i32
    %7 = arith.index_cast %6 : i32 to index
    %8 = memref.load %arg2[%7] : memref<2xi32, #tpu.memory_space<smem>>
    %9 = vector.broadcast %8 : i32 to vector<1x1x8xi32>
    %10 = arith.cmpi slt, %4, %9 : vector<1x1x8xi32>
    %cst = arith.constant 0.000000e+00 : f32
    %cst_3 = arith.constant -1.000000e+06 : f32
    %11 = vector.broadcast %cst : f32 to vector<1x1x8xf32>
    %12 = vector.broadcast %cst_3 : f32 to vector<1x1x8xf32>
    %13 = arith.select %10, %11, %12 : vector<1x1x8xi1>, vector<1x1x8xf32>
    %c2_i32_4 = arith.constant 2 : i32
    %14 = arith.muli %arg0, %c2_i32_4 : i32
    %c1_i32 = arith.constant 1 : i32
    %15 = arith.addi %14, %c1_i32 : i32
    %16 = arith.index_cast %15 : i32 to index
    %17 = memref.load %arg2[%16] : memref<2xi32, #tpu.memory_space<smem>>
    %18 = vector.broadcast %17 : i32 to vector<1x1x8xi32>
    %19 = arith.cmpi slt, %4, %18 : vector<1x1x8xi32>
    %cst_5 = arith.constant 0.000000e+00 : f32
    %cst_6 = arith.constant -1.000000e+06 : f32
    %20 = vector.broadcast %cst_5 : f32 to vector<1x1x8xf32>
    %21 = vector.broadcast %cst_6 : f32 to vector<1x1x8xf32>
    %22 = arith.select %19, %20, %21 : vector<1x1x8xi1>, vector<1x1x8xf32>
    %23 = tpu.concatenate %13, %22 in 0 : vector<1x1x8xf32>, vector<1x1x8xf32> -> vector<2x1x8xf32>
    %24 = arith.truncf %3 : vector<16x128xf32> to vector<16x128xbf16>
    %c0_7 = arith.constant 0 : index
    %c0_8 = arith.constant 0 : index
    %c0_9 = arith.constant 0 : index
    %25 = vector.load %arg4[%c0_7, %c0_8, %c0_9] : memref<1x128x128xbf16, #tpu.memory_space<vmem>>, vector<1x128x128xbf16>
    %26 = vector.shape_cast %25 : vector<1x128x128xbf16> to vector<128x128xbf16>
    %cst_10 = arith.constant dense<0.000000e+00> : vector<16x128xf32>
    %27 = tpu.matmul %24, %26, %cst_10 {dimension_numbers = #tpu.dot_dimension_numbers<[1], [0], [0], [1], [0, 0, 1, 1], [], []>} : vector<16x128xbf16>, vector<128x128xbf16>, vector<16x128xf32> -> vector<16x128xf32>
    %c0_11 = arith.constant 0 : index
    %c0_12 = arith.constant 0 : index
    %c0_13 = arith.constant 0 : index
    %28 = vector.load %arg5[%c0_11, %c0_12, %c0_13] : memref<1x1x128xf32, #tpu.memory_space<vmem>>, vector<1x1x128xf32>
    %29 = vector.shape_cast %28 : vector<1x1x128xf32> to vector<1x128xf32>
    %30 = vector.broadcast %29 : vector<1x128xf32> to vector<16x128xf32>
    %31 = arith.addf %27, %30 : vector<16x128xf32>
    %cst_14 = arith.constant 0.176776692 : f32
    %32 = vector.broadcast %cst_14 : f32 to vector<16x128xf32>
    %33 = arith.mulf %31, %32 : vector<16x128xf32>
    %c0_15 = arith.constant 0 : index
    %c0_16 = arith.constant 0 : index
    %c0_17 = arith.constant 0 : index
    %34 = vector.load %arg6[%c0_15, %c0_16, %c0_17] : memref<1x128x128xbf16, #tpu.memory_space<vmem>>, vector<1x128x128xbf16>
    %35 = vector.shape_cast %34 : vector<1x128x128xbf16> to vector<128x128xbf16>
    %cst_18 = arith.constant dense<0.000000e+00> : vector<16x128xf32>
    %36 = tpu.matmul %24, %35, %cst_18 {dimension_numbers = #tpu.dot_dimension_numbers<[1], [0], [0], [1], [0, 0, 1, 1], [], []>} : vector<16x128xbf16>, vector<128x128xbf16>, vector<16x128xf32> -> vector<16x128xf32>
    %c0_19 = arith.constant 0 : index
    %c0_20 = arith.constant 0 : index
    %c0_21 = arith.constant 0 : index
    %37 = vector.load %arg7[%c0_19, %c0_20, %c0_21] : memref<1x1x128xf32, #tpu.memory_space<vmem>>, vector<1x1x128xf32>
    %38 = vector.shape_cast %37 : vector<1x1x128xf32> to vector<1x128xf32>
    %39 = vector.broadcast %38 : vector<1x128xf32> to vector<16x128xf32>
    %40 = arith.addf %36, %39 : vector<16x128xf32>
    %c0_22 = arith.constant 0 : index
    %c0_23 = arith.constant 0 : index
    %c0_24 = arith.constant 0 : index
    %41 = vector.load %arg8[%c0_22, %c0_23, %c0_24] : memref<1x128x128xbf16, #tpu.memory_space<vmem>>, vector<1x128x128xbf16>
    %42 = vector.shape_cast %41 : vector<1x128x128xbf16> to vector<128x128xbf16>
    %cst_25 = arith.constant dense<0.000000e+00> : vector<16x128xf32>
    %43 = tpu.matmul %24, %42, %cst_25 {dimension_numbers = #tpu.dot_dimension_numbers<[1], [0], [0], [1], [0, 0, 1, 1], [], []>} : vector<16x128xbf16>, vector<128x128xbf16>, vector<16x128xf32> -> vector<16x128xf32>
    %c0_26 = arith.constant 0 : index
    %c0_27 = arith.constant 0 : index
    %c0_28 = arith.constant 0 : index
    %44 = vector.load %arg9[%c0_26, %c0_27, %c0_28] : memref<1x1x128xf32, #tpu.memory_space<vmem>>, vector<1x1x128xf32>
    %45 = vector.shape_cast %44 : vector<1x1x128xf32> to vector<1x128xf32>
    %46 = vector.broadcast %45 : vector<1x128xf32> to vector<16x128xf32>
    %47 = arith.addf %43, %46 : vector<16x128xf32>
    %48 = vector.shape_cast %33 : vector<16x128xf32> to vector<2x8x128xf32>
    %49 = vector.shape_cast %40 : vector<16x128xf32> to vector<2x8x128xf32>
    %50 = vector.shape_cast %47 : vector<16x128xf32> to vector<2x8x128xf32>
    %51 = vector.extract_strided_slice %48 {offsets = [0, 0, 0], sizes = [2, 8, 32], strides = [1, 1, 1]} : vector<2x8x128xf32> to vector<2x8x32xf32>
    %52 = arith.truncf %51 : vector<2x8x32xf32> to vector<2x8x32xbf16>
    %53 = vector.extract_strided_slice %49 {offsets = [0, 0, 0], sizes = [2, 8, 32], strides = [1, 1, 1]} : vector<2x8x128xf32> to vector<2x8x32xf32>
    %54 = arith.truncf %53 : vector<2x8x32xf32> to vector<2x8x32xbf16>
    %55 = vector.extract_strided_slice %50 {offsets = [0, 0, 0], sizes = [2, 8, 32], strides = [1, 1, 1]} : vector<2x8x128xf32> to vector<2x8x32xf32>
    %56 = arith.truncf %55 : vector<2x8x32xf32> to vector<2x8x32xbf16>
    "tpu.trace_start"() <{level = 10 : i32, message = "bqd,bkd->bqk"}> : () -> ()
    %cst_29 = arith.constant dense<0.000000e+00> : vector<2x8x8xf32>
    %57 = tpu.matmul %52, %54, %cst_29 {dimension_numbers = #tpu.dot_dimension_numbers<[2], [2], [1], [1], [0, 0, 0, 1, 1, 1], [0], [0]>} : vector<2x8x32xbf16>, vector<2x8x32xbf16>, vector<2x8x8xf32> -> vector<2x8x8xf32>
    "tpu.trace_stop"() : () -> ()
    %58 = vector.broadcast %23 : vector<2x1x8xf32> to vector<2x8x8xf32>
    %59 = arith.addf %57, %58 : vector<2x8x8xf32>
    %cst_30 = arith.constant dense<0xFF800000> : vector<2x8xf32>
    %60 = vector.multi_reduction <maximumf>, %59, %cst_30 [2] : vector<2x8x8xf32> to vector<2x8xf32>
    %61 = vector.shape_cast %60 : vector<2x8xf32> to vector<2x8x1xf32>
    %62 = vector.broadcast %61 : vector<2x8x1xf32> to vector<2x8x8xf32>
    %63 = arith.subf %59, %62 : vector<2x8x8xf32>
    %64 = math.exp %63 : vector<2x8x8xf32>
    %cst_31 = arith.constant dense<0.000000e+00> : vector<2x8xf32>
    %65 = vector.multi_reduction <add>, %64, %cst_31 [2] : vector<2x8x8xf32> to vector<2x8xf32>
    %66 = vector.shape_cast %65 : vector<2x8xf32> to vector<2x8x1xf32>
    %67 = tpu.reciprocal %66 {approx = true} : vector<2x8x1xf32> -> vector<2x8x1xf32>
    %68 = vector.broadcast %67 : vector<2x8x1xf32> to vector<2x8x8xf32>
    %69 = arith.mulf %64, %68 : vector<2x8x8xf32>
    %70 = arith.truncf %69 : vector<2x8x8xf32> to vector<2x8x8xbf16>
    "tpu.trace_start"() <{level = 10 : i32, message = "bqk,bkd->bqd"}> : () -> ()
    %cst_32 = arith.constant dense<0.000000e+00> : vector<2x8x32xf32>
    %71 = tpu.matmul %70, %56, %cst_32 {dimension_numbers = #tpu.dot_dimension_numbers<[2], [1], [1], [2], [0, 0, 0, 1, 1, 2], [0], [0]>} : vector<2x8x8xbf16>, vector<2x8x32xbf16>, vector<2x8x32xf32> -> vector<2x8x32xf32>
    "tpu.trace_stop"() : () -> ()
    %72 = vector.extract_strided_slice %48 {offsets = [0, 0, 32], sizes = [2, 8, 32], strides = [1, 1, 1]} : vector<2x8x128xf32> to vector<2x8x32xf32>
    %73 = arith.truncf %72 : vector<2x8x32xf32> to vector<2x8x32xbf16>
    %74 = vector.extract_strided_slice %49 {offsets = [0, 0, 32], sizes = [2, 8, 32], strides = [1, 1, 1]} : vector<2x8x128xf32> to vector<2x8x32xf32>
    %75 = arith.truncf %74 : vector<2x8x32xf32> to vector<2x8x32xbf16>
    %76 = vector.extract_strided_slice %50 {offsets = [0, 0, 32], sizes = [2, 8, 32], strides = [1, 1, 1]} : vector<2x8x128xf32> to vector<2x8x32xf32>
    %77 = arith.truncf %76 : vector<2x8x32xf32> to vector<2x8x32xbf16>
    "tpu.trace_start"() <{level = 10 : i32, message = "bqd,bkd->bqk"}> : () -> ()
    %cst_33 = arith.constant dense<0.000000e+00> : vector<2x8x8xf32>
    %78 = tpu.matmul %73, %75, %cst_33 {dimension_numbers = #tpu.dot_dimension_numbers<[2], [2], [1], [1], [0, 0, 0, 1, 1, 1], [0], [0]>} : vector<2x8x32xbf16>, vector<2x8x32xbf16>, vector<2x8x8xf32> -> vector<2x8x8xf32>
    "tpu.trace_stop"() : () -> ()
    %79 = vector.broadcast %23 : vector<2x1x8xf32> to vector<2x8x8xf32>
    %80 = arith.addf %78, %79 : vector<2x8x8xf32>
    %cst_34 = arith.constant dense<0xFF800000> : vector<2x8xf32>
    %81 = vector.multi_reduction <maximumf>, %80, %cst_34 [2] : vector<2x8x8xf32> to vector<2x8xf32>
    %82 = vector.shape_cast %81 : vector<2x8xf32> to vector<2x8x1xf32>
    %83 = vector.broadcast %82 : vector<2x8x1xf32> to vector<2x8x8xf32>
    %84 = arith.subf %80, %83 : vector<2x8x8xf32>
    %85 = math.exp %84 : vector<2x8x8xf32>
    %cst_35 = arith.constant dense<0.000000e+00> : vector<2x8xf32>
    %86 = vector.multi_reduction <add>, %85, %cst_35 [2] : vector<2x8x8xf32> to vector<2x8xf32>
    %87 = vector.shape_cast %86 : vector<2x8xf32> to vector<2x8x1xf32>
    %88 = tpu.reciprocal %87 {approx = true} : vector<2x8x1xf32> -> vector<2x8x1xf32>
    %89 = vector.broadcast %88 : vector<2x8x1xf32> to vector<2x8x8xf32>
    %90 = arith.mulf %85, %89 : vector<2x8x8xf32>
    %91 = arith.truncf %90 : vector<2x8x8xf32> to vector<2x8x8xbf16>
    "tpu.trace_start"() <{level = 10 : i32, message = "bqk,bkd->bqd"}> : () -> ()
    %cst_36 = arith.constant dense<0.000000e+00> : vector<2x8x32xf32>
    %92 = tpu.matmul %91, %77, %cst_36 {dimension_numbers = #tpu.dot_dimension_numbers<[2], [1], [1], [2], [0, 0, 0, 1, 1, 2], [0], [0]>} : vector<2x8x8xbf16>, vector<2x8x32xbf16>, vector<2x8x32xf32> -> vector<2x8x32xf32>
    "tpu.trace_stop"() : () -> ()
    %93 = vector.extract_strided_slice %48 {offsets = [0, 0, 64], sizes = [2, 8, 32], strides = [1, 1, 1]} : vector<2x8x128xf32> to vector<2x8x32xf32>
    %94 = arith.truncf %93 : vector<2x8x32xf32> to vector<2x8x32xbf16>
    %95 = vector.extract_strided_slice %49 {offsets = [0, 0, 64], sizes = [2, 8, 32], strides = [1, 1, 1]} : vector<2x8x128xf32> to vector<2x8x32xf32>
    %96 = arith.truncf %95 : vector<2x8x32xf32> to vector<2x8x32xbf16>
    %97 = vector.extract_strided_slice %50 {offsets = [0, 0, 64], sizes = [2, 8, 32], strides = [1, 1, 1]} : vector<2x8x128xf32> to vector<2x8x32xf32>
    %98 = arith.truncf %97 : vector<2x8x32xf32> to vector<2x8x32xbf16>
    "tpu.trace_start"() <{level = 10 : i32, message = "bqd,bkd->bqk"}> : () -> ()
    %cst_37 = arith.constant dense<0.000000e+00> : vector<2x8x8xf32>
    %99 = tpu.matmul %94, %96, %cst_37 {dimension_numbers = #tpu.dot_dimension_numbers<[2], [2], [1], [1], [0, 0, 0, 1, 1, 1], [0], [0]>} : vector<2x8x32xbf16>, vector<2x8x32xbf16>, vector<2x8x8xf32> -> vector<2x8x8xf32>
    "tpu.trace_stop"() : () -> ()
    %100 = vector.broadcast %23 : vector<2x1x8xf32> to vector<2x8x8xf32>
    %101 = arith.addf %99, %100 : vector<2x8x8xf32>
    %cst_38 = arith.constant dense<0xFF800000> : vector<2x8xf32>
    %102 = vector.multi_reduction <maximumf>, %101, %cst_38 [2] : vector<2x8x8xf32> to vector<2x8xf32>
    %103 = vector.shape_cast %102 : vector<2x8xf32> to vector<2x8x1xf32>
    %104 = vector.broadcast %103 : vector<2x8x1xf32> to vector<2x8x8xf32>
    %105 = arith.subf %101, %104 : vector<2x8x8xf32>
    %106 = math.exp %105 : vector<2x8x8xf32>
    %cst_39 = arith.constant dense<0.000000e+00> : vector<2x8xf32>
    %107 = vector.multi_reduction <add>, %106, %cst_39 [2] : vector<2x8x8xf32> to vector<2x8xf32>
    %108 = vector.shape_cast %107 : vector<2x8xf32> to vector<2x8x1xf32>
    %109 = tpu.reciprocal %108 {approx = true} : vector<2x8x1xf32> -> vector<2x8x1xf32>
    %110 = vector.broadcast %109 : vector<2x8x1xf32> to vector<2x8x8xf32>
    %111 = arith.mulf %106, %110 : vector<2x8x8xf32>
    %112 = arith.truncf %111 : vector<2x8x8xf32> to vector<2x8x8xbf16>
    "tpu.trace_start"() <{level = 10 : i32, message = "bqk,bkd->bqd"}> : () -> ()
    %cst_40 = arith.constant dense<0.000000e+00> : vector<2x8x32xf32>
    %113 = tpu.matmul %112, %98, %cst_40 {dimension_numbers = #tpu.dot_dimension_numbers<[2], [1], [1], [2], [0, 0, 0, 1, 1, 2], [0], [0]>} : vector<2x8x8xbf16>, vector<2x8x32xbf16>, vector<2x8x32xf32> -> vector<2x8x32xf32>
    "tpu.trace_stop"() : () -> ()
    %114 = vector.extract_strided_slice %48 {offsets = [0, 0, 96], sizes = [2, 8, 32], strides = [1, 1, 1]} : vector<2x8x128xf32> to vector<2x8x32xf32>
    %115 = arith.truncf %114 : vector<2x8x32xf32> to vector<2x8x32xbf16>
    %116 = vector.extract_strided_slice %49 {offsets = [0, 0, 96], sizes = [2, 8, 32], strides = [1, 1, 1]} : vector<2x8x128xf32> to vector<2x8x32xf32>
    %117 = arith.truncf %116 : vector<2x8x32xf32> to vector<2x8x32xbf16>
    %118 = vector.extract_strided_slice %50 {offsets = [0, 0, 96], sizes = [2, 8, 32], strides = [1, 1, 1]} : vector<2x8x128xf32> to vector<2x8x32xf32>
    %119 = arith.truncf %118 : vector<2x8x32xf32> to vector<2x8x32xbf16>
    "tpu.trace_start"() <{level = 10 : i32, message = "bqd,bkd->bqk"}> : () -> ()
    %cst_41 = arith.constant dense<0.000000e+00> : vector<2x8x8xf32>
    %120 = tpu.matmul %115, %117, %cst_41 {dimension_numbers = #tpu.dot_dimension_numbers<[2], [2], [1], [1], [0, 0, 0, 1, 1, 1], [0], [0]>} : vector<2x8x32xbf16>, vector<2x8x32xbf16>, vector<2x8x8xf32> -> vector<2x8x8xf32>
    "tpu.trace_stop"() : () -> ()
    %121 = vector.broadcast %23 : vector<2x1x8xf32> to vector<2x8x8xf32>
    %122 = arith.addf %120, %121 : vector<2x8x8xf32>
    %cst_42 = arith.constant dense<0xFF800000> : vector<2x8xf32>
    %123 = vector.multi_reduction <maximumf>, %122, %cst_42 [2] : vector<2x8x8xf32> to vector<2x8xf32>
    %124 = vector.shape_cast %123 : vector<2x8xf32> to vector<2x8x1xf32>
    %125 = vector.broadcast %124 : vector<2x8x1xf32> to vector<2x8x8xf32>
    %126 = arith.subf %122, %125 : vector<2x8x8xf32>
    %127 = math.exp %126 : vector<2x8x8xf32>
    %cst_43 = arith.constant dense<0.000000e+00> : vector<2x8xf32>
    %128 = vector.multi_reduction <add>, %127, %cst_43 [2] : vector<2x8x8xf32> to vector<2x8xf32>
    %129 = vector.shape_cast %128 : vector<2x8xf32> to vector<2x8x1xf32>
    %130 = tpu.reciprocal %129 {approx = true} : vector<2x8x1xf32> -> vector<2x8x1xf32>
    %131 = vector.broadcast %130 : vector<2x8x1xf32> to vector<2x8x8xf32>
    %132 = arith.mulf %127, %131 : vector<2x8x8xf32>
    %133 = arith.truncf %132 : vector<2x8x8xf32> to vector<2x8x8xbf16>
    "tpu.trace_start"() <{level = 10 : i32, message = "bqk,bkd->bqd"}> : () -> ()
    %cst_44 = arith.constant dense<0.000000e+00> : vector<2x8x32xf32>
    %134 = tpu.matmul %133, %119, %cst_44 {dimension_numbers = #tpu.dot_dimension_numbers<[2], [1], [1], [2], [0, 0, 0, 1, 1, 2], [0], [0]>} : vector<2x8x8xbf16>, vector<2x8x32xbf16>, vector<2x8x32xf32> -> vector<2x8x32xf32>
    "tpu.trace_stop"() : () -> ()
    %135 = tpu.concatenate %71, %92, %113, %134 in 2 : vector<2x8x32xf32>, vector<2x8x32xf32>, vector<2x8x32xf32>, vector<2x8x32xf32> -> vector<2x8x128xf32>
    %136 = vector.shape_cast %135 : vector<2x8x128xf32> to vector<16x128xf32>
    %137 = arith.truncf %136 : vector<16x128xf32> to vector<16x128xbf16>
    %c0_45 = arith.constant 0 : index
    %c0_46 = arith.constant 0 : index
    %c0_47 = arith.constant 0 : index
    %138 = vector.load %arg10[%c0_45, %c0_46, %c0_47] : memref<1x128x128xbf16, #tpu.memory_space<vmem>>, vector<1x128x128xbf16>
    %139 = vector.shape_cast %138 : vector<1x128x128xbf16> to vector<128x128xbf16>
    %cst_48 = arith.constant dense<0.000000e+00> : vector<16x128xf32>
    %140 = tpu.matmul %137, %139, %cst_48 {dimension_numbers = #tpu.dot_dimension_numbers<[1], [0], [0], [1], [0, 0, 1, 1], [], []>} : vector<16x128xbf16>, vector<128x128xbf16>, vector<16x128xf32> -> vector<16x128xf32>
    %c0_49 = arith.constant 0 : index
    %c0_50 = arith.constant 0 : index
    %c0_51 = arith.constant 0 : index
    %141 = vector.load %arg11[%c0_49, %c0_50, %c0_51] : memref<1x1x128xf32, #tpu.memory_space<vmem>>, vector<1x1x128xf32>
    %142 = vector.shape_cast %141 : vector<1x1x128xf32> to vector<1x128xf32>
    %143 = vector.broadcast %142 : vector<1x128xf32> to vector<16x128xf32>
    %144 = arith.addf %140, %143 : vector<16x128xf32>
    %145 = arith.addf %3, %144 : vector<16x128xf32>
    %c0_52 = arith.constant 0 : index
    %c0_53 = arith.constant 0 : index
    %c0_54 = arith.constant 0 : index
    %146 = vector.load %arg12[%c0_52, %c0_53, %c0_54] : memref<1x1x128xf32, #tpu.memory_space<vmem>>, vector<1x1x128xf32>
    %147 = vector.shape_cast %146 : vector<1x1x128xf32> to vector<1x128xf32>
    %c0_55 = arith.constant 0 : index
    %c0_56 = arith.constant 0 : index
    %c0_57 = arith.constant 0 : index
    %148 = vector.load %arg13[%c0_55, %c0_56, %c0_57] : memref<1x1x128xf32, #tpu.memory_space<vmem>>, vector<1x1x128xf32>
    %149 = vector.shape_cast %148 : vector<1x1x128xf32> to vector<1x128xf32>
    %cst_58 = arith.constant dense<0.000000e+00> : vector<16xf32>
    %150 = vector.multi_reduction <add>, %145, %cst_58 [1] : vector<16x128xf32> to vector<16xf32>
    %151 = vector.shape_cast %150 : vector<16xf32> to vector<16x1xf32>
    %cst_59 = arith.constant 1.280000e+02 : f32
    %152 = vector.broadcast %cst_59 : f32 to vector<16x1xf32>
    %153 = arith.divf %151, %152 : vector<16x1xf32>
    %154 = vector.broadcast %153 : vector<16x1xf32> to vector<16x128xf32>
    %155 = arith.subf %145, %154 : vector<16x128xf32>
    %156 = arith.mulf %155, %155 : vector<16x128xf32>
    %cst_60 = arith.constant dense<0.000000e+00> : vector<16xf32>
    %157 = vector.multi_reduction <add>, %156, %cst_60 [1] : vector<16x128xf32> to vector<16xf32>
    %158 = vector.shape_cast %157 : vector<16xf32> to vector<16x1xf32>
    %cst_61 = arith.constant 1.280000e+02 : f32
    %159 = vector.broadcast %cst_61 : f32 to vector<16x1xf32>
    %160 = arith.divf %158, %159 : vector<16x1xf32>
    %161 = vector.broadcast %153 : vector<16x1xf32> to vector<16x128xf32>
    %162 = arith.subf %145, %161 : vector<16x128xf32>
    %cst_62 = arith.constant 9.99999974E-6 : f32
    %163 = vector.broadcast %cst_62 : f32 to vector<16x1xf32>
    %164 = arith.addf %160, %163 : vector<16x1xf32>
    %165 = math.rsqrt %164 : vector<16x1xf32>
    %166 = vector.broadcast %165 : vector<16x1xf32> to vector<16x128xf32>
    %167 = arith.mulf %162, %166 : vector<16x128xf32>
    %168 = vector.broadcast %147 : vector<1x128xf32> to vector<16x128xf32>
    %169 = arith.mulf %167, %168 : vector<16x128xf32>
    %170 = vector.broadcast %149 : vector<1x128xf32> to vector<16x128xf32>
    %171 = arith.addf %169, %170 : vector<16x128xf32>
    %c0_63 = arith.constant 0 : index
    %c0_64 = arith.constant 0 : index
    %c0_65 = arith.constant 0 : index
    %172 = vector.load %arg14[%c0_63, %c0_64, %c0_65] : memref<1x128x256xbf16, #tpu.memory_space<vmem>>, vector<1x128x256xbf16>
    %173 = vector.shape_cast %172 : vector<1x128x256xbf16> to vector<128x256xbf16>
    %c0_66 = arith.constant 0 : index
    %c0_67 = arith.constant 0 : index
    %c0_68 = arith.constant 0 : index
    %174 = vector.load %arg15[%c0_66, %c0_67, %c0_68] : memref<1x1x256xf32, #tpu.memory_space<vmem>>, vector<1x1x256xf32>
    %175 = vector.shape_cast %174 : vector<1x1x256xf32> to vector<1x256xf32>
    %176 = arith.truncf %171 : vector<16x128xf32> to vector<16x128xbf16>
    %cst_69 = arith.constant dense<0.000000e+00> : vector<16x256xf32>
    %177 = tpu.matmul %176, %173, %cst_69 {dimension_numbers = #tpu.dot_dimension_numbers<[1], [0], [0], [1], [0, 0, 1, 1], [], []>} : vector<16x128xbf16>, vector<128x256xbf16>, vector<16x256xf32> -> vector<16x256xf32>
    %178 = vector.broadcast %175 : vector<1x256xf32> to vector<16x256xf32>
    %179 = arith.addf %177, %178 : vector<16x256xf32>
    %cst_70 = arith.constant 0.000000e+00 : f32
    %180 = vector.broadcast %cst_70 : f32 to vector<16x256xf32>
    %181 = arith.maximumf %179, %180 : vector<16x256xf32>
    %c0_71 = arith.constant 0 : index
    %c0_72 = arith.constant 0 : index
    %c0_73 = arith.constant 0 : index
    %182 = vector.load %arg16[%c0_71, %c0_72, %c0_73] : memref<1x256x128xbf16, #tpu.memory_space<vmem>>, vector<1x256x128xbf16>
    %183 = vector.shape_cast %182 : vector<1x256x128xbf16> to vector<256x128xbf16>
    %c0_74 = arith.constant 0 : index
    %c0_75 = arith.constant 0 : index
    %c0_76 = arith.constant 0 : index
    %184 = vector.load %arg17[%c0_74, %c0_75, %c0_76] : memref<1x1x128xf32, #tpu.memory_space<vmem>>, vector<1x1x128xf32>
    %185 = vector.shape_cast %184 : vector<1x1x128xf32> to vector<1x128xf32>
    %186 = arith.truncf %181 : vector<16x256xf32> to vector<16x256xbf16>
    %cst_77 = arith.constant dense<0.000000e+00> : vector<16x128xf32>
    %187 = tpu.matmul %186, %183, %cst_77 {dimension_numbers = #tpu.dot_dimension_numbers<[1], [0], [0], [1], [0, 0, 1, 1], [], []>} : vector<16x256xbf16>, vector<256x128xbf16>, vector<16x128xf32> -> vector<16x128xf32>
    %188 = vector.broadcast %185 : vector<1x128xf32> to vector<16x128xf32>
    %189 = arith.addf %187, %188 : vector<16x128xf32>
    %190 = arith.addf %171, %189 : vector<16x128xf32>
    %c0_78 = arith.constant 0 : index
    %c0_79 = arith.constant 0 : index
    %c0_80 = arith.constant 0 : index
    %191 = vector.load %arg18[%c0_78, %c0_79, %c0_80] : memref<1x1x128xf32, #tpu.memory_space<vmem>>, vector<1x1x128xf32>
    %192 = vector.shape_cast %191 : vector<1x1x128xf32> to vector<1x128xf32>
    %c0_81 = arith.constant 0 : index
    %c0_82 = arith.constant 0 : index
    %c0_83 = arith.constant 0 : index
    %193 = vector.load %arg19[%c0_81, %c0_82, %c0_83] : memref<1x1x128xf32, #tpu.memory_space<vmem>>, vector<1x1x128xf32>
    %194 = vector.shape_cast %193 : vector<1x1x128xf32> to vector<1x128xf32>
    %cst_84 = arith.constant dense<0.000000e+00> : vector<16xf32>
    %195 = vector.multi_reduction <add>, %190, %cst_84 [1] : vector<16x128xf32> to vector<16xf32>
    %196 = vector.shape_cast %195 : vector<16xf32> to vector<16x1xf32>
    %cst_85 = arith.constant 1.280000e+02 : f32
    %197 = vector.broadcast %cst_85 : f32 to vector<16x1xf32>
    %198 = arith.divf %196, %197 : vector<16x1xf32>
    %199 = vector.broadcast %198 : vector<16x1xf32> to vector<16x128xf32>
    %200 = arith.subf %190, %199 : vector<16x128xf32>
    %201 = arith.mulf %200, %200 : vector<16x128xf32>
    %cst_86 = arith.constant dense<0.000000e+00> : vector<16xf32>
    %202 = vector.multi_reduction <add>, %201, %cst_86 [1] : vector<16x128xf32> to vector<16xf32>
    %203 = vector.shape_cast %202 : vector<16xf32> to vector<16x1xf32>
    %cst_87 = arith.constant 1.280000e+02 : f32
    %204 = vector.broadcast %cst_87 : f32 to vector<16x1xf32>
    %205 = arith.divf %203, %204 : vector<16x1xf32>
    %206 = vector.broadcast %198 : vector<16x1xf32> to vector<16x128xf32>
    %207 = arith.subf %190, %206 : vector<16x128xf32>
    %cst_88 = arith.constant 9.99999974E-6 : f32
    %208 = vector.broadcast %cst_88 : f32 to vector<16x1xf32>
    %209 = arith.addf %205, %208 : vector<16x1xf32>
    %210 = math.rsqrt %209 : vector<16x1xf32>
    %211 = vector.broadcast %210 : vector<16x1xf32> to vector<16x128xf32>
    %212 = arith.mulf %207, %211 : vector<16x128xf32>
    %213 = vector.broadcast %192 : vector<1x128xf32> to vector<16x128xf32>
    %214 = arith.mulf %212, %213 : vector<16x128xf32>
    %215 = vector.broadcast %194 : vector<1x128xf32> to vector<16x128xf32>
    %216 = arith.addf %214, %215 : vector<16x128xf32>
    %c0_89 = arith.constant 0 : index
    %c0_90 = arith.constant 0 : index
    %217 = vector.load %arg21[%c0_89, %c0_90] : memref<16x128xf32, #tpu.memory_space<vmem>>, vector<16x128xf32>
    tpu.vector_store %arg21[%c0_89, %c0_90], %216 {strides = array<i32>} : memref<16x128xf32, #tpu.memory_space<vmem>>, vector<16x128xf32>,
    %c1_i32_91 = arith.constant 1 : i32
    %218 = arith.cmpi eq, %arg1, %c1_i32_91 : i32
    %219 = arith.extui %218 : i1 to i32
    %c0_i32_92 = arith.constant 0 : i32
    %220 = arith.cmpi ne, %219, %c0_i32_92 : i32
    scf.if %220 {
      %221 = vector.shape_cast %216 : vector<16x128xf32> to vector<2x8x128xf32>
      %222 = arith.truncf %221 : vector<2x8x128xf32> to vector<2x8x128xbf16>
      %c0_93 = arith.constant 0 : index
      %c0_94 = arith.constant 0 : index
      %c0_95 = arith.constant 0 : index
      %223 = vector.load %arg20[%c0_93, %c0_94, %c0_95] : memref<2x8x128xbf16, #tpu.memory_space<vmem>>, vector<2x8x128xbf16>
      tpu.vector_store %arg20[%c0_93, %c0_94, %c0_95], %222 {strides = array<i32>} : memref<2x8x128xbf16, #tpu.memory_space<vmem>>, vector<2x8x128xbf16>,
    } else {
    }
    return
  }
  func.func @transform_0(%arg0: i32, %arg1: i32, %arg2: memref<2xi32, #tpu.memory_space<smem>>) -> (i32, i32, i32) {
    %c0_i32 = arith.constant 0 : i32
    %c0_i32_0 = arith.constant 0 : i32
    %c0_i32_1 = arith.constant 0 : i32
    return %arg0, %c0_i32, %c0_i32_0 : i32, i32, i32
  }
  func.func @transform_1(%arg0: i32, %arg1: i32, %arg2: memref<2xi32, #tpu.memory_space<smem>>) -> (i32, i32, i32) {
    %c0_i32 = arith.constant 0 : i32
    %c0_i32_0 = arith.constant 0 : i32
    %c0_i32_1 = arith.constant 0 : i32
    return %arg1, %c0_i32, %c0_i32_0 : i32, i32, i32
  }
  func.func @transform_2(%arg0: i32, %arg1: i32, %arg2: memref<2xi32, #tpu.memory_space<smem>>) -> (i32, i32, i32) {
    %c0_i32 = arith.constant 0 : i32
    %c0_i32_0 = arith.constant 0 : i32
    %c0_i32_1 = arith.constant 0 : i32
    return %arg1, %c0_i32, %c0_i32_0 : i32, i32, i32
  }
  func.func @transform_3(%arg0: i32, %arg1: i32, %arg2: memref<2xi32, #tpu.memory_space<smem>>) -> (i32, i32, i32) {
    %c0_i32 = arith.constant 0 : i32
    %c0_i32_0 = arith.constant 0 : i32
    %c0_i32_1 = arith.constant 0 : i32
    return %arg1, %c0_i32, %c0_i32_0 : i32, i32, i32
  }
  func.func @transform_4(%arg0: i32, %arg1: i32, %arg2: memref<2xi32, #tpu.memory_space<smem>>) -> (i32, i32, i32) {
    %c0_i32 = arith.constant 0 : i32
    %c0_i32_0 = arith.constant 0 : i32
    %c0_i32_1 = arith.constant 0 : i32
    return %arg1, %c0_i32, %c0_i32_0 : i32, i32, i32
  }
  func.func @transform_5(%arg0: i32, %arg1: i32, %arg2: memref<2xi32, #tpu.memory_space<smem>>) -> (i32, i32, i32) {
    %c0_i32 = arith.constant 0 : i32
    %c0_i32_0 = arith.constant 0 : i32
    %c0_i32_1 = arith.constant 0 : i32
    return %arg1, %c0_i32, %c0_i32_0 : i32, i32, i32
  }
  func.func @transform_6(%arg0: i32, %arg1: i32, %arg2: memref<2xi32, #tpu.memory_space<smem>>) -> (i32, i32, i32) {
    %c0_i32 = arith.constant 0 : i32
    %c0_i32_0 = arith.constant 0 : i32
    %c0_i32_1 = arith.constant 0 : i32
    return %arg1, %c0_i32, %c0_i32_0 : i32, i32, i32
  }
  func.func @transform_7(%arg0: i32, %arg1: i32, %arg2: memref<2xi32, #tpu.memory_space<smem>>) -> (i32, i32, i32) {
    %c0_i32 = arith.constant 0 : i32
    %c0_i32_0 = arith.constant 0 : i32
    %c0_i32_1 = arith.constant 0 : i32
    return %arg1, %c0_i32, %c0_i32_0 : i32, i32, i32
  }
  func.func @transform_8(%arg0: i32, %arg1: i32, %arg2: memref<2xi32, #tpu.memory_space<smem>>) -> (i32, i32, i32) {
    %c0_i32 = arith.constant 0 : i32
    %c0_i32_0 = arith.constant 0 : i32
    %c0_i32_1 = arith.constant 0 : i32
    return %arg1, %c0_i32, %c0_i32_0 : i32, i32, i32
  }
  func.func @transform_9(%arg0: i32, %arg1: i32, %arg2: memref<2xi32, #tpu.memory_space<smem>>) -> (i32, i32, i32) {
    %c0_i32 = arith.constant 0 : i32
    %c0_i32_0 = arith.constant 0 : i32
    %c0_i32_1 = arith.constant 0 : i32
    return %arg1, %c0_i32, %c0_i32_0 : i32, i32, i32
  }
  func.func @transform_10(%arg0: i32, %arg1: i32, %arg2: memref<2xi32, #tpu.memory_space<smem>>) -> (i32, i32, i32) {
    %c0_i32 = arith.constant 0 : i32
    %c0_i32_0 = arith.constant 0 : i32
    %c0_i32_1 = arith.constant 0 : i32
    return %arg1, %c0_i32, %c0_i32_0 : i32, i32, i32
  }
  func.func @transform_11(%arg0: i32, %arg1: i32, %arg2: memref<2xi32, #tpu.memory_space<smem>>) -> (i32, i32, i32) {
    %c0_i32 = arith.constant 0 : i32
    %c0_i32_0 = arith.constant 0 : i32
    %c0_i32_1 = arith.constant 0 : i32
    return %arg1, %c0_i32, %c0_i32_0 : i32, i32, i32
  }
  func.func @transform_12(%arg0: i32, %arg1: i32, %arg2: memref<2xi32, #tpu.memory_space<smem>>) -> (i32, i32, i32) {
    %c0_i32 = arith.constant 0 : i32
    %c0_i32_0 = arith.constant 0 : i32
    %c0_i32_1 = arith.constant 0 : i32
    return %arg1, %c0_i32, %c0_i32_0 : i32, i32, i32
  }
  func.func @transform_13(%arg0: i32, %arg1: i32, %arg2: memref<2xi32, #tpu.memory_space<smem>>) -> (i32, i32, i32) {
    %c0_i32 = arith.constant 0 : i32
    %c0_i32_0 = arith.constant 0 : i32
    %c0_i32_1 = arith.constant 0 : i32
    return %arg1, %c0_i32, %c0_i32_0 : i32, i32, i32
  }
  func.func @transform_14(%arg0: i32, %arg1: i32, %arg2: memref<2xi32, #tpu.memory_space<smem>>) -> (i32, i32, i32) {
    %c0_i32 = arith.constant 0 : i32
    %c0_i32_0 = arith.constant 0 : i32
    %c0_i32_1 = arith.constant 0 : i32
    return %arg1, %c0_i32, %c0_i32_0 : i32, i32, i32
  }
  func.func @transform_15(%arg0: i32, %arg1: i32, %arg2: memref<2xi32, #tpu.memory_space<smem>>) -> (i32, i32, i32) {
    %c0_i32 = arith.constant 0 : i32
    %c0_i32_0 = arith.constant 0 : i32
    %c0_i32_1 = arith.constant 0 : i32
    return %arg1, %c0_i32, %c0_i32_0 : i32, i32, i32
  }
  func.func @transform_16(%arg0: i32, %arg1: i32, %arg2: memref<2xi32, #tpu.memory_space<smem>>) -> (i32, i32, i32) {
    %c0_i32 = arith.constant 0 : i32
    %c0_i32_0 = arith.constant 0 : i32
    %c0_i32_1 = arith.constant 0 : i32
    return %arg1, %c0_i32, %c0_i32_0 : i32, i32, i32
  }
  func.func @transform_17(%arg0: i32, %arg1: i32, %arg2: memref<2xi32, #tpu.memory_space<smem>>) -> (i32, i32, i32) {
    %c0_i32 = arith.constant 0 : i32
    %c0_i32_0 = arith.constant 0 : i32
    %c0_i32_1 = arith.constant 0 : i32
    return %arg0, %c0_i32, %c0_i32_0 : i32, i32, i32
  }
}

</mosaic_0001>

<llo_original>
// kernel: tpu_custom_call.1
$region0: #{tpu_custom_call.1}
  #allocation0 [shape = 'u32[]', space=smem, size = 0x4, offset = 0x4, fixed_abs, tag = 'smem constant byte address 0x4 - core index']
  #allocation1 [shape = 'u32[144,128]{1,0:T(1,128)}', space=vmem, size = 0x12000, scoped, tag = 'internal scratch']
  #allocation2 [shape = 'f32[16,128]{1,0:T(8,128)}', space=vmem, size = 0x2000, scoped, tag = 'scratch operand']
  #allocation3 [shape = 's32[1]{0}', space=sflag, size = 0x4, scoped, tag = 'scoped memory for tpu_custom_call.1']
  #allocation4 [shape = 'u8[512]{0}', space=smem, size = 0x200, scoped, tag = 'prefetched SMEM operand 0']
  %s0 = inlined_call_operand.hbm [shape: s32[2], index: 0, kind: input, shape index: {}]
  %s1 = inlined_call_operand.hbm [shape: bf16[2,8,128], index: 1, kind: input, shape index: {}]
  %s2 = inlined_call_operand.hbm [shape: bf16[2,128,128], index: 2, kind: input, shape index: {}]
  %s3 = inlined_call_operand.vmem [shape: f32[2,1,128], index: 3, kind: input, shape index: {}]
  %s4 = inlined_call_operand.hbm [shape: bf16[2,128,128], index: 4, kind: input, shape index: {}]
  %s5 = inlined_call_operand.vmem [shape: f32[2,1,128], index: 5, kind: input, shape index: {}]
  %s6 = inlined_call_operand.hbm [shape: bf16[2,128,128], index: 6, kind: input, shape index: {}]
  %s7 = inlined_call_operand.vmem [shape: f32[2,1,128], index: 7, kind: input, shape index: {}]
  %s8 = inlined_call_operand.hbm [shape: bf16[2,128,128], index: 8, kind: input, shape index: {}]
  %s9 = inlined_call_operand.vmem [shape: f32[2,1,128], index: 9, kind: input, shape index: {}]
  %s10 = inlined_call_operand.vmem [shape: f32[2,1,128], index: 10, kind: input, shape index: {}]
  %s11 = inlined_call_operand.vmem [shape: f32[2,1,128], index: 11, kind: input, shape index: {}]
  %s12 = inlined_call_operand.hbm [shape: bf16[2,128,256], index: 12, kind: input, shape index: {}]
  %s13 = inlined_call_operand.vmem [shape: f32[2,1,256], index: 13, kind: input, shape index: {}]
  %s14 = inlined_call_operand.hbm [shape: bf16[2,256,128], index: 14, kind: input, shape index: {}]
  %s15 = inlined_call_operand.vmem [shape: f32[2,1,128], index: 15, kind: input, shape index: {}]
  %s16 = inlined_call_operand.vmem [shape: f32[2,1,128], index: 16, kind: input, shape index: {}]
  %s17 = inlined_call_operand.vmem [shape: f32[2,1,128], index: 17, kind: input, shape index: {}]
  %s18 = inlined_call_operand.hbm [shape: bf16[2,8,128], index: 18, kind: output, shape index: {}]
  %s19 = sld [smem:[#allocation0]]
  $region137: #{tpu_custom_call.1} parent=0
    _
  %s21 = ssub.s32 1, %s19
  %s22 = scalar_select 0, %s21, %s19
  %24 = dma.hbm_to_smem %s0, 16, [#allocation4], [#allocation3]
  %25 = dma.done [#allocation3], 16
  %26 = sfence
  $region1: #{tpu_custom_call.1} parent=0
    #allocation5 [shape = 'u8[4096]{0}', space=vmem, size = 0x1000, scoped, tag = 'input window, operand 1, single buffered']
    #allocation6 [shape = 's32[2]{0}', space=sflag, size = 0x8, scoped, tag = 'scoped memory for tpu_custom_call.1']
    #allocation7 [shape = 's32[2]{0}', space=sflag, size = 0x8, scoped, tag = 'scoped memory for tpu_custom_call.1']
    #allocation8 [shape = 'u8[65536]{0}', space=vmem, size = 0x10000, scoped, tag = 'input window, operand 2']
    #allocation9 [shape = 's32[2]{0}', space=sflag, size = 0x8, scoped, tag = 'scoped memory for tpu_custom_call.1']
    #allocation10 [shape = 'u8[65536]{0}', space=vmem, size = 0x10000, scoped, tag = 'input window, operand 4']
    #allocation11 [shape = 'u8[65536]{0}', space=vmem, size = 0x10000, scoped, tag = 'input window, operand 6']
    #allocation12 [shape = 's32[2]{0}', space=sflag, size = 0x8, scoped, tag = 'scoped memory for tpu_custom_call.1']
    #allocation13 [shape = 'u8[65536]{0}', space=vmem, size = 0x10000, scoped, tag = 'input window, operand 8']
    #allocation14 [shape = 'u8[131072]{0}', space=vmem, size = 0x20000, scoped, tag = 'input window, operand 12']
    #allocation15 [shape = 's32[2]{0}', space=sflag, size = 0x8, scoped, tag = 'scoped memory for tpu_custom_call.1']
    #allocation16 [shape = 'u8[131072]{0}', space=vmem, size = 0x20000, scoped, tag = 'input window, operand 14']
    #allocation17 [shape = 'u8[4096]{0}', space=vmem, size = 0x1000, scoped, tag = 'output window, operand 0, single buffered']
    %27 = vsyncpa [#allocation6], 0
    %28 = vsyncpa [#allocation9], 0
    %s29 = scalar_lea.sflag [#allocation9], 1
    %30 = vsyncpa %s29, 0
    %31 = vsyncpa [#allocation12], 0
    %s32 = scalar_lea.sflag [#allocation12], 1
    %33 = vsyncpa %s32, 0
    %34 = vsyncpa [#allocation15], 0
    %s35 = scalar_lea.sflag [#allocation15], 1
    %36 = vsyncpa %s35, 0
    %37 = vsyncpa [#allocation7], 0
    loop: start=0, step=1, limit=4
    $region2: #{tpu_custom_call.1} parent=1 // loop_pre_header
      _
    $region3: #{tpu_custom_call.1} parent=1 // loop_header
      %s39 = sphi 0, %s43
      %p40 = scmp.ge.s32.totalorder %s39, 4
      %s46 = sphi 0, %s58
      %s47 = sphi 0, %s54
      %s48 = sphi 0, %s46
      %s49 = sphi 0, %s47
      %s50 = sphi 0, %s48
      %s51 = sphi 0, %s49
      %s61 = sphi 0, %s63
      %s64 = sphi 0, %s61
      %s65 = sphi 0, %s64
      %s81 = sphi 0, %s65
      %s87 = sphi 0, %s89
      %s90 = sphi 0, %s87
      %s91 = sphi 0, %s90
      %s107 = sphi 0, %s91
      %s113 = sphi 0, %s115
      %s116 = sphi 0, %s113
      %s117 = sphi 0, %s116
      %s133 = sphi 0, %s117
      %s139 = sphi 0, %s141
      %s142 = sphi 0, %s139
      %s143 = sphi 0, %s142
      %s159 = sphi 0, %s143
      %s165 = sphi 0, %s167
      %s168 = sphi 0, %s165
      %s169 = sphi 0, %s168
      %s185 = sphi 0, %s169
      %s191 = sphi 0, %s193
      %s194 = sphi 0, %s191
      %s195 = sphi 0, %s194
      %s211 = sphi 0, %s195
      %s217 = sphi 0, %s219
      %s220 = sphi 0, %s217
      %s221 = sphi 0, %s220
      %s237 = sphi 0, %s221
      %s243 = sphi 0, %s245
      %s246 = sphi 0, %s243
      %s247 = sphi 0, %s246
      %s263 = sphi 0, %s247
      %s269 = sphi 0, %s271
      %s272 = sphi 0, %s269
      %s273 = sphi 0, %s272
      %s289 = sphi 0, %s273
      %s295 = sphi 0, %s297
      %s298 = sphi 0, %s295
      %s299 = sphi 0, %s298
      %s315 = sphi 0, %s299
      %s321 = sphi 0, %s323
      %s324 = sphi 0, %s321
      %s325 = sphi 0, %s324
      %s341 = sphi 0, %s325
      %s347 = sphi 0, %s349
      %s350 = sphi 0, %s347
      %s351 = sphi 0, %s350
      %s367 = sphi 0, %s351
      %s373 = sphi 0, %s375
      %s376 = sphi 0, %s373
      %s377 = sphi 0, %s376
      %s393 = sphi 0, %s377
      %s399 = sphi 0, %s401
      %s402 = sphi 0, %s399
      %s403 = sphi 0, %s402
      %s419 = sphi 0, %s403
      %s425 = sphi 0, %s427
      %s428 = sphi 0, %s425
      %s429 = sphi 0, %s428
      %s445 = sphi 0, %s429
      %s451 = sphi 0, %s453
      %s454 = sphi 0, %s451
      %s455 = sphi 0, %s454
      %s471 = sphi 0, %s455
      %s477 = sphi 0, %s479
      %s480 = sphi 0, %s477
      %s481 = sphi 0, %s480
      %s497 = sphi 0, %s481
      %s503 = sphi 0, %s505
      %s506 = sphi 0, %s503
      %s507 = sphi 0, %s506
      %s523 = sphi 0, %s507
    $region4: #{tpu_custom_call.1} parent=1 // loop_header_branch
      %42 = sbr.rel (%p40) target = $region8
    $region5: #{tpu_custom_call.1} parent=1 // loop_body
      %s44 = ssub.s32 %s39, 1
      %s45 = ssub.s32 %s39, 2
      %s52 = sadd.s32 1, %s47
      %p53 = scmp.ge.s32.totalorder %s52, 2
      %s54 = scalar_select %p53, 0, %s52
      %s55 = sadd.s32 1, %s46
      %s56 = scalar_select %p53, %s55, %s46
      %p57 = scmp.ge.s32.totalorder %s56, 1
      %s58 = scalar_select %p57, 0, %s56
      %s59 = ssub.s32 %s46, %s58
      %p60 = scmp.eq.s32.totalorder %s59, 0
      %s62 = sadd.s32 %s61, 1
      %s63 = scalar_select %p60, %s61, %s62
      %p66 = pneg %p60
      %p67 = scmp.eq.s32.totalorder %s39, 1
      %p68 = por %p66, %p67
      %p69 = scmp.ne.s32.totalorder %s61, %s64
      %p70 = scmp.eq.s32.totalorder %s39, 0
      %p71 = por %p69, %p70
      %p72 = scmp.ne.s32.totalorder %s61, %s64
      %p73 = scmp.eq.s32.totalorder %s44, 1
      %p74 = por %p72, %p73
      %p75 = scmp.ne.s32.totalorder %s64, %s65
      %p76 = scmp.eq.s32.totalorder %s44, 0
      %p77 = por %p75, %p76
      %p78 = scmp.ne.s32.totalorder %s64, %s65
      %p79 = scmp.eq.s32.totalorder %s45, 1
      %p80 = por %p78, %p79
      %p82 = scmp.ne.s32.totalorder %s65, %s81
      %p83 = scmp.eq.s32.totalorder %s45, 0
      %p84 = por %p82, %p83
      %s85 = ssub.s32 %s47, %s54
      %p86 = scmp.eq.s32.totalorder %s85, 0
      %s88 = sadd.s32 %s87, 1
      %s89 = scalar_select %p86, %s87, %s88
      %p92 = pneg %p86
      %p93 = scmp.eq.s32.totalorder %s39, 1
      %p94 = por %p92, %p93
      %p95 = scmp.ne.s32.totalorder %s87, %s90
      %p96 = scmp.eq.s32.totalorder %s39, 0
      %p97 = por %p95, %p96
      %p98 = scmp.ne.s32.totalorder %s87, %s90
      %p99 = scmp.eq.s32.totalorder %s44, 1
      %p100 = por %p98, %p99
      %p101 = scmp.ne.s32.totalorder %s90, %s91
      %p102 = scmp.eq.s32.totalorder %s44, 0
      %p103 = por %p101, %p102
      %p104 = scmp.ne.s32.totalorder %s90, %s91
      %p105 = scmp.eq.s32.totalorder %s45, 1
      %p106 = por %p104, %p105
      %p108 = scmp.ne.s32.totalorder %s91, %s107
      %p109 = scmp.eq.s32.totalorder %s45, 0
      %p110 = por %p108, %p109
      %s111 = ssub.s32 %s47, %s54
      %p112 = scmp.eq.s32.totalorder %s111, 0
      %s114 = sadd.s32 %s113, 1
      %s115 = scalar_select %p112, %s113, %s114
      %p118 = pneg %p112
      %p119 = scmp.eq.s32.totalorder %s39, 1
      %p120 = por %p118, %p119
      %p121 = scmp.ne.s32.totalorder %s113, %s116
      %p122 = scmp.eq.s32.totalorder %s39, 0
      %p123 = por %p121, %p122
      %p124 = scmp.ne.s32.totalorder %s113, %s116
      %p125 = scmp.eq.s32.totalorder %s44, 1
      %p126 = por %p124, %p125
      %p127 = scmp.ne.s32.totalorder %s116, %s117
      %p128 = scmp.eq.s32.totalorder %s44, 0
      %p129 = por %p127, %p128
      %p130 = scmp.ne.s32.totalorder %s116, %s117
      %p131 = scmp.eq.s32.totalorder %s45, 1
      %p132 = por %p130, %p131
      %p134 = scmp.ne.s32.totalorder %s117, %s133
      %p135 = scmp.eq.s32.totalorder %s45, 0
      %p136 = por %p134, %p135
      %s137 = ssub.s32 %s47, %s54
      %p138 = scmp.eq.s32.totalorder %s137, 0
      %s140 = sadd.s32 %s139, 1
      %s141 = scalar_select %p138, %s139, %s140
      %p144 = pneg %p138
      %p145 = scmp.eq.s32.totalorder %s39, 1
      %p146 = por %p144, %p145
      %p147 = scmp.ne.s32.totalorder %s139, %s142
      %p148 = scmp.eq.s32.totalorder %s39, 0
      %p149 = por %p147, %p148
      %p150 = scmp.ne.s32.totalorder %s139, %s142
      %p151 = scmp.eq.s32.totalorder %s44, 1
      %p152 = por %p150, %p151
      %p153 = scmp.ne.s32.totalorder %s142, %s143
      %p154 = scmp.eq.s32.totalorder %s44, 0
      %p155 = por %p153, %p154
      %p156 = scmp.ne.s32.totalorder %s142, %s143
      %p157 = scmp.eq.s32.totalorder %s45, 1
      %p158 = por %p156, %p157
      %p160 = scmp.ne.s32.totalorder %s143, %s159
      %p161 = scmp.eq.s32.totalorder %s45, 0
      %p162 = por %p160, %p161
      %s163 = ssub.s32 %s47, %s54
      %p164 = scmp.eq.s32.totalorder %s163, 0
      %s166 = sadd.s32 %s165, 1
      %s167 = scalar_select %p164, %s165, %s166
      %p170 = pneg %p164
      %p171 = scmp.eq.s32.totalorder %s39, 1
      %p172 = por %p170, %p171
      %p173 = scmp.ne.s32.totalorder %s165, %s168
      %p174 = scmp.eq.s32.totalorder %s39, 0
      %p175 = por %p173, %p174
      %p176 = scmp.ne.s32.totalorder %s165, %s168
      %p177 = scmp.eq.s32.totalorder %s44, 1
      %p178 = por %p176, %p177
      %p179 = scmp.ne.s32.totalorder %s168, %s169
      %p180 = scmp.eq.s32.totalorder %s44, 0
      %p181 = por %p179, %p180
      %p182 = scmp.ne.s32.totalorder %s168, %s169
      %p183 = scmp.eq.s32.totalorder %s45, 1
      %p184 = por %p182, %p183
      %p186 = scmp.ne.s32.totalorder %s169, %s185
      %p187 = scmp.eq.s32.totalorder %s45, 0
      %p188 = por %p186, %p187
      %s189 = ssub.s32 %s47, %s54
      %p190 = scmp.eq.s32.totalorder %s189, 0
      %s192 = sadd.s32 %s191, 1
      %s193 = scalar_select %p190, %s191, %s192
      %p196 = pneg %p190
      %p197 = scmp.eq.s32.totalorder %s39, 1
      %p198 = por %p196, %p197
      %p199 = scmp.ne.s32.totalorder %s191, %s194
      %p200 = scmp.eq.s32.totalorder %s39, 0
      %p201 = por %p199, %p200
      %p202 = scmp.ne.s32.totalorder %s191, %s194
      %p203 = scmp.eq.s32.totalorder %s44, 1
      %p204 = por %p202, %p203
      %p205 = scmp.ne.s32.totalorder %s194, %s195
      %p206 = scmp.eq.s32.totalorder %s44, 0
      %p207 = por %p205, %p206
      %p208 = scmp.ne.s32.totalorder %s194, %s195
      %p209 = scmp.eq.s32.totalorder %s45, 1
      %p210 = por %p208, %p209
      %p212 = scmp.ne.s32.totalorder %s195, %s211
      %p213 = scmp.eq.s32.totalorder %s45, 0
      %p214 = por %p212, %p213
      %s215 = ssub.s32 %s47, %s54
      %p216 = scmp.eq.s32.totalorder %s215, 0
      %s218 = sadd.s32 %s217, 1
      %s219 = scalar_select %p216, %s217, %s218
      %p222 = pneg %p216
      %p223 = scmp.eq.s32.totalorder %s39, 1
      %p224 = por %p222, %p223
      %p225 = scmp.ne.s32.totalorder %s217, %s220
      %p226 = scmp.eq.s32.totalorder %s39, 0
      %p227 = por %p225, %p226
      %p228 = scmp.ne.s32.totalorder %s217, %s220
      %p229 = scmp.eq.s32.totalorder %s44, 1
      %p230 = por %p228, %p229
      %p231 = scmp.ne.s32.totalorder %s220, %s221
      %p232 = scmp.eq.s32.totalorder %s44, 0
      %p233 = por %p231, %p232
      %p234 = scmp.ne.s32.totalorder %s220, %s221
      %p235 = scmp.eq.s32.totalorder %s45, 1
      %p236 = por %p234, %p235
      %p238 = scmp.ne.s32.totalorder %s221, %s237
      %p239 = scmp.eq.s32.totalorder %s45, 0
      %p240 = por %p238, %p239
      %s241 = ssub.s32 %s47, %s54
      %p242 = scmp.eq.s32.totalorder %s241, 0
      %s244 = sadd.s32 %s243, 1
      %s245 = scalar_select %p242, %s243, %s244
      %p248 = pneg %p242
      %p249 = scmp.eq.s32.totalorder %s39, 1
      %p250 = por %p248, %p249
      %p251 = scmp.ne.s32.totalorder %s243, %s246
      %p252 = scmp.eq.s32.totalorder %s39, 0
      %p253 = por %p251, %p252
      %p254 = scmp.ne.s32.totalorder %s243, %s246
      %p255 = scmp.eq.s32.totalorder %s44, 1
      %p256 = por %p254, %p255
      %p257 = scmp.ne.s32.totalorder %s246, %s247
      %p258 = scmp.eq.s32.totalorder %s44, 0
      %p259 = por %p257, %p258
      %p260 = scmp.ne.s32.totalorder %s246, %s247
      %p261 = scmp.eq.s32.totalorder %s45, 1
      %p262 = por %p260, %p261
      %p264 = scmp.ne.s32.totalorder %s247, %s263
      %p265 = scmp.eq.s32.totalorder %s45, 0
      %p266 = por %p264, %p265
      %s267 = ssub.s32 %s47, %s54
      %p268 = scmp.eq.s32.totalorder %s267, 0
      %s270 = sadd.s32 %s269, 1
      %s271 = scalar_select %p268, %s269, %s270
      %p274 = pneg %p268
      %p275 = scmp.eq.s32.totalorder %s39, 1
      %p276 = por %p274, %p275
      %p277 = scmp.ne.s32.totalorder %s269, %s272
      %p278 = scmp.eq.s32.totalorder %s39, 0
      %p279 = por %p277, %p278
      %p280 = scmp.ne.s32.totalorder %s269, %s272
      %p281 = scmp.eq.s32.totalorder %s44, 1
      %p282 = por %p280, %p281
      %p283 = scmp.ne.s32.totalorder %s272, %s273
      %p284 = scmp.eq.s32.totalorder %s44, 0
      %p285 = por %p283, %p284
      %p286 = scmp.ne.s32.totalorder %s272, %s273
      %p287 = scmp.eq.s32.totalorder %s45, 1
      %p288 = por %p286, %p287
      %p290 = scmp.ne.s32.totalorder %s273, %s289
      %p291 = scmp.eq.s32.totalorder %s45, 0
      %p292 = por %p290, %p291
      %s293 = ssub.s32 %s47, %s54
      %p294 = scmp.eq.s32.totalorder %s293, 0
      %s296 = sadd.s32 %s295, 1
      %s297 = scalar_select %p294, %s295, %s296
      %p300 = pneg %p294
      %p301 = scmp.eq.s32.totalorder %s39, 1
      %p302 = por %p300, %p301
      %p303 = scmp.ne.s32.totalorder %s295, %s298
      %p304 = scmp.eq.s32.totalorder %s39, 0
      %p305 = por %p303, %p304
      %p306 = scmp.ne.s32.totalorder %s295, %s298
      %p307 = scmp.eq.s32.totalorder %s44, 1
      %p308 = por %p306, %p307
      %p309 = scmp.ne.s32.totalorder %s298, %s299
      %p310 = scmp.eq.s32.totalorder %s44, 0
      %p311 = por %p309, %p310
      %p312 = scmp.ne.s32.totalorder %s298, %s299
      %p313 = scmp.eq.s32.totalorder %s45, 1
      %p314 = por %p312, %p313
      %p316 = scmp.ne.s32.totalorder %s299, %s315
      %p317 = scmp.eq.s32.totalorder %s45, 0
      %p318 = por %p316, %p317
      %s319 = ssub.s32 %s47, %s54
      %p320 = scmp.eq.s32.totalorder %s319, 0
      %s322 = sadd.s32 %s321, 1
      %s323 = scalar_select %p320, %s321, %s322
      %p326 = pneg %p320
      %p327 = scmp.eq.s32.totalorder %s39, 1
      %p328 = por %p326, %p327
      %p329 = scmp.ne.s32.totalorder %s321, %s324
      %p330 = scmp.eq.s32.totalorder %s39, 0
      %p331 = por %p329, %p330
      %p332 = scmp.ne.s32.totalorder %s321, %s324
      %p333 = scmp.eq.s32.totalorder %s44, 1
      %p334 = por %p332, %p333
      %p335 = scmp.ne.s32.totalorder %s324, %s325
      %p336 = scmp.eq.s32.totalorder %s44, 0
      %p337 = por %p335, %p336
      %p338 = scmp.ne.s32.totalorder %s324, %s325
      %p339 = scmp.eq.s32.totalorder %s45, 1
      %p340 = por %p338, %p339
      %p342 = scmp.ne.s32.totalorder %s325, %s341
      %p343 = scmp.eq.s32.totalorder %s45, 0
      %p344 = por %p342, %p343
      %s345 = ssub.s32 %s47, %s54
      %p346 = scmp.eq.s32.totalorder %s345, 0
      %s348 = sadd.s32 %s347, 1
      %s349 = scalar_select %p346, %s347, %s348
      %p352 = pneg %p346
      %p353 = scmp.eq.s32.totalorder %s39, 1
      %p354 = por %p352, %p353
      %p355 = scmp.ne.s32.totalorder %s347, %s350
      %p356 = scmp.eq.s32.totalorder %s39, 0
      %p357 = por %p355, %p356
      %p358 = scmp.ne.s32.totalorder %s347, %s350
      %p359 = scmp.eq.s32.totalorder %s44, 1
      %p360 = por %p358, %p359
      %p361 = scmp.ne.s32.totalorder %s350, %s351
      %p362 = scmp.eq.s32.totalorder %s44, 0
      %p363 = por %p361, %p362
      %p364 = scmp.ne.s32.totalorder %s350, %s351
      %p365 = scmp.eq.s32.totalorder %s45, 1
      %p366 = por %p364, %p365
      %p368 = scmp.ne.s32.totalorder %s351, %s367
      %p369 = scmp.eq.s32.totalorder %s45, 0
      %p370 = por %p368, %p369
      %s371 = ssub.s32 %s47, %s54
      %p372 = scmp.eq.s32.totalorder %s371, 0
      %s374 = sadd.s32 %s373, 1
      %s375 = scalar_select %p372, %s373, %s374
      %p378 = pneg %p372
      %p379 = scmp.eq.s32.totalorder %s39, 1
      %p380 = por %p378, %p379
      %p381 = scmp.ne.s32.totalorder %s373, %s376
      %p382 = scmp.eq.s32.totalorder %s39, 0
      %p383 = por %p381, %p382
      %p384 = scmp.ne.s32.totalorder %s373, %s376
      %p385 = scmp.eq.s32.totalorder %s44, 1
      %p386 = por %p384, %p385
      %p387 = scmp.ne.s32.totalorder %s376, %s377
      %p388 = scmp.eq.s32.totalorder %s44, 0
      %p389 = por %p387, %p388
      %p390 = scmp.ne.s32.totalorder %s376, %s377
      %p391 = scmp.eq.s32.totalorder %s45, 1
      %p392 = por %p390, %p391
      %p394 = scmp.ne.s32.totalorder %s377, %s393
      %p395 = scmp.eq.s32.totalorder %s45, 0
      %p396 = por %p394, %p395
      %s397 = ssub.s32 %s47, %s54
      %p398 = scmp.eq.s32.totalorder %s397, 0
      %s400 = sadd.s32 %s399, 1
      %s401 = scalar_select %p398, %s399, %s400
      %p404 = pneg %p398
      %p405 = scmp.eq.s32.totalorder %s39, 1
      %p406 = por %p404, %p405
      %p407 = scmp.ne.s32.totalorder %s399, %s402
      %p408 = scmp.eq.s32.totalorder %s39, 0
      %p409 = por %p407, %p408
      %p410 = scmp.ne.s32.totalorder %s399, %s402
      %p411 = scmp.eq.s32.totalorder %s44, 1
      %p412 = por %p410, %p411
      %p413 = scmp.ne.s32.totalorder %s402, %s403
      %p414 = scmp.eq.s32.totalorder %s44, 0
      %p415 = por %p413, %p414
      %p416 = scmp.ne.s32.totalorder %s402, %s403
      %p417 = scmp.eq.s32.totalorder %s45, 1
      %p418 = por %p416, %p417
      %p420 = scmp.ne.s32.totalorder %s403, %s419
      %p421 = scmp.eq.s32.totalorder %s45, 0
      %p422 = por %p420, %p421
      %s423 = ssub.s32 %s47, %s54
      %p424 = scmp.eq.s32.totalorder %s423, 0
      %s426 = sadd.s32 %s425, 1
      %s427 = scalar_select %p424, %s425, %s426
      %p430 = pneg %p424
      %p431 = scmp.eq.s32.totalorder %s39, 1
      %p432 = por %p430, %p431
      %p433 = scmp.ne.s32.totalorder %s425, %s428
      %p434 = scmp.eq.s32.totalorder %s39, 0
      %p435 = por %p433, %p434
      %p436 = scmp.ne.s32.totalorder %s425, %s428
      %p437 = scmp.eq.s32.totalorder %s44, 1
      %p438 = por %p436, %p437
      %p439 = scmp.ne.s32.totalorder %s428, %s429
      %p440 = scmp.eq.s32.totalorder %s44, 0
      %p441 = por %p439, %p440
      %p442 = scmp.ne.s32.totalorder %s428, %s429
      %p443 = scmp.eq.s32.totalorder %s45, 1
      %p444 = por %p442, %p443
      %p446 = scmp.ne.s32.totalorder %s429, %s445
      %p447 = scmp.eq.s32.totalorder %s45, 0
      %p448 = por %p446, %p447
      %s449 = ssub.s32 %s47, %s54
      %p450 = scmp.eq.s32.totalorder %s449, 0
      %s452 = sadd.s32 %s451, 1
      %s453 = scalar_select %p450, %s451, %s452
      %p456 = pneg %p450
      %p457 = scmp.eq.s32.totalorder %s39, 1
      %p458 = por %p456, %p457
      %p459 = scmp.ne.s32.totalorder %s451, %s454
      %p460 = scmp.eq.s32.totalorder %s39, 0
      %p461 = por %p459, %p460
      %p462 = scmp.ne.s32.totalorder %s451, %s454
      %p463 = scmp.eq.s32.totalorder %s44, 1
      %p464 = por %p462, %p463
      %p465 = scmp.ne.s32.totalorder %s454, %s455
      %p466 = scmp.eq.s32.totalorder %s44, 0
      %p467 = por %p465, %p466
      %p468 = scmp.ne.s32.totalorder %s454, %s455
      %p469 = scmp.eq.s32.totalorder %s45, 1
      %p470 = por %p468, %p469
      %p472 = scmp.ne.s32.totalorder %s455, %s471
      %p473 = scmp.eq.s32.totalorder %s45, 0
      %p474 = por %p472, %p473
      %s475 = ssub.s32 %s47, %s54
      %p476 = scmp.eq.s32.totalorder %s475, 0
      %s478 = sadd.s32 %s477, 1
      %s479 = scalar_select %p476, %s477, %s478
      %p482 = pneg %p476
      %p483 = scmp.eq.s32.totalorder %s39, 1
      %p484 = por %p482, %p483
      %p485 = scmp.ne.s32.totalorder %s477, %s480
      %p486 = scmp.eq.s32.totalorder %s39, 0
      %p487 = por %p485, %p486
      %p488 = scmp.ne.s32.totalorder %s477, %s480
      %p489 = scmp.eq.s32.totalorder %s44, 1
      %p490 = por %p488, %p489
      %p491 = scmp.ne.s32.totalorder %s480, %s481
      %p492 = scmp.eq.s32.totalorder %s44, 0
      %p493 = por %p491, %p492
      %p494 = scmp.ne.s32.totalorder %s480, %s481
      %p495 = scmp.eq.s32.totalorder %s45, 1
      %p496 = por %p494, %p495
      %p498 = scmp.ne.s32.totalorder %s481, %s497
      %p499 = scmp.eq.s32.totalorder %s45, 0
      %p500 = por %p498, %p499
      %s501 = ssub.s32 %s46, %s58
      %p502 = scmp.eq.s32.totalorder %s501, 0
      %s504 = sadd.s32 %s503, 1
      %s505 = scalar_select %p502, %s503, %s504
      %p508 = pneg %p502
      %p509 = scmp.eq.s32.totalorder %s39, 1
      %p510 = por %p508, %p509
      %p511 = scmp.ne.s32.totalorder %s503, %s506
      %p512 = scmp.eq.s32.totalorder %s39, 0
      %p513 = por %p511, %p512
      %p514 = scmp.ne.s32.totalorder %s503, %s506
      %p515 = scmp.eq.s32.totalorder %s44, 1
      %p516 = por %p514, %p515
      %p517 = scmp.ne.s32.totalorder %s506, %s507
      %p518 = scmp.eq.s32.totalorder %s44, 0
      %p519 = por %p517, %p518
      %p520 = scmp.ne.s32.totalorder %s506, %s507
      %p521 = scmp.eq.s32.totalorder %s45, 1
      %p522 = por %p520, %p521
      %p524 = scmp.ne.s32.totalorder %s507, %s523
      %p525 = scmp.eq.s32.totalorder %s45, 0
      %p526 = por %p524, %p525
      %p527 = scmp.le.s32.totalorder 1, %s39
      %p528 = scmp.lt.s32.totalorder %s39, 3
      %p529 = pnand %p527, %p528
      %p530 = pneg %p529
      // Predicated region
      $region9: #{tpu_custom_call.1} parent=5 // pred_check
        _
      $region10: #{tpu_custom_call.1} parent=5 // pred_check_branch
        %532 = sbr.rel (%p529) target = $region12
      $region11: #{tpu_custom_call.1} parent=5 // pred_region
        %s533 = ssub.s32 %s39, 1
        // Predicated region
        $region13: #{tpu_custom_call.1} parent=11 // pred_check
          %p534 = pneg %p77
        $region14: #{tpu_custom_call.1} parent=11 // pred_check_branch
          %536 = sbr.rel (%p534) target = $region16
        $region15: #{tpu_custom_call.1} parent=11 // pred_region
          %s537 = smul.u32 2, %s48
          %s539 = ssub.s32 128, 128
          %540 = vsyncadd [#allocation6], %s539
          %s541 = smul.addr %s537, 64
          %s542 = scalar_lea.hbm %s1, %s541
          %s543 = sshll.u32 [#allocation5], 4
          %s544 = int_to_ptr.vmem [resolvable:$true] %s543
          %549 = dma.hbm_to_vmem [thread:$0]  %s542, 128, %s544, [#allocation6], 64, 64, 4
        $region16: #{tpu_custom_call.1} parent=11 // pred_fallthru
          _
      $region12: #{tpu_custom_call.1} parent=5 // pred_fallthru
        _
      %p550 = scmp.lt.s32.totalorder %s39, 2
      // Predicated region
      $region17: #{tpu_custom_call.1} parent=5 // pred_check
        %p551 = pneg %p550
      $region18: #{tpu_custom_call.1} parent=5 // pred_check_branch
        %553 = sbr.rel (%p551) target = $region20
      $region19: #{tpu_custom_call.1} parent=5 // pred_region
        // Predicated region
        $region21: #{tpu_custom_call.1} parent=19 // pred_check
          %p554 = pneg %p97
        $region22: #{tpu_custom_call.1} parent=19 // pred_check_branch
          %556 = sbr.rel (%p554) target = $region24
        $region23: #{tpu_custom_call.1} parent=19 // pred_region
          %s557 = sand.u32 %s39, 1
          %s558 = scalar_lea.sflag [#allocation9], %s557
          %s559 = sand.u32 %s87, 1
          %s560 = smul.addr %s559, 64
          %s561 = scalar_lea.vmem [#allocation8], %s560
          %s563 = ssub.s32 1024, 1024
          %564 = vsyncadd %s558, %s563
          %s565 = smul.addr %s47, 16
          %s566 = smul.addr %s565, 64
          %s567 = scalar_lea.hbm %s2, %s566
          %s568 = sshll.u32 %s561, 4
          %s569 = int_to_ptr.vmem [resolvable:$true] %s568
          %574 = dma.hbm_to_vmem [thread:$0]  %s567, 1024, %s569, %s558, 64, 64, 4
        $region24: #{tpu_custom_call.1} parent=19 // pred_fallthru
          _
        // Predicated region
        $region25: #{tpu_custom_call.1} parent=19 // pred_check
          %p575 = pneg %p123
        $region26: #{tpu_custom_call.1} parent=19 // pred_check_branch
          %577 = sbr.rel (%p575) target = $region28
        $region27: #{tpu_custom_call.1} parent=19 // pred_region
          %p578 = scmp.lt.s32.totalorder %s47, 1
          %s579 = scalar_select %p578, %s47, 1
          %s580 = scalar_lea.vmem %s3, %s579
        $region28: #{tpu_custom_call.1} parent=19 // pred_fallthru
          _
        // Predicated region
        $region29: #{tpu_custom_call.1} parent=19 // pred_check
          %p581 = pneg %p149
        $region30: #{tpu_custom_call.1} parent=19 // pred_check_branch
          %583 = sbr.rel (%p581) target = $region32
        $region31: #{tpu_custom_call.1} parent=19 // pred_region
          %s584 = sand.u32 %s39, 1
          %s585 = scalar_lea.sflag [#allocation9], %s584
          %s586 = sand.u32 %s139, 1
          %s587 = smul.addr %s586, 64
          %s588 = scalar_lea.vmem [#allocation10], %s587
          %s590 = ssub.s32 1024, 1024
          %591 = vsyncadd %s585, %s590
          %s592 = smul.addr %s47, 16
          %s593 = smul.addr %s592, 64
          %s594 = scalar_lea.hbm %s4, %s593
          %s595 = sshll.u32 %s588, 4
          %s596 = int_to_ptr.vmem [resolvable:$true] %s595
          %601 = dma.hbm_to_vmem [thread:$0]  %s594, 1024, %s596, %s585, 64, 64, 4
        $region32: #{tpu_custom_call.1} parent=19 // pred_fallthru
          _
        // Predicated region
        $region33: #{tpu_custom_call.1} parent=19 // pred_check
          %p602 = pneg %p175
        $region34: #{tpu_custom_call.1} parent=19 // pred_check_branch
          %604 = sbr.rel (%p602) target = $region36
        $region35: #{tpu_custom_call.1} parent=19 // pred_region
          %p605 = scmp.lt.s32.totalorder %s47, 1
          %s606 = scalar_select %p605, %s47, 1
          %s607 = scalar_lea.vmem %s5, %s606
        $region36: #{tpu_custom_call.1} parent=19 // pred_fallthru
          _
        // Predicated region
        $region37: #{tpu_custom_call.1} parent=19 // pred_check
          %p608 = pneg %p201
        $region38: #{tpu_custom_call.1} parent=19 // pred_check_branch
          %610 = sbr.rel (%p608) target = $region40
        $region39: #{tpu_custom_call.1} parent=19 // pred_region
          %s611 = sand.u32 %s39, 1
          %s612 = scalar_lea.sflag [#allocation12], %s611
          %s613 = sand.u32 %s191, 1
          %s614 = smul.addr %s613, 64
          %s615 = scalar_lea.vmem [#allocation11], %s614
          %s617 = ssub.s32 1024, 1024
          %618 = vsyncadd %s612, %s617
          %s619 = smul.addr %s47, 16
          %s620 = smul.addr %s619, 64
          %s621 = scalar_lea.hbm %s6, %s620
          %s622 = sshll.u32 %s615, 4
          %s623 = int_to_ptr.vmem [resolvable:$true] %s622
          %628 = dma.hbm_to_vmem [thread:$0]  %s621, 1024, %s623, %s612, 64, 64, 4
        $region40: #{tpu_custom_call.1} parent=19 // pred_fallthru
          _
        // Predicated region
        $region41: #{tpu_custom_call.1} parent=19 // pred_check
          %p629 = pneg %p227
        $region42: #{tpu_custom_call.1} parent=19 // pred_check_branch
          %631 = sbr.rel (%p629) target = $region44
        $region43: #{tpu_custom_call.1} parent=19 // pred_region
          %p632 = scmp.lt.s32.totalorder %s47, 1
          %s633 = scalar_select %p632, %s47, 1
          %s634 = scalar_lea.vmem %s7, %s633
        $region44: #{tpu_custom_call.1} parent=19 // pred_fallthru
          _
        // Predicated region
        $region45: #{tpu_custom_call.1} parent=19 // pred_check
          %p635 = pneg %p253
        $region46: #{tpu_custom_call.1} parent=19 // pred_check_branch
          %637 = sbr.rel (%p635) target = $region48
        $region47: #{tpu_custom_call.1} parent=19 // pred_region
          %s638 = sand.u32 %s39, 1
          %s639 = scalar_lea.sflag [#allocation12], %s638
          %s640 = sand.u32 %s243, 1
          %s641 = smul.addr %s640, 64
          %s642 = scalar_lea.vmem [#allocation13], %s641
          %s644 = ssub.s32 1024, 1024
          %645 = vsyncadd %s639, %s644
          %s646 = smul.addr %s47, 16
          %s647 = smul.addr %s646, 64
          %s648 = scalar_lea.hbm %s8, %s647
          %s649 = sshll.u32 %s642, 4
          %s650 = int_to_ptr.vmem [resolvable:$true] %s649
          %655 = dma.hbm_to_vmem [thread:$0]  %s648, 1024, %s650, %s639, 64, 64, 4
        $region48: #{tpu_custom_call.1} parent=19 // pred_fallthru
          _
        // Predicated region
        $region49: #{tpu_custom_call.1} parent=19 // pred_check
          %p656 = pneg %p279
        $region50: #{tpu_custom_call.1} parent=19 // pred_check_branch
          %658 = sbr.rel (%p656) target = $region52
        $region51: #{tpu_custom_call.1} parent=19 // pred_region
          %p659 = scmp.lt.s32.totalorder %s47, 1
          %s660 = scalar_select %p659, %s47, 1
          %s661 = scalar_lea.vmem %s9, %s660
        $region52: #{tpu_custom_call.1} parent=19 // pred_fallthru
          _
        // Predicated region
        $region53: #{tpu_custom_call.1} parent=19 // pred_check
          %p662 = pneg %p305
        $region54: #{tpu_custom_call.1} parent=19 // pred_check_branch
          %664 = sbr.rel (%p662) target = $region56
        $region55: #{tpu_custom_call.1} parent=19 // pred_region
          %p665 = scmp.lt.s32.totalorder %s47, 1
          %s666 = scalar_select %p665, %s47, 1
          %s667 = scalar_lea.vmem %s10, %s666
        $region56: #{tpu_custom_call.1} parent=19 // pred_fallthru
          _
        // Predicated region
        $region57: #{tpu_custom_call.1} parent=19 // pred_check
          %p668 = pneg %p331
        $region58: #{tpu_custom_call.1} parent=19 // pred_check_branch
          %670 = sbr.rel (%p668) target = $region60
        $region59: #{tpu_custom_call.1} parent=19 // pred_region
          %p671 = scmp.lt.s32.totalorder %s47, 1
          %s672 = scalar_select %p671, %s47, 1
          %s673 = scalar_lea.vmem %s11, %s672
        $region60: #{tpu_custom_call.1} parent=19 // pred_fallthru
          _
        // Predicated region
        $region61: #{tpu_custom_call.1} parent=19 // pred_check
          %p674 = pneg %p357
        $region62: #{tpu_custom_call.1} parent=19 // pred_check_branch
          %676 = sbr.rel (%p674) target = $region64
        $region63: #{tpu_custom_call.1} parent=19 // pred_region
          %s677 = sand.u32 %s39, 1
          %s678 = scalar_lea.sflag [#allocation15], %s677
          %s679 = sand.u32 %s347, 1
          %s680 = smul.addr %s679, 128
          %s681 = scalar_lea.vmem [#allocation14], %s680
          %s683 = ssub.s32 2048, 2048
          %684 = vsyncadd %s678, %s683
          %s685 = smul.addr %s47, 32
          %s686 = smul.addr %s685, 64
          %s687 = scalar_lea.hbm %s12, %s686
          %s688 = sshll.u32 %s681, 4
          %s689 = int_to_ptr.vmem [resolvable:$true] %s688
          %694 = dma.hbm_to_vmem [thread:$0]  %s687, 2048, %s689, %s678, 128, 128, 8
        $region64: #{tpu_custom_call.1} parent=19 // pred_fallthru
          _
        // Predicated region
        $region65: #{tpu_custom_call.1} parent=19 // pred_check
          %p695 = pneg %p383
        $region66: #{tpu_custom_call.1} parent=19 // pred_check_branch
          %697 = sbr.rel (%p695) target = $region68
        $region67: #{tpu_custom_call.1} parent=19 // pred_region
          %p698 = scmp.lt.s32.totalorder %s47, 1
          %s699 = scalar_select %p698, %s47, 1
          %s700 = smul.addr %s699, 2
          %s701 = scalar_lea.vmem %s13, %s700
        $region68: #{tpu_custom_call.1} parent=19 // pred_fallthru
          _
        // Predicated region
        $region69: #{tpu_custom_call.1} parent=19 // pred_check
          %p702 = pneg %p409
        $region70: #{tpu_custom_call.1} parent=19 // pred_check_branch
          %704 = sbr.rel (%p702) target = $region72
        $region71: #{tpu_custom_call.1} parent=19 // pred_region
          %s705 = sand.u32 %s39, 1
          %s706 = scalar_lea.sflag [#allocation15], %s705
          %s707 = sand.u32 %s399, 1
          %s708 = smul.addr %s707, 128
          %s709 = scalar_lea.vmem [#allocation16], %s708
          %s711 = ssub.s32 2048, 2048
          %712 = vsyncadd %s706, %s711
          %s713 = smul.addr %s47, 32
          %s714 = smul.addr %s713, 64
          %s715 = scalar_lea.hbm %s14, %s714
          %s716 = sshll.u32 %s709, 4
          %s717 = int_to_ptr.vmem [resolvable:$true] %s716
          %722 = dma.hbm_to_vmem [thread:$0]  %s715, 2048, %s717, %s706, 64, 64, 4
        $region72: #{tpu_custom_call.1} parent=19 // pred_fallthru
          _
        // Predicated region
        $region73: #{tpu_custom_call.1} parent=19 // pred_check
          %p723 = pneg %p435
        $region74: #{tpu_custom_call.1} parent=19 // pred_check_branch
          %725 = sbr.rel (%p723) target = $region76
        $region75: #{tpu_custom_call.1} parent=19 // pred_region
          %p726 = scmp.lt.s32.totalorder %s47, 1
          %s727 = scalar_select %p726, %s47, 1
          %s728 = scalar_lea.vmem %s15, %s727
        $region76: #{tpu_custom_call.1} parent=19 // pred_fallthru
          _
        // Predicated region
        $region77: #{tpu_custom_call.1} parent=19 // pred_check
          %p729 = pneg %p461
        $region78: #{tpu_custom_call.1} parent=19 // pred_check_branch
          %731 = sbr.rel (%p729) target = $region80
        $region79: #{tpu_custom_call.1} parent=19 // pred_region
          %p732 = scmp.lt.s32.totalorder %s47, 1
          %s733 = scalar_select %p732, %s47, 1
          %s734 = scalar_lea.vmem %s16, %s733
        $region80: #{tpu_custom_call.1} parent=19 // pred_fallthru
          _
        // Predicated region
        $region81: #{tpu_custom_call.1} parent=19 // pred_check
          %p735 = pneg %p487
        $region82: #{tpu_custom_call.1} parent=19 // pred_check_branch
          %737 = sbr.rel (%p735) target = $region84
        $region83: #{tpu_custom_call.1} parent=19 // pred_region
          %p738 = scmp.lt.s32.totalorder %s47, 1
          %s739 = scalar_select %p738, %s47, 1
          %s740 = scalar_lea.vmem %s17, %s739
        $region84: #{tpu_custom_call.1} parent=19 // pred_fallthru
          _
      $region20: #{tpu_custom_call.1} parent=5 // pred_fallthru
        _
      %p741 = scmp.le.s32.totalorder 1, %s39
      %p742 = scmp.lt.s32.totalorder %s39, 3
      %p743 = pnand %p741, %p742
      %p744 = pneg %p743
      // Predicated region
      $region85: #{tpu_custom_call.1} parent=5 // pred_check
        _
      $region86: #{tpu_custom_call.1} parent=5 // pred_check_branch
        %746 = sbr.rel (%p743) target = $region88
      $region87: #{tpu_custom_call.1} parent=5 // pred_region
        %s747 = ssub.s32 %s39, 1
        // Predicated region
        $region89: #{tpu_custom_call.1} parent=87 // pred_check
          %p748 = pneg %p77
        $region90: #{tpu_custom_call.1} parent=87 // pred_check_branch
          %750 = sbr.rel (%p748) target = $region92
        $region91: #{tpu_custom_call.1} parent=87 // pred_region
          %751 = dma.done [#allocation6], 128
        $region92: #{tpu_custom_call.1} parent=87 // pred_fallthru
          _
        %s752 = sand.u32 %s44, 1
        %s753 = scalar_lea.sflag [#allocation9], %s752
        %s754 = sand.u32 %s90, 1
        %s755 = smul.addr %s754, 64
        %s756 = scalar_lea.vmem [#allocation8], %s755
        // Predicated region
        $region93: #{tpu_custom_call.1} parent=87 // pred_check
          %p757 = pneg %p103
        $region94: #{tpu_custom_call.1} parent=87 // pred_check_branch
          %759 = sbr.rel (%p757) target = $region96
        $region95: #{tpu_custom_call.1} parent=87 // pred_region
          %760 = dma.done %s753, 1024
        $region96: #{tpu_custom_call.1} parent=87 // pred_fallthru
          _
        %s761 = sand.u32 %s44, 1
        %s762 = scalar_lea.sflag [#allocation9], %s761
        %s763 = sand.u32 %s142, 1
        %s764 = smul.addr %s763, 64
        %s765 = scalar_lea.vmem [#allocation10], %s764
        // Predicated region
        $region97: #{tpu_custom_call.1} parent=87 // pred_check
          %p766 = pneg %p155
        $region98: #{tpu_custom_call.1} parent=87 // pred_check_branch
          %768 = sbr.rel (%p766) target = $region100
        $region99: #{tpu_custom_call.1} parent=87 // pred_region
          %769 = dma.done %s762, 1024
        $region100: #{tpu_custom_call.1} parent=87 // pred_fallthru
          _
        %s770 = sand.u32 %s44, 1
        %s771 = scalar_lea.sflag [#allocation12], %s770
        %s772 = sand.u32 %s194, 1
        %s773 = smul.addr %s772, 64
        %s774 = scalar_lea.vmem [#allocation11], %s773
        // Predicated region
        $region101: #{tpu_custom_call.1} parent=87 // pred_check
          %p775 = pneg %p207
        $region102: #{tpu_custom_call.1} parent=87 // pred_check_branch
          %777 = sbr.rel (%p775) target = $region104
        $region103: #{tpu_custom_call.1} parent=87 // pred_region
          %778 = dma.done %s771, 1024
        $region104: #{tpu_custom_call.1} parent=87 // pred_fallthru
          _
        %s779 = sand.u32 %s44, 1
        %s780 = scalar_lea.sflag [#allocation12], %s779
        %s781 = sand.u32 %s246, 1
        %s782 = smul.addr %s781, 64
        %s783 = scalar_lea.vmem [#allocation13], %s782
        // Predicated region
        $region105: #{tpu_custom_call.1} parent=87 // pred_check
          %p784 = pneg %p259
        $region106: #{tpu_custom_call.1} parent=87 // pred_check_branch
          %786 = sbr.rel (%p784) target = $region108
        $region107: #{tpu_custom_call.1} parent=87 // pred_region
          %787 = dma.done %s780, 1024
        $region108: #{tpu_custom_call.1} parent=87 // pred_fallthru
          _
        %s788 = sand.u32 %s44, 1
        %s789 = scalar_lea.sflag [#allocation15], %s788
        %s790 = sand.u32 %s350, 1
        %s791 = smul.addr %s790, 128
        %s792 = scalar_lea.vmem [#allocation14], %s791
        // Predicated region
        $region109: #{tpu_custom_call.1} parent=87 // pred_check
          %p793 = pneg %p363
        $region110: #{tpu_custom_call.1} parent=87 // pred_check_branch
          %795 = sbr.rel (%p793) target = $region112
        $region111: #{tpu_custom_call.1} parent=87 // pred_region
          %796 = dma.done %s789, 2048
        $region112: #{tpu_custom_call.1} parent=87 // pred_fallthru
          _
        %s797 = sand.u32 %s44, 1
        %s798 = scalar_lea.sflag [#allocation15], %s797
        %s799 = sand.u32 %s402, 1
        %s800 = smul.addr %s799, 128
        %s801 = scalar_lea.vmem [#allocation16], %s800
        // Predicated region
        $region113: #{tpu_custom_call.1} parent=87 // pred_check
          %p802 = pneg %p415
        $region114: #{tpu_custom_call.1} parent=87 // pred_check_branch
          %804 = sbr.rel (%p802) target = $region116
        $region115: #{tpu_custom_call.1} parent=87 // pred_region
          %805 = dma.done %s798, 2048
        $region116: #{tpu_custom_call.1} parent=87 // pred_fallthru
          _
        %p806 = pneg %p77
        %p807 = pneg %p74
        %s808 = sand.u32 %s44, 1
        %s809 = scalar_lea.sflag [#allocation9], %s808
        %s810 = sand.u32 %s90, 1
        %s811 = smul.addr %s810, 64
        %s812 = scalar_lea.vmem [#allocation8], %s811
        %p813 = pneg %p103
        %p814 = pneg %p100
        %p815 = scmp.lt.s32.totalorder %s49, 1
        %s816 = scalar_select %p815, %s49, 1
        %s817 = scalar_lea.vmem %s3, %s816
        %p818 = pneg %p129
        %p819 = pneg %p126
        %s820 = sand.u32 %s44, 1
        %s821 = scalar_lea.sflag [#allocation9], %s820
        %s822 = sand.u32 %s142, 1
        %s823 = smul.addr %s822, 64
        %s824 = scalar_lea.vmem [#allocation10], %s823
        %p825 = pneg %p155
        %p826 = pneg %p152
        %p827 = scmp.lt.s32.totalorder %s49, 1
        %s828 = scalar_select %p827, %s49, 1
        %s829 = scalar_lea.vmem %s5, %s828
        %p830 = pneg %p181
        %p831 = pneg %p178
        %s832 = sand.u32 %s44, 1
        %s833 = scalar_lea.sflag [#allocation12], %s832
        %s834 = sand.u32 %s194, 1
        %s835 = smul.addr %s834, 64
        %s836 = scalar_lea.vmem [#allocation11], %s835
        %p837 = pneg %p207
        %p838 = pneg %p204
        %p839 = scmp.lt.s32.totalorder %s49, 1
        %s840 = scalar_select %p839, %s49, 1
        %s841 = scalar_lea.vmem %s7, %s840
        %p842 = pneg %p233
        %p843 = pneg %p230
        %s844 = sand.u32 %s44, 1
        %s845 = scalar_lea.sflag [#allocation12], %s844
        %s846 = sand.u32 %s246, 1
        %s847 = smul.addr %s846, 64
        %s848 = scalar_lea.vmem [#allocation13], %s847
        %p849 = pneg %p259
        %p850 = pneg %p256
        %p851 = scmp.lt.s32.totalorder %s49, 1
        %s852 = scalar_select %p851, %s49, 1
        %s853 = scalar_lea.vmem %s9, %s852
        %p854 = pneg %p285
        %p855 = pneg %p282
        %p856 = scmp.lt.s32.totalorder %s49, 1
        %s857 = scalar_select %p856, %s49, 1
        %s858 = scalar_lea.vmem %s10, %s857
        %p859 = pneg %p311
        %p860 = pneg %p308
        %p861 = scmp.lt.s32.totalorder %s49, 1
        %s862 = scalar_select %p861, %s49, 1
        %s863 = scalar_lea.vmem %s11, %s862
        %p864 = pneg %p337
        %p865 = pneg %p334
        %s866 = sand.u32 %s44, 1
        %s867 = scalar_lea.sflag [#allocation15], %s866
        %s868 = sand.u32 %s350, 1
        %s869 = smul.addr %s868, 128
        %s870 = scalar_lea.vmem [#allocation14], %s869
        %p871 = pneg %p363
        %p872 = pneg %p360
        %p873 = scmp.lt.s32.totalorder %s49, 1
        %s874 = scalar_select %p873, %s49, 1
        %s875 = smul.addr %s874, 2
        %s876 = scalar_lea.vmem %s13, %s875
        %p877 = pneg %p389
        %p878 = pneg %p386
        %s879 = sand.u32 %s44, 1
        %s880 = scalar_lea.sflag [#allocation15], %s879
        %s881 = sand.u32 %s402, 1
        %s882 = smul.addr %s881, 128
        %s883 = scalar_lea.vmem [#allocation16], %s882
        %p884 = pneg %p415
        %p885 = pneg %p412
        %p886 = scmp.lt.s32.totalorder %s49, 1
        %s887 = scalar_select %p886, %s49, 1
        %s888 = scalar_lea.vmem %s15, %s887
        %p889 = pneg %p441
        %p890 = pneg %p438
        %p891 = scmp.lt.s32.totalorder %s49, 1
        %s892 = scalar_select %p891, %s49, 1
        %s893 = scalar_lea.vmem %s16, %s892
        %p894 = pneg %p467
        %p895 = pneg %p464
        %p896 = scmp.lt.s32.totalorder %s49, 1
        %s897 = scalar_select %p896, %s49, 1
        %s898 = scalar_lea.vmem %s17, %s897
        %p899 = pneg %p493
        %p900 = pneg %p490
        %p901 = pneg %p519
        %p902 = pneg %p516
        %s903 = smul.u32 2, %s48
        %p904 = scmp.lt.s32.totalorder %s49, 1
        %s905 = scalar_select %p904, %s49, 1
        %s906 = scalar_lea.vmem %s3, %s905
        %p907 = scmp.lt.s32.totalorder %s49, 1
        %s908 = scalar_select %p907, %s49, 1
        %s909 = scalar_lea.vmem %s5, %s908
        %p910 = scmp.lt.s32.totalorder %s49, 1
        %s911 = scalar_select %p910, %s49, 1
        %s912 = scalar_lea.vmem %s7, %s911
        %p913 = scmp.lt.s32.totalorder %s49, 1
        %s914 = scalar_select %p913, %s49, 1
        %s915 = scalar_lea.vmem %s9, %s914
        %p916 = scmp.lt.s32.totalorder %s49, 1
        %s917 = scalar_select %p916, %s49, 1
        %s918 = scalar_lea.vmem %s10, %s917
        %p919 = scmp.lt.s32.totalorder %s49, 1
        %s920 = scalar_select %p919, %s49, 1
        %s921 = scalar_lea.vmem %s11, %s920
        %p922 = scmp.lt.s32.totalorder %s49, 1
        %s923 = scalar_select %p922, %s49, 1
        %s924 = smul.addr %s923, 2
        %s925 = scalar_lea.vmem %s13, %s924
        %p926 = scmp.lt.s32.totalorder %s49, 1
        %s927 = scalar_select %p926, %s49, 1
        %s928 = scalar_lea.vmem %s15, %s927
        %p929 = scmp.lt.s32.totalorder %s49, 1
        %s930 = scalar_select %p929, %s49, 1
        %s931 = scalar_lea.vmem %s16, %s930
        %p932 = scmp.lt.s32.totalorder %s49, 1
        %s933 = scalar_select %p932, %s49, 1
        %s934 = scalar_lea.vmem %s17, %s933
        %s935 = smul.u32 2, %s48
        %p937 = scmp.eq.s32.totalorder %s49, 0
        // Predicated region
        $region117: #{tpu_custom_call.1} parent=87 // pred_check
          %p938 = pneg %p937
        $region118: #{tpu_custom_call.1} parent=87 // pred_check_branch
          %940 = sbr.rel (%p938) target = $region120
        $region119: #{tpu_custom_call.1} parent=87 // pred_region
          %v941 = vld [vmem:[#allocation5] sm:$0xf]
          %v942 = vld [vmem:[#allocation5 + $0x4] sm:$0xf]
          %v943 = vunpack.c.l.bf16 %v941
          %v944 = vunpack.c.l.bf16 %v942
          %945 = vst [vmem:[#allocation2] sm:$0xff] %v943
          %946 = vst [vmem:[#allocation2 + $0x8] sm:$0xff] %v944
        $region120: #{tpu_custom_call.1} parent=87 // pred_fallthru
          _
        %v947 = vld [vmem:[#allocation2] sm:$0xff]
        %v948 = vld [vmem:[#allocation2 + $0x8] sm:$0xff]
        %v949 = vlaneseq
        %v950 = vand.u32 %v949, 127
        %s951 = smul.u32 %s48, 2
        %s952 = sld [smem:[#allocation4 + %s951]]
        %v953 = vstv %s952
        %vm954 = vcmp.lt.s32.totalorder %v950, %v953
        %v955 = vsel %vm954, 0.0, -1000000.0
        %s956 = sadd.s32 %s951, 1
        %s957 = sld [smem:[#allocation4 + %s956]]
        %v958 = vstv %s957
        %vm959 = vcmp.lt.s32.totalorder %v950, %v958
        %v960 = vsel %vm959, 0.0, -1000000.0
        %v961 = vpack.c.bf16 %v948, %v947
        %v962 = vld [vmem:[%s756] sm:$0xf]
        %v963 = vld [vmem:[%s756 + $0x4] sm:$0xf]
        %v964 = vld [vmem:[%s756 + $0x8] sm:$0xf]
        %v965 = vld [vmem:[%s756 + $0xc] sm:$0xf]
        %v966 = vld [vmem:[%s756 + $0x10] sm:$0xf]
        %v967 = vld [vmem:[%s756 + $0x14] sm:$0xf]
        %v968 = vld [vmem:[%s756 + $0x18] sm:$0xf]
        %v969 = vld [vmem:[%s756 + $0x1c] sm:$0xf]
        %v970 = vld [vmem:[%s756 + $0x20] sm:$0xf]
        %v971 = vld [vmem:[%s756 + $0x24] sm:$0xf]
        %v972 = vld [vmem:[%s756 + $0x28] sm:$0xf]
        %v973 = vld [vmem:[%s756 + $0x2c] sm:$0xf]
        %v974 = vld [vmem:[%s756 + $0x30] sm:$0xf]
        %v975 = vld [vmem:[%s756 + $0x34] sm:$0xf]
        %v976 = vld [vmem:[%s756 + $0x38] sm:$0xf]
        %v977 = vld [vmem:[%s756 + $0x3c] sm:$0xf]
        %v978 = vld [vmem:[%s906] sm:$0x1]
        %v980 = vlaneseq
        %v981 = vshrl.u32 %v980, 7
        %v982 = vsub.s32 0, %v981
        %v983 = vrot.slane %v978, %v982
        %v1001 = vunpack.c.l.b16 %v962
        %v1002 = vunpack.c.l.b16 %v963
        %v1003 = vunpack.c.l.b16 %v964
        %v1004 = vunpack.c.l.b16 %v965
        %v1005 = vunpack.c.l.b16 %v966
        %v1006 = vunpack.c.l.b16 %v967
        %v1007 = vunpack.c.l.b16 %v968
        %v1008 = vunpack.c.l.b16 %v969
        %v1009 = vunpack.c.l.b16 %v970
        %v1010 = vunpack.c.l.b16 %v971
        %v1011 = vunpack.c.l.b16 %v972
        %v1012 = vunpack.c.l.b16 %v973
        %v1013 = vunpack.c.l.b16 %v974
        %v1014 = vunpack.c.l.b16 %v975
        %v1015 = vunpack.c.l.b16 %v976
        %v1016 = vunpack.c.l.b16 %v977
        %v1017 = vpack.c.b16 %v1002, %v1001
        %v1018 = vpack.c.b16 %v1004, %v1003
        %v1019 = vpack.c.b16 %v1006, %v1005
        %v1020 = vpack.c.b16 %v1008, %v1007
        %v1021 = vpack.c.b16 %v1010, %v1009
        %v1022 = vpack.c.b16 %v1012, %v1011
        %v1023 = vpack.c.b16 %v1014, %v1013
        %v1024 = vpack.c.b16 %v1016, %v1015
        %1033 = vmatprep.subr.bf16.mxu0 0
        %1034 = vmatpush1.bf16.msra.mxu0 %v1024
        %1035 = vmatprep.subr.bf16.mxu0 0
        %1036 = vmatpush1.bf16.msra.mxu0 %v1023
        %1037 = vmatprep.subr.bf16.mxu0 0
        %1038 = vmatpush1.bf16.msra.mxu0 %v1022
        %1039 = vmatprep.subr.bf16.mxu0 0
        %1040 = vmatpush1.bf16.msra.mxu0 %v1021
        %1041 = vmatprep.subr.bf16.mxu0 0
        %1042 = vmatpush1.bf16.msra.mxu0 %v1020
        %1043 = vmatprep.subr.bf16.mxu0 0
        %1044 = vmatpush1.bf16.msra.mxu0 %v1019
        %1045 = vmatprep.subr.bf16.mxu0 0
        %1046 = vmatpush1.bf16.msra.mxu0 %v1018
        %1047 = vmatprep.subr.bf16.mxu0 0
        %1048 = vmatpush1.bf16.msra.mxu0 %v1017
        %1049 = vmatprep.subr.bf16.mxu0 0
        %1050 = vmatpush2.bf16.msra.mxu0 0
        %1051 = vmatprep.subr.bf16.mxu0 0
        %1052 = vmatpush2.bf16.msra.mxu0 0
        %1053 = vmatprep.subr.bf16.mxu0 0
        %1054 = vmatpush2.bf16.msra.mxu0 0
        %1055 = vmatprep.subr.bf16.mxu0 0
        %1056 = vmatpush2.bf16.msra.mxu0 0
        %1057 = vmatprep.subr.bf16.mxu0 0
        %1058 = vmatpush2.bf16.msra.mxu0 0
        %1059 = vmatprep.subr.bf16.mxu0 0
        %1060 = vmatpush2.bf16.msra.mxu0 0
        %1061 = vmatprep.subr.bf16.mxu0 0
        %1062 = vmatpush2.bf16.msra.mxu0 0
        %1063 = vmatprep.subr.bf16.mxu0 0
        %1064 = vmatpush2.bf16.msra.mxu0 0
        %1065 = vmatprep.mubr.bf16.mxu0 0
        %1066 = vmatmul.mubr.bf16.gmra.mxu0 %v961
        %v1067 = vpop.f32.mrf.mxu0
        %v1068 = vadd.f32 %v983, %v1067
        %v1069 = vpop.f32.mrf.mxu0
        %v1070 = vpop.f32.mrf.mxu0
        %v1071 = vadd.f32 %v983, %v1070
        %v1072 = vpop.f32.mrf.mxu0
        %1073 = vdwg.mxu0
        %v1074 = vmul.f32 %v1068, 0.17677669
        %v1075 = vmul.f32 %v1071, 0.17677669
        %v1076 = vld [vmem:[%s765] sm:$0xf]
        %v1077 = vld [vmem:[%s765 + $0x4] sm:$0xf]
        %v1078 = vld [vmem:[%s765 + $0x8] sm:$0xf]
        %v1079 = vld [vmem:[%s765 + $0xc] sm:$0xf]
        %v1080 = vld [vmem:[%s765 + $0x10] sm:$0xf]
        %v1081 = vld [vmem:[%s765 + $0x14] sm:$0xf]
        %v1082 = vld [vmem:[%s765 + $0x18] sm:$0xf]
        %v1083 = vld [vmem:[%s765 + $0x1c] sm:$0xf]
        %v1084 = vld [vmem:[%s765 + $0x20] sm:$0xf]
        %v1085 = vld [vmem:[%s765 + $0x24] sm:$0xf]
        %v1086 = vld [vmem:[%s765 + $0x28] sm:$0xf]
        %v1087 = vld [vmem:[%s765 + $0x2c] sm:$0xf]
        %v1088 = vld [vmem:[%s765 + $0x30] sm:$0xf]
        %v1089 = vld [vmem:[%s765 + $0x34] sm:$0xf]
        %v1090 = vld [vmem:[%s765 + $0x38] sm:$0xf]
        %v1091 = vld [vmem:[%s765 + $0x3c] sm:$0xf]
        %v1092 = vld [vmem:[%s909] sm:$0x1]
        %v1094 = vlaneseq
        %v1095 = vshrl.u32 %v1094, 7
        %v1096 = vsub.s32 0, %v1095
        %v1097 = vrot.slane %v1092, %v1096
        %v1115 = vunpack.c.l.b16 %v1076
        %v1116 = vunpack.c.l.b16 %v1077
        %v1117 = vunpack.c.l.b16 %v1078
        %v1118 = vunpack.c.l.b16 %v1079
        %v1119 = vunpack.c.l.b16 %v1080
        %v1120 = vunpack.c.l.b16 %v1081
        %v1121 = vunpack.c.l.b16 %v1082
        %v1122 = vunpack.c.l.b16 %v1083
        %v1123 = vunpack.c.l.b16 %v1084
        %v1124 = vunpack.c.l.b16 %v1085
        %v1125 = vunpack.c.l.b16 %v1086
        %v1126 = vunpack.c.l.b16 %v1087
        %v1127 = vunpack.c.l.b16 %v1088
        %v1128 = vunpack.c.l.b16 %v1089
        %v1129 = vunpack.c.l.b16 %v1090
        %v1130 = vunpack.c.l.b16 %v1091
        %v1131 = vpack.c.b16 %v1116, %v1115
        %v1132 = vpack.c.b16 %v1118, %v1117
        %v1133 = vpack.c.b16 %v1120, %v1119
        %v1134 = vpack.c.b16 %v1122, %v1121
        %v1135 = vpack.c.b16 %v1124, %v1123
        %v1136 = vpack.c.b16 %v1126, %v1125
        %v1137 = vpack.c.b16 %v1128, %v1127
        %v1138 = vpack.c.b16 %v1130, %v1129
        %1147 = vmatprep.subr.bf16.mxu0 0
        %1148 = vmatpush1.bf16.msra.mxu0 %v1138
        %1149 = vmatprep.subr.bf16.mxu0 0
        %1150 = vmatpush1.bf16.msra.mxu0 %v1137
        %1151 = vmatprep.subr.bf16.mxu0 0
        %1152 = vmatpush1.bf16.msra.mxu0 %v1136
        %1153 = vmatprep.subr.bf16.mxu0 0
        %1154 = vmatpush1.bf16.msra.mxu0 %v1135
        %1155 = vmatprep.subr.bf16.mxu0 0
        %1156 = vmatpush1.bf16.msra.mxu0 %v1134
        %1157 = vmatprep.subr.bf16.mxu0 0
        %1158 = vmatpush1.bf16.msra.mxu0 %v1133
        %1159 = vmatprep.subr.bf16.mxu0 0
        %1160 = vmatpush1.bf16.msra.mxu0 %v1132
        %1161 = vmatprep.subr.bf16.mxu0 0
        %1162 = vmatpush1.bf16.msra.mxu0 %v1131
        %1163 = vmatprep.subr.bf16.mxu0 0
        %1164 = vmatpush2.bf16.msra.mxu0 0
        %1165 = vmatprep.subr.bf16.mxu0 0
        %1166 = vmatpush2.bf16.msra.mxu0 0
        %1167 = vmatprep.subr.bf16.mxu0 0
        %1168 = vmatpush2.bf16.msra.mxu0 0
        %1169 = vmatprep.subr.bf16.mxu0 0
        %1170 = vmatpush2.bf16.msra.mxu0 0
        %1171 = vmatprep.subr.bf16.mxu0 0
        %1172 = vmatpush2.bf16.msra.mxu0 0
        %1173 = vmatprep.subr.bf16.mxu0 0
        %1174 = vmatpush2.bf16.msra.mxu0 0
        %1175 = vmatprep.subr.bf16.mxu0 0
        %1176 = vmatpush2.bf16.msra.mxu0 0
        %1177 = vmatprep.subr.bf16.mxu0 0
        %1178 = vmatpush2.bf16.msra.mxu0 0
        %1179 = vmatprep.mubr.bf16.mxu0 0
        %1180 = vmatmul.mubr.bf16.gmra.mxu0 %v961
        %v1181 = vpop.f32.mrf.mxu0
        %v1182 = vadd.f32 %v1097, %v1181
        %v1183 = vpop.f32.mrf.mxu0
        %v1184 = vpop.f32.mrf.mxu0
        %v1185 = vadd.f32 %v1097, %v1184
        %v1186 = vpop.f32.mrf.mxu0
        %1187 = vdwg.mxu0
        %v1188 = vld [vmem:[%s774] sm:$0xf]
        %v1189 = vld [vmem:[%s774 + $0x4] sm:$0xf]
        %v1190 = vld [vmem:[%s774 + $0x8] sm:$0xf]
        %v1191 = vld [vmem:[%s774 + $0xc] sm:$0xf]
        %v1192 = vld [vmem:[%s774 + $0x10] sm:$0xf]
        %v1193 = vld [vmem:[%s774 + $0x14] sm:$0xf]
        %v1194 = vld [vmem:[%s774 + $0x18] sm:$0xf]
        %v1195 = vld [vmem:[%s774 + $0x1c] sm:$0xf]
        %v1196 = vld [vmem:[%s774 + $0x20] sm:$0xf]
        %v1197 = vld [vmem:[%s774 + $0x24] sm:$0xf]
        %v1198 = vld [vmem:[%s774 + $0x28] sm:$0xf]
        %v1199 = vld [vmem:[%s774 + $0x2c] sm:$0xf]
        %v1200 = vld [vmem:[%s774 + $0x30] sm:$0xf]
        %v1201 = vld [vmem:[%s774 + $0x34] sm:$0xf]
        %v1202 = vld [vmem:[%s774 + $0x38] sm:$0xf]
        %v1203 = vld [vmem:[%s774 + $0x3c] sm:$0xf]
        %v1204 = vld [vmem:[%s912] sm:$0x1]
        %v1206 = vlaneseq
        %v1207 = vshrl.u32 %v1206, 7
        %v1208 = vsub.s32 0, %v1207
        %v1209 = vrot.slane %v1204, %v1208
        %v1227 = vunpack.c.l.b16 %v1188
        %v1228 = vunpack.c.l.b16 %v1189
        %v1229 = vunpack.c.l.b16 %v1190
        %v1230 = vunpack.c.l.b16 %v1191
        %v1231 = vunpack.c.l.b16 %v1192
        %v1232 = vunpack.c.l.b16 %v1193
        %v1233 = vunpack.c.l.b16 %v1194
        %v1234 = vunpack.c.l.b16 %v1195
        %v1235 = vunpack.c.l.b16 %v1196
        %v1236 = vunpack.c.l.b16 %v1197
        %v1237 = vunpack.c.l.b16 %v1198
        %v1238 = vunpack.c.l.b16 %v1199
        %v1239 = vunpack.c.l.b16 %v1200
        %v1240 = vunpack.c.l.b16 %v1201
        %v1241 = vunpack.c.l.b16 %v1202
        %v1242 = vunpack.c.l.b16 %v1203
        %v1243 = vpack.c.b16 %v1228, %v1227
        %v1244 = vpack.c.b16 %v1230, %v1229
        %v1245 = vpack.c.b16 %v1232, %v1231
        %v1246 = vpack.c.b16 %v1234, %v1233
        %v1247 = vpack.c.b16 %v1236, %v1235
        %v1248 = vpack.c.b16 %v1238, %v1237
        %v1249 = vpack.c.b16 %v1240, %v1239
        %v1250 = vpack.c.b16 %v1242, %v1241
        %1259 = vmatprep.subr.bf16.mxu0 0
        %1260 = vmatpush1.bf16.msra.mxu0 %v1250
        %1261 = vmatprep.subr.bf16.mxu0 0
        %1262 = vmatpush1.bf16.msra.mxu0 %v1249
        %1263 = vmatprep.subr.bf16.mxu0 0
        %1264 = vmatpush1.bf16.msra.mxu0 %v1248
        %1265 = vmatprep.subr.bf16.mxu0 0
        %1266 = vmatpush1.bf16.msra.mxu0 %v1247
        %1267 = vmatprep.subr.bf16.mxu0 0
        %1268 = vmatpush1.bf16.msra.mxu0 %v1246
        %1269 = vmatprep.subr.bf16.mxu0 0
        %1270 = vmatpush1.bf16.msra.mxu0 %v1245
        %1271 = vmatprep.subr.bf16.mxu0 0
        %1272 = vmatpush1.bf16.msra.mxu0 %v1244
        %1273 = vmatprep.subr.bf16.mxu0 0
        %1274 = vmatpush1.bf16.msra.mxu0 %v1243
        %1275 = vmatprep.subr.bf16.mxu0 0
        %1276 = vmatpush2.bf16.msra.mxu0 0
        %1277 = vmatprep.subr.bf16.mxu0 0
        %1278 = vmatpush2.bf16.msra.mxu0 0
        %1279 = vmatprep.subr.bf16.mxu0 0
        %1280 = vmatpush2.bf16.msra.mxu0 0
        %1281 = vmatprep.subr.bf16.mxu0 0
        %1282 = vmatpush2.bf16.msra.mxu0 0
        %1283 = vmatprep.subr.bf16.mxu0 0
        %1284 = vmatpush2.bf16.msra.mxu0 0
        %1285 = vmatprep.subr.bf16.mxu0 0
        %1286 = vmatpush2.bf16.msra.mxu0 0
        %1287 = vmatprep.subr.bf16.mxu0 0
        %1288 = vmatpush2.bf16.msra.mxu0 0
        %1289 = vmatprep.subr.bf16.mxu0 0
        %1290 = vmatpush2.bf16.msra.mxu0 0
        %1291 = vmatprep.mubr.bf16.mxu0 0
        %1292 = vmatmul.mubr.bf16.gmra.mxu0 %v961
        %v1293 = vpop.f32.mrf.mxu0
        %v1294 = vadd.f32 %v1209, %v1293
        %v1295 = vpop.f32.mrf.mxu0
        %v1296 = vpop.f32.mrf.mxu0
        %v1297 = vadd.f32 %v1209, %v1296
        %v1298 = vpop.f32.mrf.mxu0
        %1299 = vdwg.mxu0
        %v1300 = vpack.c.bf16 %v1074, %v1074
        %v1301 = vpack.c.bf16 %v1075, %v1075
        %v1302 = vpack.c.bf16 %v1182, %v1182
        %v1303 = vpack.c.bf16 %v1185, %v1185
        %v1304 = vpack.c.bf16 %v1294, %v1294
        %v1305 = vpack.c.bf16 %v1297, %v1297
        %v1306 = vlaneseq
        %v1307 = vshrl.u32 %v1306, 7
        %v1308 = vsub.s32 0, %v1307
        %v1309 = vrot.slane %v955, %v1308
        %v1310 = vlaneseq
        %v1311 = vshrl.u32 %v1310, 7
        %v1312 = vsub.s32 0, %v1311
        %v1313 = vrot.slane %v960, %v1312
        %vm1314 = vcmask 261120
        %v1316 = vsel %vm1314, %v1300, 0
        %v1319 = vsel %vm1314, %v1302, 0
        %1321 = vmatprep.subr.bf16.mxu0 0
        %1322 = vmatpush1.bf16.xpose.msra.mxu0 0
        %1323 = vmatprep.subr.bf16.mxu0 0
        %1324 = vmatpush1.bf16.xpose.msra.mxu0 0
        %1325 = vmatprep.subr.bf16.mxu0 0
        %1326 = vmatpush1.bf16.xpose.msra.mxu0 0
        %1327 = vmatprep.subr.bf16.mxu0 0
        %1328 = vmatpush1.bf16.xpose.msra.mxu0 0
        %1329 = vmatprep.subr.bf16.mxu0 0
        %1330 = vmatpush1.bf16.xpose.msra.mxu0 0
        %1331 = vmatprep.subr.bf16.mxu0 0
        %1332 = vmatpush1.bf16.xpose.msra.mxu0 0
        %1333 = vmatprep.subr.bf16.mxu0 0
        %1334 = vmatpush1.bf16.xpose.msra.mxu0 0
        %1335 = vmatprep.subr.bf16.mxu0 0
        %1336 = vmatpush1.bf16.xpose.msra.mxu0 %v1319
        %1337 = vmatprep.subr.bf16.mxu0 0
        %1338 = vmatpush2.bf16.xpose.msra.mxu0 0
        %1339 = vmatprep.subr.bf16.mxu0 0
        %1340 = vmatpush2.bf16.xpose.msra.mxu0 0
        %1341 = vmatprep.subr.bf16.mxu0 0
        %1342 = vmatpush2.bf16.xpose.msra.mxu0 0
        %1343 = vmatprep.subr.bf16.mxu0 0
        %1344 = vmatpush2.bf16.xpose.msra.mxu0 0
        %1345 = vmatprep.subr.bf16.mxu0 0
        %1346 = vmatpush2.bf16.xpose.msra.mxu0 0
        %1347 = vmatprep.subr.bf16.mxu0 0
        %1348 = vmatpush2.bf16.xpose.msra.mxu0 0
        %1349 = vmatprep.subr.bf16.mxu0 0
        %1350 = vmatpush2.bf16.xpose.msra.mxu0 0
        %1351 = vmatprep.subr.bf16.mxu0 0
        %1352 = vmatpush2.bf16.xpose.msra.mxu0 0
        %1353 = vmatprep.mubr.bf16.mxu0 0
        %1354 = vmatmul.mubr.bf16.gmra.mxu0 %v1316
        %v1355 = vpop.f32.mrf.mxu0
        %v1356 = vadd.f32 %v1309, %v1355
        %v1357 = vpop.f32.mrf.mxu0
        %v1358 = vpop.f32.mrf.mxu0
        %v1359 = vpop.f32.mrf.mxu0
        %1360 = vdwg.mxu0
        %v1362 = vsel %vm1314, %v1301, 0
        %v1365 = vsel %vm1314, %v1303, 0
        %1367 = vmatprep.subr.bf16.mxu0 0
        %1368 = vmatpush1.bf16.xpose.msra.mxu0 0
        %1369 = vmatprep.subr.bf16.mxu0 0
        %1370 = vmatpush1.bf16.xpose.msra.mxu0 0
        %1371 = vmatprep.subr.bf16.mxu0 0
        %1372 = vmatpush1.bf16.xpose.msra.mxu0 0
        %1373 = vmatprep.subr.bf16.mxu0 0
        %1374 = vmatpush1.bf16.xpose.msra.mxu0 0
        %1375 = vmatprep.subr.bf16.mxu0 0
        %1376 = vmatpush1.bf16.xpose.msra.mxu0 0
        %1377 = vmatprep.subr.bf16.mxu0 0
        %1378 = vmatpush1.bf16.xpose.msra.mxu0 0
        %1379 = vmatprep.subr.bf16.mxu0 0
        %1380 = vmatpush1.bf16.xpose.msra.mxu0 0
        %1381 = vmatprep.subr.bf16.mxu0 0
        %1382 = vmatpush1.bf16.xpose.msra.mxu0 %v1365
        %1383 = vmatprep.subr.bf16.mxu0 0
        %1384 = vmatpush2.bf16.xpose.msra.mxu0 0
        %1385 = vmatprep.subr.bf16.mxu0 0
        %1386 = vmatpush2.bf16.xpose.msra.mxu0 0
        %1387 = vmatprep.subr.bf16.mxu0 0
        %1388 = vmatpush2.bf16.xpose.msra.mxu0 0
        %1389 = vmatprep.subr.bf16.mxu0 0
        %1390 = vmatpush2.bf16.xpose.msra.mxu0 0
        %1391 = vmatprep.subr.bf16.mxu0 0
        %1392 = vmatpush2.bf16.xpose.msra.mxu0 0
        %1393 = vmatprep.subr.bf16.mxu0 0
        %1394 = vmatpush2.bf16.xpose.msra.mxu0 0
        %1395 = vmatprep.subr.bf16.mxu0 0
        %1396 = vmatpush2.bf16.xpose.msra.mxu0 0
        %1397 = vmatprep.subr.bf16.mxu0 0
        %1398 = vmatpush2.bf16.xpose.msra.mxu0 0
        %1399 = vmatprep.mubr.bf16.mxu0 0
        %1400 = vmatmul.mubr.bf16.gmra.mxu0 %v1362
        %v1401 = vpop.f32.mrf.mxu0
        %v1402 = vadd.f32 %v1313, %v1401
        %v1403 = vpop.f32.mrf.mxu0
        %v1404 = vpop.f32.mrf.mxu0
        %v1405 = vpop.f32.mrf.mxu0
        %1406 = vdwg.mxu0
        %vm1407 = vcmask 64512
        %v1408 = vsel %vm1407, %v1356, -inf
        %1409 = vmax.xlane.f32.xlu0 %v1408
        %v1410 = vpop.xlane.xlu0 %1409
        %v1411 = vsel %vm1407, %v1402, -inf
        %1412 = vmax.xlane.f32.xlu0 %v1411
        %v1413 = vpop.xlane.xlu0 %1412
        %v1414 = vsub.f32 %v1356, %v1410
        %v1415 = vsub.f32 %v1402, %v1413
        %v1416 = vmul.f32 %v1414, 1.442695
        %v1417 = vpow.pop %v1416
        %v1418 = vmul.f32 %v1415, 1.442695
        %v1419 = vpow.pop %v1418
        %v1420 = vsel %vm1407, %v1417, 0.0
        %1421 = vadd.xlane.f32.xlu0 %v1420
        %v1422 = vpop.xlane.xlu0 %1421
        %v1423 = vsel %vm1407, %v1419, 0.0
        %1424 = vadd.xlane.f32.xlu0 %v1423
        %v1425 = vpop.xlane.xlu0 %1424
        %v1426 = vrcp.pop %v1422
        %v1427 = vrcp.pop %v1425
        %v1428 = vmul.f32 %v1417, %v1426
        %v1429 = vmul.f32 %v1419, %v1427
        %v1430 = vpack.c.bf16 %v1428, %v1428
        %v1431 = vpack.c.bf16 %v1429, %v1429
        %v1433 = vsel %vm1407, %v1430, 0
        %vm1435 = vcmask 1043456
        %v1437 = vsel %vm1435, %v1304, 0
        %1439 = vmatprep.subr.bf16.mxu0 0
        %1440 = vmatpush1.bf16.msra.mxu0 0
        %1441 = vmatprep.subr.bf16.mxu0 0
        %1442 = vmatpush1.bf16.msra.mxu0 0
        %1443 = vmatprep.subr.bf16.mxu0 0
        %1444 = vmatpush1.bf16.msra.mxu0 0
        %1445 = vmatprep.subr.bf16.mxu0 0
        %1446 = vmatpush1.bf16.msra.mxu0 0
        %1447 = vmatprep.subr.bf16.mxu0 0
        %1448 = vmatpush1.bf16.msra.mxu0 0
        %1449 = vmatprep.subr.bf16.mxu0 0
        %1450 = vmatpush1.bf16.msra.mxu0 0
        %1451 = vmatprep.subr.bf16.mxu0 0
        %1452 = vmatpush1.bf16.msra.mxu0 0
        %1453 = vmatprep.subr.bf16.mxu0 0
        %1454 = vmatpush1.bf16.msra.mxu0 %v1437
        %1455 = vmatprep.subr.bf16.mxu0 0
        %1456 = vmatpush2.bf16.msra.mxu0 0
        %1457 = vmatprep.subr.bf16.mxu0 0
        %1458 = vmatpush2.bf16.msra.mxu0 0
        %1459 = vmatprep.subr.bf16.mxu0 0
        %1460 = vmatpush2.bf16.msra.mxu0 0
        %1461 = vmatprep.subr.bf16.mxu0 0
        %1462 = vmatpush2.bf16.msra.mxu0 0
        %1463 = vmatprep.subr.bf16.mxu0 0
        %1464 = vmatpush2.bf16.msra.mxu0 0
        %1465 = vmatprep.subr.bf16.mxu0 0
        %1466 = vmatpush2.bf16.msra.mxu0 0
        %1467 = vmatprep.subr.bf16.mxu0 0
        %1468 = vmatpush2.bf16.msra.mxu0 0
        %1469 = vmatprep.subr.bf16.mxu0 0
        %1470 = vmatpush2.bf16.msra.mxu0 0
        %1471 = vmatprep.mubr.bf16.mxu0 0
        %1472 = vmatmul.mubr.bf16.gmra.mxu0 %v1433
        %v1473 = vpop.f32.mrf.mxu0
        %v1474 = vadd.f32 0.0, %v1473
        %v1475 = vpop.f32.mrf.mxu0
        %v1476 = vpop.f32.mrf.mxu0
        %v1477 = vpop.f32.mrf.mxu0
        %1478 = vdwg.mxu0
        %v1480 = vsel %vm1407, %v1431, 0
        %v1483 = vsel %vm1435, %v1305, 0
        %1485 = vmatprep.subr.bf16.mxu0 0
        %1486 = vmatpush1.bf16.msra.mxu0 0
        %1487 = vmatprep.subr.bf16.mxu0 0
        %1488 = vmatpush1.bf16.msra.mxu0 0
        %1489 = vmatprep.subr.bf16.mxu0 0
        %1490 = vmatpush1.bf16.msra.mxu0 0
        %1491 = vmatprep.subr.bf16.mxu0 0
        %1492 = vmatpush1.bf16.msra.mxu0 0
        %1493 = vmatprep.subr.bf16.mxu0 0
        %1494 = vmatpush1.bf16.msra.mxu0 0
        %1495 = vmatprep.subr.bf16.mxu0 0
        %1496 = vmatpush1.bf16.msra.mxu0 0
        %1497 = vmatprep.subr.bf16.mxu0 0
        %1498 = vmatpush1.bf16.msra.mxu0 0
        %1499 = vmatprep.subr.bf16.mxu0 0
        %1500 = vmatpush1.bf16.msra.mxu0 %v1483
        %1501 = vmatprep.subr.bf16.mxu0 0
        %1502 = vmatpush2.bf16.msra.mxu0 0
        %1503 = vmatprep.subr.bf16.mxu0 0
        %1504 = vmatpush2.bf16.msra.mxu0 0
        %1505 = vmatprep.subr.bf16.mxu0 0
        %1506 = vmatpush2.bf16.msra.mxu0 0
        %1507 = vmatprep.subr.bf16.mxu0 0
        %1508 = vmatpush2.bf16.msra.mxu0 0
        %1509 = vmatprep.subr.bf16.mxu0 0
        %1510 = vmatpush2.bf16.msra.mxu0 0
        %1511 = vmatprep.subr.bf16.mxu0 0
        %1512 = vmatpush2.bf16.msra.mxu0 0
        %1513 = vmatprep.subr.bf16.mxu0 0
        %1514 = vmatpush2.bf16.msra.mxu0 0
        %1515 = vmatprep.subr.bf16.mxu0 0
        %1516 = vmatpush2.bf16.msra.mxu0 0
        %1517 = vmatprep.mubr.bf16.mxu0 0
        %1518 = vmatmul.mubr.bf16.gmra.mxu0 %v1480
        %v1519 = vpop.f32.mrf.mxu0
        %v1520 = vadd.f32 0.0, %v1519
        %v1521 = vpop.f32.mrf.mxu0
        %v1522 = vpop.f32.mrf.mxu0
        %v1523 = vpop.f32.mrf.mxu0
        %1524 = vdwg.mxu0
        %1526 = vrot.lane.b32.xlu0 %v1300, 96
        %v1527 = vpop.permute.xlu0 %1526
        %1529 = vrot.lane.b32.xlu0 %v1302, 96
        %v1530 = vpop.permute.xlu0 %1529
        %v1532 = vsel %vm1314, %v1527, 0
        %v1535 = vsel %vm1314, %v1530, 0
        %1537 = vmatprep.subr.bf16.mxu0 0
        %1538 = vmatpush1.bf16.xpose.msra.mxu0 0
        %1539 = vmatprep.subr.bf16.mxu0 0
        %1540 = vmatpush1.bf16.xpose.msra.mxu0 0
        %1541 = vmatprep.subr.bf16.mxu0 0
        %1542 = vmatpush1.bf16.xpose.msra.mxu0 0
        %1543 = vmatprep.subr.bf16.mxu0 0
        %1544 = vmatpush1.bf16.xpose.msra.mxu0 0
        %1545 = vmatprep.subr.bf16.mxu0 0
        %1546 = vmatpush1.bf16.xpose.msra.mxu0 0
        %1547 = vmatprep.subr.bf16.mxu0 0
        %1548 = vmatpush1.bf16.xpose.msra.mxu0 0
        %1549 = vmatprep.subr.bf16.mxu0 0
        %1550 = vmatpush1.bf16.xpose.msra.mxu0 0
        %1551 = vmatprep.subr.bf16.mxu0 0
        %1552 = vmatpush1.bf16.xpose.msra.mxu0 %v1535
        %1553 = vmatprep.subr.bf16.mxu0 0
        %1554 = vmatpush2.bf16.xpose.msra.mxu0 0
        %1555 = vmatprep.subr.bf16.mxu0 0
        %1556 = vmatpush2.bf16.xpose.msra.mxu0 0
        %1557 = vmatprep.subr.bf16.mxu0 0
        %1558 = vmatpush2.bf16.xpose.msra.mxu0 0
        %1559 = vmatprep.subr.bf16.mxu0 0
        %1560 = vmatpush2.bf16.xpose.msra.mxu0 0
        %1561 = vmatprep.subr.bf16.mxu0 0
        %1562 = vmatpush2.bf16.xpose.msra.mxu0 0
        %1563 = vmatprep.subr.bf16.mxu0 0
        %1564 = vmatpush2.bf16.xpose.msra.mxu0 0
        %1565 = vmatprep.subr.bf16.mxu0 0
        %1566 = vmatpush2.bf16.xpose.msra.mxu0 0
        %1567 = vmatprep.subr.bf16.mxu0 0
        %1568 = vmatpush2.bf16.xpose.msra.mxu0 0
        %1569 = vmatprep.mubr.bf16.mxu0 0
        %1570 = vmatmul.mubr.bf16.gmra.mxu0 %v1532
        %v1571 = vpop.f32.mrf.mxu0
        %v1572 = vadd.f32 %v1309, %v1571
        %v1573 = vpop.f32.mrf.mxu0
        %v1574 = vpop.f32.mrf.mxu0
        %v1575 = vpop.f32.mrf.mxu0
        %1576 = vdwg.mxu0
        %1578 = vrot.lane.b32.xlu0 %v1301, 96
        %v1579 = vpop.permute.xlu0 %1578
        %1581 = vrot.lane.b32.xlu0 %v1303, 96
        %v1582 = vpop.permute.xlu0 %1581
        %v1584 = vsel %vm1314, %v1579, 0
        %v1587 = vsel %vm1314, %v1582, 0
        %1589 = vmatprep.subr.bf16.mxu0 0
        %1590 = vmatpush1.bf16.xpose.msra.mxu0 0
        %1591 = vmatprep.subr.bf16.mxu0 0
        %1592 = vmatpush1.bf16.xpose.msra.mxu0 0
        %1593 = vmatprep.subr.bf16.mxu0 0
        %1594 = vmatpush1.bf16.xpose.msra.mxu0 0
        %1595 = vmatprep.subr.bf16.mxu0 0
        %1596 = vmatpush1.bf16.xpose.msra.mxu0 0
        %1597 = vmatprep.subr.bf16.mxu0 0
        %1598 = vmatpush1.bf16.xpose.msra.mxu0 0
        %1599 = vmatprep.subr.bf16.mxu0 0
        %1600 = vmatpush1.bf16.xpose.msra.mxu0 0
        %1601 = vmatprep.subr.bf16.mxu0 0
        %1602 = vmatpush1.bf16.xpose.msra.mxu0 0
        %1603 = vmatprep.subr.bf16.mxu0 0
        %1604 = vmatpush1.bf16.xpose.msra.mxu0 %v1587
        %1605 = vmatprep.subr.bf16.mxu0 0
        %1606 = vmatpush2.bf16.xpose.msra.mxu0 0
        %1607 = vmatprep.subr.bf16.mxu0 0
        %1608 = vmatpush2.bf16.xpose.msra.mxu0 0
        %1609 = vmatprep.subr.bf16.mxu0 0
        %1610 = vmatpush2.bf16.xpose.msra.mxu0 0
        %1611 = vmatprep.subr.bf16.mxu0 0
        %1612 = vmatpush2.bf16.xpose.msra.mxu0 0
        %1613 = vmatprep.subr.bf16.mxu0 0
        %1614 = vmatpush2.bf16.xpose.msra.mxu0 0
        %1615 = vmatprep.subr.bf16.mxu0 0
        %1616 = vmatpush2.bf16.xpose.msra.mxu0 0
        %1617 = vmatprep.subr.bf16.mxu0 0
        %1618 = vmatpush2.bf16.xpose.msra.mxu0 0
        %1619 = vmatprep.subr.bf16.mxu0 0
        %1620 = vmatpush2.bf16.xpose.msra.mxu0 0
        %1621 = vmatprep.mubr.bf16.mxu0 0
        %1622 = vmatmul.mubr.bf16.gmra.mxu0 %v1584
        %v1623 = vpop.f32.mrf.mxu0
        %v1624 = vadd.f32 %v1313, %v1623
        %v1625 = vpop.f32.mrf.mxu0
        %v1626 = vpop.f32.mrf.mxu0
        %v1627 = vpop.f32.mrf.mxu0
        %1628 = vdwg.mxu0
        %v1629 = vsel %vm1407, %v1572, -inf
        %1630 = vmax.xlane.f32.xlu0 %v1629
        %v1631 = vpop.xlane.xlu0 %1630
        %v1632 = vsel %vm1407, %v1624, -inf
        %1633 = vmax.xlane.f32.xlu0 %v1632
        %v1634 = vpop.xlane.xlu0 %1633
        %v1635 = vsub.f32 %v1572, %v1631
        %v1636 = vsub.f32 %v1624, %v1634
        %v1637 = vmul.f32 %v1635, 1.442695
        %v1638 = vpow.pop %v1637
        %v1639 = vmul.f32 %v1636, 1.442695
        %v1640 = vpow.pop %v1639
        %v1641 = vsel %vm1407, %v1638, 0.0
        %1642 = vadd.xlane.f32.xlu0 %v1641
        %v1643 = vpop.xlane.xlu0 %1642
        %v1644 = vsel %vm1407, %v1640, 0.0
        %1645 = vadd.xlane.f32.xlu0 %v1644
        %v1646 = vpop.xlane.xlu0 %1645
        %v1647 = vrcp.pop %v1643
        %v1648 = vrcp.pop %v1646
        %v1649 = vmul.f32 %v1638, %v1647
        %v1650 = vmul.f32 %v1640, %v1648
        %v1651 = vpack.c.bf16 %v1649, %v1649
        %v1652 = vpack.c.bf16 %v1650, %v1650
        %1654 = vrot.lane.b32.xlu0 %v1304, 96
        %v1655 = vpop.permute.xlu0 %1654
        %v1657 = vsel %vm1407, %v1651, 0
        %v1660 = vsel %vm1435, %v1655, 0
        %1662 = vmatprep.subr.bf16.mxu0 0
        %1663 = vmatpush1.bf16.msra.mxu0 0
        %1664 = vmatprep.subr.bf16.mxu0 0
        %1665 = vmatpush1.bf16.msra.mxu0 0
        %1666 = vmatprep.subr.bf16.mxu0 0
        %1667 = vmatpush1.bf16.msra.mxu0 0
        %1668 = vmatprep.subr.bf16.mxu0 0
        %1669 = vmatpush1.bf16.msra.mxu0 0
        %1670 = vmatprep.subr.bf16.mxu0 0
        %1671 = vmatpush1.bf16.msra.mxu0 0
        %1672 = vmatprep.subr.bf16.mxu0 0
        %1673 = vmatpush1.bf16.msra.mxu0 0
        %1674 = vmatprep.subr.bf16.mxu0 0
        %1675 = vmatpush1.bf16.msra.mxu0 0
        %1676 = vmatprep.subr.bf16.mxu0 0
        %1677 = vmatpush1.bf16.msra.mxu0 %v1660
        %1678 = vmatprep.subr.bf16.mxu0 0
        %1679 = vmatpush2.bf16.msra.mxu0 0
        %1680 = vmatprep.subr.bf16.mxu0 0
        %1681 = vmatpush2.bf16.msra.mxu0 0
        %1682 = vmatprep.subr.bf16.mxu0 0
        %1683 = vmatpush2.bf16.msra.mxu0 0
        %1684 = vmatprep.subr.bf16.mxu0 0
        %1685 = vmatpush2.bf16.msra.mxu0 0
        %1686 = vmatprep.subr.bf16.mxu0 0
        %1687 = vmatpush2.bf16.msra.mxu0 0
        %1688 = vmatprep.subr.bf16.mxu0 0
        %1689 = vmatpush2.bf16.msra.mxu0 0
        %1690 = vmatprep.subr.bf16.mxu0 0
        %1691 = vmatpush2.bf16.msra.mxu0 0
        %1692 = vmatprep.subr.bf16.mxu0 0
        %1693 = vmatpush2.bf16.msra.mxu0 0
        %1694 = vmatprep.mubr.bf16.mxu0 0
        %1695 = vmatmul.mubr.bf16.gmra.mxu0 %v1657
        %v1696 = vpop.f32.mrf.mxu0
        %v1697 = vadd.f32 0.0, %v1696
        %v1698 = vpop.f32.mrf.mxu0
        %v1699 = vpop.f32.mrf.mxu0
        %v1700 = vpop.f32.mrf.mxu0
        %1701 = vdwg.mxu0
        %1703 = vrot.lane.b32.xlu0 %v1305, 96
        %v1704 = vpop.permute.xlu0 %1703
        %v1706 = vsel %vm1407, %v1652, 0
        %v1709 = vsel %vm1435, %v1704, 0
        %1711 = vmatprep.subr.bf16.mxu0 0
        %1712 = vmatpush1.bf16.msra.mxu0 0
        %1713 = vmatprep.subr.bf16.mxu0 0
        %1714 = vmatpush1.bf16.msra.mxu0 0
        %1715 = vmatprep.subr.bf16.mxu0 0
        %1716 = vmatpush1.bf16.msra.mxu0 0
        %1717 = vmatprep.subr.bf16.mxu0 0
        %1718 = vmatpush1.bf16.msra.mxu0 0
        %1719 = vmatprep.subr.bf16.mxu0 0
        %1720 = vmatpush1.bf16.msra.mxu0 0
        %1721 = vmatprep.subr.bf16.mxu0 0
        %1722 = vmatpush1.bf16.msra.mxu0 0
        %1723 = vmatprep.subr.bf16.mxu0 0
        %1724 = vmatpush1.bf16.msra.mxu0 0
        %1725 = vmatprep.subr.bf16.mxu0 0
        %1726 = vmatpush1.bf16.msra.mxu0 %v1709
        %1727 = vmatprep.subr.bf16.mxu0 0
        %1728 = vmatpush2.bf16.msra.mxu0 0
        %1729 = vmatprep.subr.bf16.mxu0 0
        %1730 = vmatpush2.bf16.msra.mxu0 0
        %1731 = vmatprep.subr.bf16.mxu0 0
        %1732 = vmatpush2.bf16.msra.mxu0 0
        %1733 = vmatprep.subr.bf16.mxu0 0
        %1734 = vmatpush2.bf16.msra.mxu0 0
        %1735 = vmatprep.subr.bf16.mxu0 0
        %1736 = vmatpush2.bf16.msra.mxu0 0
        %1737 = vmatprep.subr.bf16.mxu0 0
        %1738 = vmatpush2.bf16.msra.mxu0 0
        %1739 = vmatprep.subr.bf16.mxu0 0
        %1740 = vmatpush2.bf16.msra.mxu0 0
        %1741 = vmatprep.subr.bf16.mxu0 0
        %1742 = vmatpush2.bf16.msra.mxu0 0
        %1743 = vmatprep.mubr.bf16.mxu0 0
        %1744 = vmatmul.mubr.bf16.gmra.mxu0 %v1706
        %v1745 = vpop.f32.mrf.mxu0
        %v1746 = vadd.f32 0.0, %v1745
        %v1747 = vpop.f32.mrf.mxu0
        %v1748 = vpop.f32.mrf.mxu0
        %v1749 = vpop.f32.mrf.mxu0
        %1750 = vdwg.mxu0
        %1751 = vrot.lane.b32.xlu0 %v1300, 64
        %v1752 = vpop.permute.xlu0 %1751
        %1753 = vrot.lane.b32.xlu0 %v1302, 64
        %v1754 = vpop.permute.xlu0 %1753
        %v1756 = vsel %vm1314, %v1752, 0
        %v1759 = vsel %vm1314, %v1754, 0
        %1761 = vmatprep.subr.bf16.mxu0 0
        %1762 = vmatpush1.bf16.xpose.msra.mxu0 0
        %1763 = vmatprep.subr.bf16.mxu0 0
        %1764 = vmatpush1.bf16.xpose.msra.mxu0 0
        %1765 = vmatprep.subr.bf16.mxu0 0
        %1766 = vmatpush1.bf16.xpose.msra.mxu0 0
        %1767 = vmatprep.subr.bf16.mxu0 0
        %1768 = vmatpush1.bf16.xpose.msra.mxu0 0
        %1769 = vmatprep.subr.bf16.mxu0 0
        %1770 = vmatpush1.bf16.xpose.msra.mxu0 0
        %1771 = vmatprep.subr.bf16.mxu0 0
        %1772 = vmatpush1.bf16.xpose.msra.mxu0 0
        %1773 = vmatprep.subr.bf16.mxu0 0
        %1774 = vmatpush1.bf16.xpose.msra.mxu0 0
        %1775 = vmatprep.subr.bf16.mxu0 0
        %1776 = vmatpush1.bf16.xpose.msra.mxu0 %v1759
        %1777 = vmatprep.subr.bf16.mxu0 0
        %1778 = vmatpush2.bf16.xpose.msra.mxu0 0
        %1779 = vmatprep.subr.bf16.mxu0 0
        %1780 = vmatpush2.bf16.xpose.msra.mxu0 0
        %1781 = vmatprep.subr.bf16.mxu0 0
        %1782 = vmatpush2.bf16.xpose.msra.mxu0 0
        %1783 = vmatprep.subr.bf16.mxu0 0
        %1784 = vmatpush2.bf16.xpose.msra.mxu0 0
        %1785 = vmatprep.subr.bf16.mxu0 0
        %1786 = vmatpush2.bf16.xpose.msra.mxu0 0
        %1787 = vmatprep.subr.bf16.mxu0 0
        %1788 = vmatpush2.bf16.xpose.msra.mxu0 0
        %1789 = vmatprep.subr.bf16.mxu0 0
        %1790 = vmatpush2.bf16.xpose.msra.mxu0 0
        %1791 = vmatprep.subr.bf16.mxu0 0
        %1792 = vmatpush2.bf16.xpose.msra.mxu0 0
        %1793 = vmatprep.mubr.bf16.mxu0 0
        %1794 = vmatmul.mubr.bf16.gmra.mxu0 %v1756
        %v1795 = vpop.f32.mrf.mxu0
        %v1796 = vadd.f32 %v1309, %v1795
        %v1797 = vpop.f32.mrf.mxu0
        %v1798 = vpop.f32.mrf.mxu0
        %v1799 = vpop.f32.mrf.mxu0
        %1800 = vdwg.mxu0
        %1801 = vrot.lane.b32.xlu0 %v1301, 64
        %v1802 = vpop.permute.xlu0 %1801
        %1803 = vrot.lane.b32.xlu0 %v1303, 64
        %v1804 = vpop.permute.xlu0 %1803
        %v1806 = vsel %vm1314, %v1802, 0
        %v1809 = vsel %vm1314, %v1804, 0
        %1811 = vmatprep.subr.bf16.mxu0 0
        %1812 = vmatpush1.bf16.xpose.msra.mxu0 0
        %1813 = vmatprep.subr.bf16.mxu0 0
        %1814 = vmatpush1.bf16.xpose.msra.mxu0 0
        %1815 = vmatprep.subr.bf16.mxu0 0
        %1816 = vmatpush1.bf16.xpose.msra.mxu0 0
        %1817 = vmatprep.subr.bf16.mxu0 0
        %1818 = vmatpush1.bf16.xpose.msra.mxu0 0
        %1819 = vmatprep.subr.bf16.mxu0 0
        %1820 = vmatpush1.bf16.xpose.msra.mxu0 0
        %1821 = vmatprep.subr.bf16.mxu0 0
        %1822 = vmatpush1.bf16.xpose.msra.mxu0 0
        %1823 = vmatprep.subr.bf16.mxu0 0
        %1824 = vmatpush1.bf16.xpose.msra.mxu0 0
        %1825 = vmatprep.subr.bf16.mxu0 0
        %1826 = vmatpush1.bf16.xpose.msra.mxu0 %v1809
        %1827 = vmatprep.subr.bf16.mxu0 0
        %1828 = vmatpush2.bf16.xpose.msra.mxu0 0
        %1829 = vmatprep.subr.bf16.mxu0 0
        %1830 = vmatpush2.bf16.xpose.msra.mxu0 0
        %1831 = vmatprep.subr.bf16.mxu0 0
        %1832 = vmatpush2.bf16.xpose.msra.mxu0 0
        %1833 = vmatprep.subr.bf16.mxu0 0
        %1834 = vmatpush2.bf16.xpose.msra.mxu0 0
        %1835 = vmatprep.subr.bf16.mxu0 0
        %1836 = vmatpush2.bf16.xpose.msra.mxu0 0
        %1837 = vmatprep.subr.bf16.mxu0 0
        %1838 = vmatpush2.bf16.xpose.msra.mxu0 0
        %1839 = vmatprep.subr.bf16.mxu0 0
        %1840 = vmatpush2.bf16.xpose.msra.mxu0 0
        %1841 = vmatprep.subr.bf16.mxu0 0
        %1842 = vmatpush2.bf16.xpose.msra.mxu0 0
        %1843 = vmatprep.mubr.bf16.mxu0 0
        %1844 = vmatmul.mubr.bf16.gmra.mxu0 %v1806
        %v1845 = vpop.f32.mrf.mxu0
        %v1846 = vadd.f32 %v1313, %v1845
        %v1847 = vpop.f32.mrf.mxu0
        %v1848 = vpop.f32.mrf.mxu0
        %v1849 = vpop.f32.mrf.mxu0
        %1850 = vdwg.mxu0
        %v1851 = vsel %vm1407, %v1796, -inf
        %1852 = vmax.xlane.f32.xlu0 %v1851
        %v1853 = vpop.xlane.xlu0 %1852
        %v1854 = vsel %vm1407, %v1846, -inf
        %1855 = vmax.xlane.f32.xlu0 %v1854
        %v1856 = vpop.xlane.xlu0 %1855
        %v1857 = vsub.f32 %v1796, %v1853
        %v1858 = vsub.f32 %v1846, %v1856
        %v1859 = vmul.f32 %v1857, 1.442695
        %v1860 = vpow.pop %v1859
        %v1861 = vmul.f32 %v1858, 1.442695
        %v1862 = vpow.pop %v1861
        %v1863 = vsel %vm1407, %v1860, 0.0
        %1864 = vadd.xlane.f32.xlu0 %v1863
        %v1865 = vpop.xlane.xlu0 %1864
        %v1866 = vsel %vm1407, %v1862, 0.0
        %1867 = vadd.xlane.f32.xlu0 %v1866
        %v1868 = vpop.xlane.xlu0 %1867
        %v1869 = vrcp.pop %v1865
        %v1870 = vrcp.pop %v1868
        %v1871 = vmul.f32 %v1860, %v1869
        %v1872 = vmul.f32 %v1862, %v1870
        %v1873 = vpack.c.bf16 %v1871, %v1871
        %v1874 = vpack.c.bf16 %v1872, %v1872
        %1875 = vrot.lane.b32.xlu0 %v1304, 64
        %v1876 = vpop.permute.xlu0 %1875
        %v1878 = vsel %vm1407, %v1873, 0
        %v1881 = vsel %vm1435, %v1876, 0
        %1883 = vmatprep.subr.bf16.mxu0 0
        %1884 = vmatpush1.bf16.msra.mxu0 0
        %1885 = vmatprep.subr.bf16.mxu0 0
        %1886 = vmatpush1.bf16.msra.mxu0 0
        %1887 = vmatprep.subr.bf16.mxu0 0
        %1888 = vmatpush1.bf16.msra.mxu0 0
        %1889 = vmatprep.subr.bf16.mxu0 0
        %1890 = vmatpush1.bf16.msra.mxu0 0
        %1891 = vmatprep.subr.bf16.mxu0 0
        %1892 = vmatpush1.bf16.msra.mxu0 0
        %1893 = vmatprep.subr.bf16.mxu0 0
        %1894 = vmatpush1.bf16.msra.mxu0 0
        %1895 = vmatprep.subr.bf16.mxu0 0
        %1896 = vmatpush1.bf16.msra.mxu0 0
        %1897 = vmatprep.subr.bf16.mxu0 0
        %1898 = vmatpush1.bf16.msra.mxu0 %v1881
        %1899 = vmatprep.subr.bf16.mxu0 0
        %1900 = vmatpush2.bf16.msra.mxu0 0
        %1901 = vmatprep.subr.bf16.mxu0 0
        %1902 = vmatpush2.bf16.msra.mxu0 0
        %1903 = vmatprep.subr.bf16.mxu0 0
        %1904 = vmatpush2.bf16.msra.mxu0 0
        %1905 = vmatprep.subr.bf16.mxu0 0
        %1906 = vmatpush2.bf16.msra.mxu0 0
        %1907 = vmatprep.subr.bf16.mxu0 0
        %1908 = vmatpush2.bf16.msra.mxu0 0
        %1909 = vmatprep.subr.bf16.mxu0 0
        %1910 = vmatpush2.bf16.msra.mxu0 0
        %1911 = vmatprep.subr.bf16.mxu0 0
        %1912 = vmatpush2.bf16.msra.mxu0 0
        %1913 = vmatprep.subr.bf16.mxu0 0
        %1914 = vmatpush2.bf16.msra.mxu0 0
        %1915 = vmatprep.mubr.bf16.mxu0 0
        %1916 = vmatmul.mubr.bf16.gmra.mxu0 %v1878
        %v1917 = vpop.f32.mrf.mxu0
        %v1918 = vadd.f32 0.0, %v1917
        %v1919 = vpop.f32.mrf.mxu0
        %v1920 = vpop.f32.mrf.mxu0
        %v1921 = vpop.f32.mrf.mxu0
        %1922 = vdwg.mxu0
        %1923 = vrot.lane.b32.xlu0 %v1305, 64
        %v1924 = vpop.permute.xlu0 %1923
        %v1926 = vsel %vm1407, %v1874, 0
        %v1929 = vsel %vm1435, %v1924, 0
        %1931 = vmatprep.subr.bf16.mxu0 0
        %1932 = vmatpush1.bf16.msra.mxu0 0
        %1933 = vmatprep.subr.bf16.mxu0 0
        %1934 = vmatpush1.bf16.msra.mxu0 0
        %1935 = vmatprep.subr.bf16.mxu0 0
        %1936 = vmatpush1.bf16.msra.mxu0 0
        %1937 = vmatprep.subr.bf16.mxu0 0
        %1938 = vmatpush1.bf16.msra.mxu0 0
        %1939 = vmatprep.subr.bf16.mxu0 0
        %1940 = vmatpush1.bf16.msra.mxu0 0
        %1941 = vmatprep.subr.bf16.mxu0 0
        %1942 = vmatpush1.bf16.msra.mxu0 0
        %1943 = vmatprep.subr.bf16.mxu0 0
        %1944 = vmatpush1.bf16.msra.mxu0 0
        %1945 = vmatprep.subr.bf16.mxu0 0
        %1946 = vmatpush1.bf16.msra.mxu0 %v1929
        %1947 = vmatprep.subr.bf16.mxu0 0
        %1948 = vmatpush2.bf16.msra.mxu0 0
        %1949 = vmatprep.subr.bf16.mxu0 0
        %1950 = vmatpush2.bf16.msra.mxu0 0
        %1951 = vmatprep.subr.bf16.mxu0 0
        %1952 = vmatpush2.bf16.msra.mxu0 0
        %1953 = vmatprep.subr.bf16.mxu0 0
        %1954 = vmatpush2.bf16.msra.mxu0 0
        %1955 = vmatprep.subr.bf16.mxu0 0
        %1956 = vmatpush2.bf16.msra.mxu0 0
        %1957 = vmatprep.subr.bf16.mxu0 0
        %1958 = vmatpush2.bf16.msra.mxu0 0
        %1959 = vmatprep.subr.bf16.mxu0 0
        %1960 = vmatpush2.bf16.msra.mxu0 0
        %1961 = vmatprep.subr.bf16.mxu0 0
        %1962 = vmatpush2.bf16.msra.mxu0 0
        %1963 = vmatprep.mubr.bf16.mxu0 0
        %1964 = vmatmul.mubr.bf16.gmra.mxu0 %v1926
        %v1965 = vpop.f32.mrf.mxu0
        %v1966 = vadd.f32 0.0, %v1965
        %v1967 = vpop.f32.mrf.mxu0
        %v1968 = vpop.f32.mrf.mxu0
        %v1969 = vpop.f32.mrf.mxu0
        %1970 = vdwg.mxu0
        %1971 = vrot.lane.b32.xlu0 %v1300, 32
        %v1972 = vpop.permute.xlu0 %1971
        %1973 = vrot.lane.b32.xlu0 %v1302, 32
        %v1974 = vpop.permute.xlu0 %1973
        %v1976 = vsel %vm1314, %v1972, 0
        %v1979 = vsel %vm1314, %v1974, 0
        %1981 = vmatprep.subr.bf16.mxu0 0
        %1982 = vmatpush1.bf16.xpose.msra.mxu0 0
        %1983 = vmatprep.subr.bf16.mxu0 0
        %1984 = vmatpush1.bf16.xpose.msra.mxu0 0
        %1985 = vmatprep.subr.bf16.mxu0 0
        %1986 = vmatpush1.bf16.xpose.msra.mxu0 0
        %1987 = vmatprep.subr.bf16.mxu0 0
        %1988 = vmatpush1.bf16.xpose.msra.mxu0 0
        %1989 = vmatprep.subr.bf16.mxu0 0
        %1990 = vmatpush1.bf16.xpose.msra.mxu0 0
        %1991 = vmatprep.subr.bf16.mxu0 0
        %1992 = vmatpush1.bf16.xpose.msra.mxu0 0
        %1993 = vmatprep.subr.bf16.mxu0 0
        %1994 = vmatpush1.bf16.xpose.msra.mxu0 0
        %1995 = vmatprep.subr.bf16.mxu0 0
        %1996 = vmatpush1.bf16.xpose.msra.mxu0 %v1979
        %1997 = vmatprep.subr.bf16.mxu0 0
        %1998 = vmatpush2.bf16.xpose.msra.mxu0 0
        %1999 = vmatprep.subr.bf16.mxu0 0
        %2000 = vmatpush2.bf16.xpose.msra.mxu0 0
        %2001 = vmatprep.subr.bf16.mxu0 0
        %2002 = vmatpush2.bf16.xpose.msra.mxu0 0
        %2003 = vmatprep.subr.bf16.mxu0 0
        %2004 = vmatpush2.bf16.xpose.msra.mxu0 0
        %2005 = vmatprep.subr.bf16.mxu0 0
        %2006 = vmatpush2.bf16.xpose.msra.mxu0 0
        %2007 = vmatprep.subr.bf16.mxu0 0
        %2008 = vmatpush2.bf16.xpose.msra.mxu0 0
        %2009 = vmatprep.subr.bf16.mxu0 0
        %2010 = vmatpush2.bf16.xpose.msra.mxu0 0
        %2011 = vmatprep.subr.bf16.mxu0 0
        %2012 = vmatpush2.bf16.xpose.msra.mxu0 0
        %2013 = vmatprep.mubr.bf16.mxu0 0
        %2014 = vmatmul.mubr.bf16.gmra.mxu0 %v1976
        %v2015 = vpop.f32.mrf.mxu0
        %v2016 = vadd.f32 %v1309, %v2015
        %v2017 = vpop.f32.mrf.mxu0
        %v2018 = vpop.f32.mrf.mxu0
        %v2019 = vpop.f32.mrf.mxu0
        %2020 = vdwg.mxu0
        %2021 = vrot.lane.b32.xlu0 %v1301, 32
        %v2022 = vpop.permute.xlu0 %2021
        %2023 = vrot.lane.b32.xlu0 %v1303, 32
        %v2024 = vpop.permute.xlu0 %2023
        %v2026 = vsel %vm1314, %v2022, 0
        %v2029 = vsel %vm1314, %v2024, 0
        %2031 = vmatprep.subr.bf16.mxu0 0
        %2032 = vmatpush1.bf16.xpose.msra.mxu0 0
        %2033 = vmatprep.subr.bf16.mxu0 0
        %2034 = vmatpush1.bf16.xpose.msra.mxu0 0
        %2035 = vmatprep.subr.bf16.mxu0 0
        %2036 = vmatpush1.bf16.xpose.msra.mxu0 0
        %2037 = vmatprep.subr.bf16.mxu0 0
        %2038 = vmatpush1.bf16.xpose.msra.mxu0 0
        %2039 = vmatprep.subr.bf16.mxu0 0
        %2040 = vmatpush1.bf16.xpose.msra.mxu0 0
        %2041 = vmatprep.subr.bf16.mxu0 0
        %2042 = vmatpush1.bf16.xpose.msra.mxu0 0
        %2043 = vmatprep.subr.bf16.mxu0 0
        %2044 = vmatpush1.bf16.xpose.msra.mxu0 0
        %2045 = vmatprep.subr.bf16.mxu0 0
        %2046 = vmatpush1.bf16.xpose.msra.mxu0 %v2029
        %2047 = vmatprep.subr.bf16.mxu0 0
        %2048 = vmatpush2.bf16.xpose.msra.mxu0 0
        %2049 = vmatprep.subr.bf16.mxu0 0
        %2050 = vmatpush2.bf16.xpose.msra.mxu0 0
        %2051 = vmatprep.subr.bf16.mxu0 0
        %2052 = vmatpush2.bf16.xpose.msra.mxu0 0
        %2053 = vmatprep.subr.bf16.mxu0 0
        %2054 = vmatpush2.bf16.xpose.msra.mxu0 0
        %2055 = vmatprep.subr.bf16.mxu0 0
        %2056 = vmatpush2.bf16.xpose.msra.mxu0 0
        %2057 = vmatprep.subr.bf16.mxu0 0
        %2058 = vmatpush2.bf16.xpose.msra.mxu0 0
        %2059 = vmatprep.subr.bf16.mxu0 0
        %2060 = vmatpush2.bf16.xpose.msra.mxu0 0
        %2061 = vmatprep.subr.bf16.mxu0 0
        %2062 = vmatpush2.bf16.xpose.msra.mxu0 0
        %2063 = vmatprep.mubr.bf16.mxu0 0
        %2064 = vmatmul.mubr.bf16.gmra.mxu0 %v2026
        %v2065 = vpop.f32.mrf.mxu0
        %v2066 = vadd.f32 %v1313, %v2065
        %v2067 = vpop.f32.mrf.mxu0
        %v2068 = vpop.f32.mrf.mxu0
        %v2069 = vpop.f32.mrf.mxu0
        %2070 = vdwg.mxu0
        %v2071 = vsel %vm1407, %v2016, -inf
        %2072 = vmax.xlane.f32.xlu0 %v2071
        %v2073 = vpop.xlane.xlu0 %2072
        %v2074 = vsel %vm1407, %v2066, -inf
        %2075 = vmax.xlane.f32.xlu0 %v2074
        %v2076 = vpop.xlane.xlu0 %2075
        %v2077 = vsub.f32 %v2016, %v2073
        %v2078 = vsub.f32 %v2066, %v2076
        %v2079 = vmul.f32 %v2077, 1.442695
        %v2080 = vpow.pop %v2079
        %v2081 = vmul.f32 %v2078, 1.442695
        %v2082 = vpow.pop %v2081
        %v2083 = vsel %vm1407, %v2080, 0.0
        %2084 = vadd.xlane.f32.xlu0 %v2083
        %v2085 = vpop.xlane.xlu0 %2084
        %v2086 = vsel %vm1407, %v2082, 0.0
        %2087 = vadd.xlane.f32.xlu0 %v2086
        %v2088 = vpop.xlane.xlu0 %2087
        %v2089 = vrcp.pop %v2085
        %v2090 = vrcp.pop %v2088
        %v2091 = vmul.f32 %v2080, %v2089
        %v2092 = vmul.f32 %v2082, %v2090
        %v2093 = vpack.c.bf16 %v2091, %v2091
        %v2094 = vpack.c.bf16 %v2092, %v2092
        %2095 = vrot.lane.b32.xlu0 %v1304, 32
        %v2096 = vpop.permute.xlu0 %2095
        %v2098 = vsel %vm1407, %v2093, 0
        %v2101 = vsel %vm1435, %v2096, 0
        %2103 = vmatprep.subr.bf16.mxu0 0
        %2104 = vmatpush1.bf16.msra.mxu0 0
        %2105 = vmatprep.subr.bf16.mxu0 0
        %2106 = vmatpush1.bf16.msra.mxu0 0
        %2107 = vmatprep.subr.bf16.mxu0 0
        %2108 = vmatpush1.bf16.msra.mxu0 0
        %2109 = vmatprep.subr.bf16.mxu0 0
        %2110 = vmatpush1.bf16.msra.mxu0 0
        %2111 = vmatprep.subr.bf16.mxu0 0
        %2112 = vmatpush1.bf16.msra.mxu0 0
        %2113 = vmatprep.subr.bf16.mxu0 0
        %2114 = vmatpush1.bf16.msra.mxu0 0
        %2115 = vmatprep.subr.bf16.mxu0 0
        %2116 = vmatpush1.bf16.msra.mxu0 0
        %2117 = vmatprep.subr.bf16.mxu0 0
        %2118 = vmatpush1.bf16.msra.mxu0 %v2101
        %2119 = vmatprep.subr.bf16.mxu0 0
        %2120 = vmatpush2.bf16.msra.mxu0 0
        %2121 = vmatprep.subr.bf16.mxu0 0
        %2122 = vmatpush2.bf16.msra.mxu0 0
        %2123 = vmatprep.subr.bf16.mxu0 0
        %2124 = vmatpush2.bf16.msra.mxu0 0
        %2125 = vmatprep.subr.bf16.mxu0 0
        %2126 = vmatpush2.bf16.msra.mxu0 0
        %2127 = vmatprep.subr.bf16.mxu0 0
        %2128 = vmatpush2.bf16.msra.mxu0 0
        %2129 = vmatprep.subr.bf16.mxu0 0
        %2130 = vmatpush2.bf16.msra.mxu0 0
        %2131 = vmatprep.subr.bf16.mxu0 0
        %2132 = vmatpush2.bf16.msra.mxu0 0
        %2133 = vmatprep.subr.bf16.mxu0 0
        %2134 = vmatpush2.bf16.msra.mxu0 0
        %2135 = vmatprep.mubr.bf16.mxu0 0
        %2136 = vmatmul.mubr.bf16.gmra.mxu0 %v2098
        %v2137 = vpop.f32.mrf.mxu0
        %v2138 = vadd.f32 0.0, %v2137
        %v2139 = vpop.f32.mrf.mxu0
        %v2140 = vpop.f32.mrf.mxu0
        %v2141 = vpop.f32.mrf.mxu0
        %2142 = vdwg.mxu0
        %2143 = vrot.lane.b32.xlu0 %v1305, 32
        %v2144 = vpop.permute.xlu0 %2143
        %v2146 = vsel %vm1407, %v2094, 0
        %v2149 = vsel %vm1435, %v2144, 0
        %2151 = vmatprep.subr.bf16.mxu0 0
        %2152 = vmatpush1.bf16.msra.mxu0 0
        %2153 = vmatprep.subr.bf16.mxu0 0
        %2154 = vmatpush1.bf16.msra.mxu0 0
        %2155 = vmatprep.subr.bf16.mxu0 0
        %2156 = vmatpush1.bf16.msra.mxu0 0
        %2157 = vmatprep.subr.bf16.mxu0 0
        %2158 = vmatpush1.bf16.msra.mxu0 0
        %2159 = vmatprep.subr.bf16.mxu0 0
        %2160 = vmatpush1.bf16.msra.mxu0 0
        %2161 = vmatprep.subr.bf16.mxu0 0
        %2162 = vmatpush1.bf16.msra.mxu0 0
        %2163 = vmatprep.subr.bf16.mxu0 0
        %2164 = vmatpush1.bf16.msra.mxu0 0
        %2165 = vmatprep.subr.bf16.mxu0 0
        %2166 = vmatpush1.bf16.msra.mxu0 %v2149
        %2167 = vmatprep.subr.bf16.mxu0 0
        %2168 = vmatpush2.bf16.msra.mxu0 0
        %2169 = vmatprep.subr.bf16.mxu0 0
        %2170 = vmatpush2.bf16.msra.mxu0 0
        %2171 = vmatprep.subr.bf16.mxu0 0
        %2172 = vmatpush2.bf16.msra.mxu0 0
        %2173 = vmatprep.subr.bf16.mxu0 0
        %2174 = vmatpush2.bf16.msra.mxu0 0
        %2175 = vmatprep.subr.bf16.mxu0 0
        %2176 = vmatpush2.bf16.msra.mxu0 0
        %2177 = vmatprep.subr.bf16.mxu0 0
        %2178 = vmatpush2.bf16.msra.mxu0 0
        %2179 = vmatprep.subr.bf16.mxu0 0
        %2180 = vmatpush2.bf16.msra.mxu0 0
        %2181 = vmatprep.subr.bf16.mxu0 0
        %2182 = vmatpush2.bf16.msra.mxu0 0
        %2183 = vmatprep.mubr.bf16.mxu0 0
        %2184 = vmatmul.mubr.bf16.gmra.mxu0 %v2146
        %v2185 = vpop.f32.mrf.mxu0
        %v2186 = vadd.f32 0.0, %v2185
        %v2187 = vpop.f32.mrf.mxu0
        %v2188 = vpop.f32.mrf.mxu0
        %v2189 = vpop.f32.mrf.mxu0
        %2190 = vdwg.mxu0
        %2193 = vrot.lane.b32.xlu0 %v1697, 32
        %v2194 = vpop.permute.xlu0 %2193
        %2195 = vrot.lane.b32.xlu0 %v1746, 32
        %v2196 = vpop.permute.xlu0 %2195
        %2201 = vrot.lane.b32.xlu0 %v1918, 64
        %v2202 = vpop.permute.xlu0 %2201
        %2203 = vrot.lane.b32.xlu0 %v1966, 64
        %v2204 = vpop.permute.xlu0 %2203
        %2209 = vrot.lane.b32.xlu0 %v2138, 96
        %v2210 = vpop.permute.xlu0 %2209
        %2211 = vrot.lane.b32.xlu0 %v2186, 96
        %v2212 = vpop.permute.xlu0 %2211
        %v2215 = vsel %vm1314, %v1474, %v2194
        %v2216 = vsel %vm1314, %v1520, %v2196
        %vm2217 = vcmask 523264
        %v2218 = vsel %vm2217, %v2215, %v2202
        %v2219 = vsel %vm2217, %v2216, %v2204
        %vm2220 = vcmask 785408
        %v2221 = vsel %vm2220, %v2218, %v2210
        %v2222 = vsel %vm2220, %v2219, %v2212
        %v2223 = vpack.c.bf16 %v2222, %v2221
        %v2224 = vld [vmem:[%s783] sm:$0xf]
        %v2225 = vld [vmem:[%s783 + $0x4] sm:$0xf]
        %v2226 = vld [vmem:[%s783 + $0x8] sm:$0xf]
        %v2227 = vld [vmem:[%s783 + $0xc] sm:$0xf]
        %v2228 = vld [vmem:[%s783 + $0x10] sm:$0xf]
        %v2229 = vld [vmem:[%s783 + $0x14] sm:$0xf]
        %v2230 = vld [vmem:[%s783 + $0x18] sm:$0xf]
        %v2231 = vld [vmem:[%s783 + $0x1c] sm:$0xf]
        %v2232 = vld [vmem:[%s783 + $0x20] sm:$0xf]
        %v2233 = vld [vmem:[%s783 + $0x24] sm:$0xf]
        %v2234 = vld [vmem:[%s783 + $0x28] sm:$0xf]
        %v2235 = vld [vmem:[%s783 + $0x2c] sm:$0xf]
        %v2236 = vld [vmem:[%s783 + $0x30] sm:$0xf]
        %v2237 = vld [vmem:[%s783 + $0x34] sm:$0xf]
        %v2238 = vld [vmem:[%s783 + $0x38] sm:$0xf]
        %v2239 = vld [vmem:[%s783 + $0x3c] sm:$0xf]
        %v2240 = vld [vmem:[%s915] sm:$0x1]
        %v2242 = vlaneseq
        %v2243 = vshrl.u32 %v2242, 7
        %v2244 = vsub.s32 0, %v2243
        %v2245 = vrot.slane %v2240, %v2244
        %v2263 = vunpack.c.l.b16 %v2224
        %v2264 = vunpack.c.l.b16 %v2225
        %v2265 = vunpack.c.l.b16 %v2226
        %v2266 = vunpack.c.l.b16 %v2227
        %v2267 = vunpack.c.l.b16 %v2228
        %v2268 = vunpack.c.l.b16 %v2229
        %v2269 = vunpack.c.l.b16 %v2230
        %v2270 = vunpack.c.l.b16 %v2231
        %v2271 = vunpack.c.l.b16 %v2232
        %v2272 = vunpack.c.l.b16 %v2233
        %v2273 = vunpack.c.l.b16 %v2234
        %v2274 = vunpack.c.l.b16 %v2235
        %v2275 = vunpack.c.l.b16 %v2236
        %v2276 = vunpack.c.l.b16 %v2237
        %v2277 = vunpack.c.l.b16 %v2238
        %v2278 = vunpack.c.l.b16 %v2239
        %v2279 = vpack.c.b16 %v2264, %v2263
        %v2280 = vpack.c.b16 %v2266, %v2265
        %v2281 = vpack.c.b16 %v2268, %v2267
        %v2282 = vpack.c.b16 %v2270, %v2269
        %v2283 = vpack.c.b16 %v2272, %v2271
        %v2284 = vpack.c.b16 %v2274, %v2273
        %v2285 = vpack.c.b16 %v2276, %v2275
        %v2286 = vpack.c.b16 %v2278, %v2277
        %2295 = vmatprep.subr.bf16.mxu0 0
        %2296 = vmatpush1.bf16.msra.mxu0 %v2286
        %2297 = vmatprep.subr.bf16.mxu0 0
        %2298 = vmatpush1.bf16.msra.mxu0 %v2285
        %2299 = vmatprep.subr.bf16.mxu0 0
        %2300 = vmatpush1.bf16.msra.mxu0 %v2284
        %2301 = vmatprep.subr.bf16.mxu0 0
        %2302 = vmatpush1.bf16.msra.mxu0 %v2283
        %2303 = vmatprep.subr.bf16.mxu0 0
        %2304 = vmatpush1.bf16.msra.mxu0 %v2282
        %2305 = vmatprep.subr.bf16.mxu0 0
        %2306 = vmatpush1.bf16.msra.mxu0 %v2281
        %2307 = vmatprep.subr.bf16.mxu0 0
        %2308 = vmatpush1.bf16.msra.mxu0 %v2280
        %2309 = vmatprep.subr.bf16.mxu0 0
        %2310 = vmatpush1.bf16.msra.mxu0 %v2279
        %2311 = vmatprep.subr.bf16.mxu0 0
        %2312 = vmatpush2.bf16.msra.mxu0 0
        %2313 = vmatprep.subr.bf16.mxu0 0
        %2314 = vmatpush2.bf16.msra.mxu0 0
        %2315 = vmatprep.subr.bf16.mxu0 0
        %2316 = vmatpush2.bf16.msra.mxu0 0
        %2317 = vmatprep.subr.bf16.mxu0 0
        %2318 = vmatpush2.bf16.msra.mxu0 0
        %2319 = vmatprep.subr.bf16.mxu0 0
        %2320 = vmatpush2.bf16.msra.mxu0 0
        %2321 = vmatprep.subr.bf16.mxu0 0
        %2322 = vmatpush2.bf16.msra.mxu0 0
        %2323 = vmatprep.subr.bf16.mxu0 0
        %2324 = vmatpush2.bf16.msra.mxu0 0
        %2325 = vmatprep.subr.bf16.mxu0 0
        %2326 = vmatpush2.bf16.msra.mxu0 0
        %2327 = vmatprep.mubr.bf16.mxu0 0
        %2328 = vmatmul.mubr.bf16.gmra.mxu0 %v2223
        %v2329 = vpop.f32.mrf.mxu0
        %v2330 = vadd.f32 %v2245, %v2329
        %v2331 = vpop.f32.mrf.mxu0
        %v2332 = vpop.f32.mrf.mxu0
        %v2333 = vadd.f32 %v2245, %v2332
        %v2334 = vpop.f32.mrf.mxu0
        %2335 = vdwg.mxu0
        %v2336 = vadd.f32 %v947, %v2330
        %v2337 = vadd.f32 %v948, %v2333
        %v2338 = vld [vmem:[%s918] sm:$0x1]
        %v2339 = vld [vmem:[%s921] sm:$0x1]
        %2340 = vadd.xlane.f32.xlu0 %v2336
        %v2341 = vpop.xlane.xlu0 %2340
        %2342 = vadd.xlane.f32.xlu0 %v2337
        %v2343 = vpop.xlane.xlu0 %2342
        %v2344 = vrcp.pop 128.0
        %v2345 = vmul.f32 %v2341, %v2344
        %v2346 = vmul.f32 %v2343, %v2344
        %v2347 = vsub.f32 %v2336, %v2345
        %v2348 = vsub.f32 %v2337, %v2346
        %v2349 = vmul.f32 %v2347, %v2347
        %v2350 = vmul.f32 %v2348, %v2348
        %2351 = vadd.xlane.f32.xlu0 %v2349
        %v2352 = vpop.xlane.xlu0 %2351
        %2353 = vadd.xlane.f32.xlu0 %v2350
        %v2354 = vpop.xlane.xlu0 %2353
        %v2355 = vmul.f32 %v2352, %v2344
        %v2356 = vmul.f32 %v2354, %v2344
        %v2357 = vadd.f32 %v2355, 1e-05
        %v2358 = vadd.f32 %v2356, 1e-05
        %v2359 = vrsqrt.pop %v2357
        %v2360 = vrsqrt.pop %v2358
        %v2361 = vmul.f32 %v2347, %v2359
        %v2362 = vmul.f32 %v2348, %v2360
        %v2364 = vlaneseq
        %v2365 = vshrl.u32 %v2364, 7
        %v2366 = vsub.s32 0, %v2365
        %v2367 = vrot.slane %v2338, %v2366
        %v2369 = vmul.f32 %v2361, %v2367
        %v2370 = vmul.f32 %v2362, %v2367
        %v2372 = vlaneseq
        %v2373 = vshrl.u32 %v2372, 7
        %v2374 = vsub.s32 0, %v2373
        %v2375 = vrot.slane %v2339, %v2374
        %v2377 = vadd.f32 %v2369, %v2375
        %v2378 = vadd.f32 %v2370, %v2375
        %v2379 = vld [vmem:[%s792] sm:$0xff]
        %v2380 = vld [vmem:[%s792 + $0x8] sm:$0xff]
        %v2381 = vld [vmem:[%s792 + $0x10] sm:$0xff]
        %v2382 = vld [vmem:[%s792 + $0x18] sm:$0xff]
        %v2383 = vld [vmem:[%s792 + $0x20] sm:$0xff]
        %v2384 = vld [vmem:[%s792 + $0x28] sm:$0xff]
        %v2385 = vld [vmem:[%s792 + $0x30] sm:$0xff]
        %v2386 = vld [vmem:[%s792 + $0x38] sm:$0xff]
        %v2387 = vld [vmem:[%s792 + $0x40] sm:$0xff]
        %v2388 = vld [vmem:[%s792 + $0x48] sm:$0xff]
        %v2389 = vld [vmem:[%s792 + $0x50] sm:$0xff]
        %v2390 = vld [vmem:[%s792 + $0x58] sm:$0xff]
        %v2391 = vld [vmem:[%s792 + $0x60] sm:$0xff]
        %v2392 = vld [vmem:[%s792 + $0x68] sm:$0xff]
        %v2393 = vld [vmem:[%s792 + $0x70] sm:$0xff]
        %v2394 = vld [vmem:[%s792 + $0x78] sm:$0xff]
        %v2395 = vld [vmem:[%s925] sm:$0x3]
        %v2396 = vpack.c.bf16 %v2378, %v2377
        %v2398 = vlaneseq
        %v2399 = vshrl.u32 %v2398, 7
        %v2400 = vsub.s32 0, %v2399
        %v2401 = vrot.slane %v2395, %v2400
        %v2402 = vlaneseq
        %v2403 = vshrl.u32 %v2402, 7
        %v2404 = vsub.s32 1, %v2403
        %v2405 = vrot.slane %v2395, %v2404
        %v2424 = vunpack.c.l.b16 %v2379
        %v2425 = vunpack.c.h.b16 %v2379
        %v2426 = vunpack.c.l.b16 %v2380
        %v2427 = vunpack.c.h.b16 %v2380
        %v2428 = vunpack.c.l.b16 %v2381
        %v2429 = vunpack.c.h.b16 %v2381
        %v2430 = vunpack.c.l.b16 %v2382
        %v2431 = vunpack.c.h.b16 %v2382
        %v2432 = vunpack.c.l.b16 %v2383
        %v2433 = vunpack.c.h.b16 %v2383
        %v2434 = vunpack.c.l.b16 %v2384
        %v2435 = vunpack.c.h.b16 %v2384
        %v2436 = vunpack.c.l.b16 %v2385
        %v2437 = vunpack.c.h.b16 %v2385
        %v2438 = vunpack.c.l.b16 %v2386
        %v2439 = vunpack.c.h.b16 %v2386
        %v2440 = vunpack.c.l.b16 %v2387
        %v2441 = vunpack.c.h.b16 %v2387
        %v2442 = vunpack.c.l.b16 %v2388
        %v2443 = vunpack.c.h.b16 %v2388
        %v2444 = vunpack.c.l.b16 %v2389
        %v2445 = vunpack.c.h.b16 %v2389
        %v2446 = vunpack.c.l.b16 %v2390
        %v2447 = vunpack.c.h.b16 %v2390
        %v2448 = vunpack.c.l.b16 %v2391
        %v2449 = vunpack.c.h.b16 %v2391
        %v2450 = vunpack.c.l.b16 %v2392
        %v2451 = vunpack.c.h.b16 %v2392
        %v2452 = vunpack.c.l.b16 %v2393
        %v2453 = vunpack.c.h.b16 %v2393
        %v2454 = vunpack.c.l.b16 %v2394
        %v2455 = vunpack.c.h.b16 %v2394
        %v2456 = vpack.c.b16 %v2426, %v2424
        %v2457 = vpack.c.b16 %v2427, %v2425
        %v2458 = vpack.c.b16 %v2430, %v2428
        %v2459 = vpack.c.b16 %v2431, %v2429
        %v2460 = vpack.c.b16 %v2434, %v2432
        %v2461 = vpack.c.b16 %v2435, %v2433
        %v2462 = vpack.c.b16 %v2438, %v2436
        %v2463 = vpack.c.b16 %v2439, %v2437
        %v2464 = vpack.c.b16 %v2442, %v2440
        %v2465 = vpack.c.b16 %v2443, %v2441
        %v2466 = vpack.c.b16 %v2446, %v2444
        %v2467 = vpack.c.b16 %v2447, %v2445
        %v2468 = vpack.c.b16 %v2450, %v2448
        %v2469 = vpack.c.b16 %v2451, %v2449
        %v2470 = vpack.c.b16 %v2454, %v2452
        %v2471 = vpack.c.b16 %v2455, %v2453
        %2488 = vmatprep.subr.bf16.mxu0 %v2471
        %2489 = vmatpush1.bf16.msra.mxu0 %v2470
        %2490 = vmatprep.subr.bf16.mxu0 %v2469
        %2491 = vmatpush1.bf16.msra.mxu0 %v2468
        %2492 = vmatprep.subr.bf16.mxu0 %v2467
        %2493 = vmatpush1.bf16.msra.mxu0 %v2466
        %2494 = vmatprep.subr.bf16.mxu0 %v2465
        %2495 = vmatpush1.bf16.msra.mxu0 %v2464
        %2496 = vmatprep.subr.bf16.mxu0 %v2463
        %2497 = vmatpush1.bf16.msra.mxu0 %v2462
        %2498 = vmatprep.subr.bf16.mxu0 %v2461
        %2499 = vmatpush1.bf16.msra.mxu0 %v2460
        %2500 = vmatprep.subr.bf16.mxu0 %v2459
        %2501 = vmatpush1.bf16.msra.mxu0 %v2458
        %2502 = vmatprep.subr.bf16.mxu0 %v2457
        %2503 = vmatpush1.bf16.msra.mxu0 %v2456
        %2504 = vmatprep.subr.bf16.mxu0 0
        %2505 = vmatpush2.bf16.msra.mxu0 0
        %2506 = vmatprep.subr.bf16.mxu0 0
        %2507 = vmatpush2.bf16.msra.mxu0 0
        %2508 = vmatprep.subr.bf16.mxu0 0
        %2509 = vmatpush2.bf16.msra.mxu0 0
        %2510 = vmatprep.subr.bf16.mxu0 0
        %2511 = vmatpush2.bf16.msra.mxu0 0
        %2512 = vmatprep.subr.bf16.mxu0 0
        %2513 = vmatpush2.bf16.msra.mxu0 0
        %2514 = vmatprep.subr.bf16.mxu0 0
        %2515 = vmatpush2.bf16.msra.mxu0 0
        %2516 = vmatprep.subr.bf16.mxu0 0
        %2517 = vmatpush2.bf16.msra.mxu0 0
        %2518 = vmatprep.subr.bf16.mxu0 0
        %2519 = vmatpush2.bf16.msra.mxu0 0
        %2520 = vmatprep.mubr.bf16.mxu0 0
        %2521 = vmatmul.mubr.bf16.gmra.mxu0 %v2396
        %v2522 = vpop.f32.mrf.mxu0
        %v2523 = vadd.f32 %v2401, %v2522
        %v2524 = vpop.f32.mrf.mxu0
        %v2525 = vadd.f32 %v2405, %v2524
        %v2526 = vpop.f32.mrf.mxu0
        %v2527 = vadd.f32 %v2401, %v2526
        %v2528 = vpop.f32.mrf.mxu0
        %v2529 = vadd.f32 %v2405, %v2528
        %2530 = vdwg.mxu0
        %v2531 = vmax.f32 %v2523, 0.0
        %v2532 = vmax.f32 %v2525, 0.0
        %v2533 = vmax.f32 %v2527, 0.0
        %v2534 = vmax.f32 %v2529, 0.0
        %v2535 = vld [vmem:[%s801] sm:$0xf]
        %v2536 = vld [vmem:[%s801 + $0x4] sm:$0xf]
        %v2537 = vld [vmem:[%s801 + $0x8] sm:$0xf]
        %v2538 = vld [vmem:[%s801 + $0xc] sm:$0xf]
        %v2539 = vld [vmem:[%s801 + $0x10] sm:$0xf]
        %v2540 = vld [vmem:[%s801 + $0x14] sm:$0xf]
        %v2541 = vld [vmem:[%s801 + $0x18] sm:$0xf]
        %v2542 = vld [vmem:[%s801 + $0x1c] sm:$0xf]
        %v2543 = vld [vmem:[%s801 + $0x20] sm:$0xf]
        %v2544 = vld [vmem:[%s801 + $0x24] sm:$0xf]
        %v2545 = vld [vmem:[%s801 + $0x28] sm:$0xf]
        %v2546 = vld [vmem:[%s801 + $0x2c] sm:$0xf]
        %v2547 = vld [vmem:[%s801 + $0x30] sm:$0xf]
        %v2548 = vld [vmem:[%s801 + $0x34] sm:$0xf]
        %v2549 = vld [vmem:[%s801 + $0x38] sm:$0xf]
        %v2550 = vld [vmem:[%s801 + $0x3c] sm:$0xf]
        %v2551 = vld [vmem:[%s801 + $0x40] sm:$0xf]
        %v2552 = vld [vmem:[%s801 + $0x44] sm:$0xf]
        %v2553 = vld [vmem:[%s801 + $0x48] sm:$0xf]
        %v2554 = vld [vmem:[%s801 + $0x4c] sm:$0xf]
        %v2555 = vld [vmem:[%s801 + $0x50] sm:$0xf]
        %v2556 = vld [vmem:[%s801 + $0x54] sm:$0xf]
        %v2557 = vld [vmem:[%s801 + $0x58] sm:$0xf]
        %v2558 = vld [vmem:[%s801 + $0x5c] sm:$0xf]
        %v2559 = vld [vmem:[%s801 + $0x60] sm:$0xf]
        %v2560 = vld [vmem:[%s801 + $0x64] sm:$0xf]
        %v2561 = vld [vmem:[%s801 + $0x68] sm:$0xf]
        %v2562 = vld [vmem:[%s801 + $0x6c] sm:$0xf]
        %v2563 = vld [vmem:[%s801 + $0x70] sm:$0xf]
        %v2564 = vld [vmem:[%s801 + $0x74] sm:$0xf]
        %v2565 = vld [vmem:[%s801 + $0x78] sm:$0xf]
        %v2566 = vld [vmem:[%s801 + $0x7c] sm:$0xf]
        %v2567 = vld [vmem:[%s928] sm:$0x1]
        %v2568 = vpack.c.bf16 %v2533, %v2531
        %v2569 = vpack.c.bf16 %v2534, %v2532
        %v2571 = vlaneseq
        %v2572 = vshrl.u32 %v2571, 7
        %v2573 = vsub.s32 0, %v2572
        %v2574 = vrot.slane %v2567, %v2573
        %v2608 = vunpack.c.l.b16 %v2535
        %v2609 = vunpack.c.l.b16 %v2536
        %v2610 = vunpack.c.l.b16 %v2537
        %v2611 = vunpack.c.l.b16 %v2538
        %v2612 = vunpack.c.l.b16 %v2539
        %v2613 = vunpack.c.l.b16 %v2540
        %v2614 = vunpack.c.l.b16 %v2541
        %v2615 = vunpack.c.l.b16 %v2542
        %v2616 = vunpack.c.l.b16 %v2543
        %v2617 = vunpack.c.l.b16 %v2544
        %v2618 = vunpack.c.l.b16 %v2545
        %v2619 = vunpack.c.l.b16 %v2546
        %v2620 = vunpack.c.l.b16 %v2547
        %v2621 = vunpack.c.l.b16 %v2548
        %v2622 = vunpack.c.l.b16 %v2549
        %v2623 = vunpack.c.l.b16 %v2550
        %v2624 = vunpack.c.l.b16 %v2551
        %v2625 = vunpack.c.l.b16 %v2552
        %v2626 = vunpack.c.l.b16 %v2553
        %v2627 = vunpack.c.l.b16 %v2554
        %v2628 = vunpack.c.l.b16 %v2555
        %v2629 = vunpack.c.l.b16 %v2556
        %v2630 = vunpack.c.l.b16 %v2557
        %v2631 = vunpack.c.l.b16 %v2558
        %v2632 = vunpack.c.l.b16 %v2559
        %v2633 = vunpack.c.l.b16 %v2560
        %v2634 = vunpack.c.l.b16 %v2561
        %v2635 = vunpack.c.l.b16 %v2562
        %v2636 = vunpack.c.l.b16 %v2563
        %v2637 = vunpack.c.l.b16 %v2564
        %v2638 = vunpack.c.l.b16 %v2565
        %v2639 = vunpack.c.l.b16 %v2566
        %v2640 = vpack.c.b16 %v2609, %v2608
        %v2641 = vpack.c.b16 %v2611, %v2610
        %v2642 = vpack.c.b16 %v2613, %v2612
        %v2643 = vpack.c.b16 %v2615, %v2614
        %v2644 = vpack.c.b16 %v2617, %v2616
        %v2645 = vpack.c.b16 %v2619, %v2618
        %v2646 = vpack.c.b16 %v2621, %v2620
        %v2647 = vpack.c.b16 %v2623, %v2622
        %v2648 = vpack.c.b16 %v2625, %v2624
        %v2649 = vpack.c.b16 %v2627, %v2626
        %v2650 = vpack.c.b16 %v2629, %v2628
        %v2651 = vpack.c.b16 %v2631, %v2630
        %v2652 = vpack.c.b16 %v2633, %v2632
        %v2653 = vpack.c.b16 %v2635, %v2634
        %v2654 = vpack.c.b16 %v2637, %v2636
        %v2655 = vpack.c.b16 %v2639, %v2638
        %2672 = vmatprep.subr.bf16.mxu0 0
        %2673 = vmatpush1.bf16.msra.mxu0 %v2647
        %2674 = vmatprep.subr.bf16.mxu0 0
        %2675 = vmatpush1.bf16.msra.mxu0 %v2646
        %2676 = vmatprep.subr.bf16.mxu0 0
        %2677 = vmatpush1.bf16.msra.mxu0 %v2645
        %2678 = vmatprep.subr.bf16.mxu0 0
        %2679 = vmatpush1.bf16.msra.mxu0 %v2644
        %2680 = vmatprep.subr.bf16.mxu0 0
        %2681 = vmatpush1.bf16.msra.mxu0 %v2643
        %2682 = vmatprep.subr.bf16.mxu0 0
        %2683 = vmatpush1.bf16.msra.mxu0 %v2642
        %2684 = vmatprep.subr.bf16.mxu0 0
        %2685 = vmatpush1.bf16.msra.mxu0 %v2641
        %2686 = vmatprep.subr.bf16.mxu0 0
        %2687 = vmatpush1.bf16.msra.mxu0 %v2640
        %2688 = vmatprep.subr.bf16.mxu0 0
        %2689 = vmatpush2.bf16.msra.mxu0 %v2655
        %2690 = vmatprep.subr.bf16.mxu0 0
        %2691 = vmatpush2.bf16.msra.mxu0 %v2654
        %2692 = vmatprep.subr.bf16.mxu0 0
        %2693 = vmatpush2.bf16.msra.mxu0 %v2653
        %2694 = vmatprep.subr.bf16.mxu0 0
        %2695 = vmatpush2.bf16.msra.mxu0 %v2652
        %2696 = vmatprep.subr.bf16.mxu0 0
        %2697 = vmatpush2.bf16.msra.mxu0 %v2651
        %2698 = vmatprep.subr.bf16.mxu0 0
        %2699 = vmatpush2.bf16.msra.mxu0 %v2650
        %2700 = vmatprep.subr.bf16.mxu0 0
        %2701 = vmatpush2.bf16.msra.mxu0 %v2649
        %2702 = vmatprep.subr.bf16.mxu0 0
        %2703 = vmatpush2.bf16.msra.mxu0 %v2648
        %2704 = vmatprep.mubr.bf16.mxu0 %v2569
        %2705 = vmatmul.mubr.bf16.gmra.mxu0 %v2568
        %v2706 = vpop.f32.mrf.mxu0
        %v2707 = vadd.f32 %v2574, %v2706
        %v2708 = vpop.f32.mrf.mxu0
        %v2709 = vpop.f32.mrf.mxu0
        %v2710 = vadd.f32 %v2574, %v2709
        %v2711 = vpop.f32.mrf.mxu0
        %2712 = vdwg.mxu0
        %v2713 = vadd.f32 %v2377, %v2707
        %v2714 = vadd.f32 %v2378, %v2710
        %v2715 = vld [vmem:[%s931] sm:$0x1]
        %v2716 = vld [vmem:[%s934] sm:$0x1]
        %2717 = vadd.xlane.f32.xlu0 %v2713
        %v2718 = vpop.xlane.xlu0 %2717
        %2719 = vadd.xlane.f32.xlu0 %v2714
        %v2720 = vpop.xlane.xlu0 %2719
        %v2721 = vmul.f32 %v2718, %v2344
        %v2722 = vmul.f32 %v2720, %v2344
        %v2723 = vsub.f32 %v2713, %v2721
        %v2724 = vsub.f32 %v2714, %v2722
        %v2725 = vmul.f32 %v2723, %v2723
        %v2726 = vmul.f32 %v2724, %v2724
        %2727 = vadd.xlane.f32.xlu0 %v2725
        %v2728 = vpop.xlane.xlu0 %2727
        %2729 = vadd.xlane.f32.xlu0 %v2726
        %v2730 = vpop.xlane.xlu0 %2729
        %v2731 = vmul.f32 %v2728, %v2344
        %v2732 = vmul.f32 %v2730, %v2344
        %v2733 = vadd.f32 %v2731, 1e-05
        %v2734 = vadd.f32 %v2732, 1e-05
        %v2735 = vrsqrt.pop %v2733
        %v2736 = vrsqrt.pop %v2734
        %v2737 = vmul.f32 %v2723, %v2735
        %v2738 = vmul.f32 %v2724, %v2736
        %v2740 = vlaneseq
        %v2741 = vshrl.u32 %v2740, 7
        %v2742 = vsub.s32 0, %v2741
        %v2743 = vrot.slane %v2715, %v2742
        %v2745 = vmul.f32 %v2737, %v2743
        %v2746 = vmul.f32 %v2738, %v2743
        %v2748 = vlaneseq
        %v2749 = vshrl.u32 %v2748, 7
        %v2750 = vsub.s32 0, %v2749
        %v2751 = vrot.slane %v2716, %v2750
        %v2753 = vadd.f32 %v2745, %v2751
        %v2754 = vadd.f32 %v2746, %v2751
        %2755 = vst [vmem:[#allocation2] sm:$0xff] %v2753
        %2756 = vst [vmem:[#allocation2 + $0x8] sm:$0xff] %v2754
        %p2757 = scmp.eq.s32.totalorder %s49, 1
        // Predicated region
        $region121: #{tpu_custom_call.1} parent=87 // pred_check
          %p2758 = pneg %p2757
        $region122: #{tpu_custom_call.1} parent=87 // pred_check_branch
          %2760 = sbr.rel (%p2758) target = $region124
        $region123: #{tpu_custom_call.1} parent=87 // pred_region
          %v2761 = vpack.c.bf16 %v2753, %v2753
          %v2762 = vpack.c.bf16 %v2754, %v2754
          %2763 = vst [vmem:[#allocation17] sm:$0xf] %v2761
          %2764 = vst [vmem:[#allocation17 + $0x4] sm:$0xf] %v2762
        $region124: #{tpu_custom_call.1} parent=87 // pred_fallthru
          _
        // Predicated region
        $region125: #{tpu_custom_call.1} parent=87 // pred_check
          %p2765 = pneg %p516
        $region126: #{tpu_custom_call.1} parent=87 // pred_check_branch
          %2767 = sbr.rel (%p2765) target = $region128
        $region127: #{tpu_custom_call.1} parent=87 // pred_region
          %s2768 = smul.u32 2, %s48
          %s2770 = ssub.s32 128, 128
          %2771 = vsyncadd [#allocation7], %s2770
          %s2772 = smul.addr %s2768, 64
          %s2773 = scalar_lea.hbm %s18, %s2772
          %s2774 = sshll.u32 [#allocation17], 4
          %s2775 = int_to_ptr.vmem [resolvable:$true] %s2774
          %2780 = dma.vmem_to_hbm [thread:$0]  %s2775, 128, %s2773, [#allocation7], 64, 64, 4
        $region128: #{tpu_custom_call.1} parent=87 // pred_fallthru
          _
        // Predicated region
        $region129: #{tpu_custom_call.1} parent=87 // pred_check
          %p2781 = pneg %p516
        $region130: #{tpu_custom_call.1} parent=87 // pred_check_branch
          %2783 = sbr.rel (%p2781) target = $region132
        $region131: #{tpu_custom_call.1} parent=87 // pred_region
          %2784 = dma.done [#allocation7], 128
        $region132: #{tpu_custom_call.1} parent=87 // pred_fallthru
          _
      $region88: #{tpu_custom_call.1} parent=5 // pred_fallthru
        _
      %p2785 = scmp.le.s32.totalorder 2, %s39
      // Predicated region
      $region133: #{tpu_custom_call.1} parent=5 // pred_check
        %p2786 = pneg %p2785
      $region134: #{tpu_custom_call.1} parent=5 // pred_check_branch
        %2788 = sbr.rel (%p2786) target = $region136
      $region135: #{tpu_custom_call.1} parent=5 // pred_region
        %s2789 = ssub.s32 %s39, 2
      $region136: #{tpu_custom_call.1} parent=5 // pred_fallthru
        _
    $region6: #{tpu_custom_call.1} parent=1 // loop_footer
      %s43 = sadd.s32 1, %s39
    $region7: #{tpu_custom_call.1} parent=1 // loop_footer_branch
      %38 = sbr.rel target = $region3
    $region8: #{tpu_custom_call.1} parent=1 // loop_exit
      _
    %2790 = vsyncpa [#allocation6], 1
    %s2791 = scalar_lea.sflag [#allocation6], 1
    %2792 = vsyncpa %s2791, 1
    %2793 = vsyncpa [#allocation9], 1
    %s2794 = scalar_lea.sflag [#allocation9], 1
    %2795 = vsyncpa %s2794, 1
    %2796 = vsyncpa [#allocation12], 1
    %s2797 = scalar_lea.sflag [#allocation12], 1
    %2798 = vsyncpa %s2797, 1
    %2799 = vsyncpa [#allocation15], 1
    %s2800 = scalar_lea.sflag [#allocation15], 1
    %2801 = vsyncpa %s2800, 1
    %2802 = vsyncpa [#allocation7], 1
    %s2803 = scalar_lea.sflag [#allocation7], 1
    %2804 = vsyncpa %s2803, 1

</llo_original>
